<compile_context>
chip_gen: v7x
topology: tpu7x:2x2x1
jax: 0.10.0
libtpu: 0.0.40
codegen_flags: <defaults>
</compile_context>

<pallas_src>
import jax
import jax.numpy as jnp
from jax import lax
from jax.experimental import pallas as pl
from jax.experimental.pallas import tpu as pltpu

N_BODIES = 3
INPUT_DIM = 7
HIDDEN_DIM = 128
OUTPUT_DIM = N_BODIES * 6            # 18
HEADS = 2

ROWS_PER_GRAPH = 8                   # each graph owns one 8-row sublane group
IN_PAD = 8                           # node features padded 7 -> 8
FC_PAD = 32                          # fc out-dim padded 18 -> 32
GRAPHS_PER_TILE = 16                 # 16 graphs x 8 rows = 128-row tile
TILE_ROWS = GRAPHS_PER_TILE * ROWS_PER_GRAPH   # 128

# row offsets inside the packed 128-lane weight slab
_W1REL = 0
_W1X = 8
_W2REL = 16
_W2ROOT = 144
_BIAS = 272
SLAB_ROWS = 280                      # multiple of 8
WGAT_LANES = 3 * HIDDEN_DIM          # 384: 256 head proj + 4 attn cols + pad
WFC_ROWS = 392                       # 384 weight rows + 1 bias row, padded to x8


def _nbody_gnn_kernel(x_ref, wslab_ref, wgat_ref, wfc_ref, out_ref):
    f32, bf16 = jnp.float32, jnp.bfloat16
    x = x_ref[...].astype(bf16)                                    # (128, 8)

    w1rel = wslab_ref[_W1REL:_W1REL + IN_PAD, :]                   # (8, 128)
    w1x = wslab_ref[_W1X:_W1X + IN_PAD, :]                         # (8, 128)  (W1root+Wres)^T
    w2rel = wslab_ref[_W2REL:_W2REL + HIDDEN_DIM, :]               # (128, 128)
    w2root = wslab_ref[_W2ROOT:_W2ROOT + HIDDEN_DIM, :]            # (128, 128)
    brows = wslab_ref[_BIAS:_BIAS + 8, :].astype(f32)              # (8, 128)
    b1, b2, bgat = brows[0:1, :], brows[1:2, :], brows[2:3, :]

    # Block-diagonal complete-graph adjacency + attention mask, built in-kernel
    # from iota (no DMA).  Graphs are consecutive 8-row sublane groups.
    rid = lax.broadcasted_iota(jnp.int32, (TILE_ROWS, TILE_ROWS), 0)
    cid = lax.broadcasted_iota(jnp.int32, (TILE_ROWS, TILE_ROWS), 1)
    same_graph = jnp.right_shift(rid, 3) == jnp.right_shift(cid, 3)
    src_valid = (cid & 7) < N_BODIES
    dst_valid = (rid & 7) < N_BODIES
    attn_mask = same_graph & src_valid                             # GAT adds self-loops
    adj = jnp.where(attn_mask & dst_valid & (rid != cid), 1.0, 0.0).astype(bf16)

    dot = lambda a, b: jnp.dot(a, b, preferred_element_type=f32)

    # ---- GraphConv1 + residual: h1 = relu((A@x) W1rel^T + x (W1root+Wres)^T + b1+bres)
    agg1 = dot(adj, x).astype(bf16)                                # (128, 8)
    h1 = jnp.maximum(dot(agg1, w1rel) + dot(x, w1x) + b1, 0.0).astype(bf16)

    # ---- GraphConv2: two K=128 matmuls (no K=256 concat)
    agg2 = dot(adj, h1).astype(bf16)
    h2 = jnp.maximum(dot(agg2, w2rel) + dot(h1, w2root) + b2, 0.0).astype(bf16)

    # ---- GATConv (heads=2, concat=False -> mean over heads); attention vectors
    # are folded into wgat lanes 256:260, so one matmul yields xh and all logits.
    proj = dot(h2, wgat_ref[...])                                  # (128, 384) f32
    xh = proj[:, :HEADS * HIDDEN_DIM]                              # (128, 256)
    att = proj[:, HEADS * HIDDEN_DIM:]                             # (128, 128): lanes 0/1 dst, 2/3 src
    s_dst = att[:, 0:HEADS]                                        # (128, 2) per-dst-node logits
    s_src_t = jnp.transpose(att)[HEADS:2 * HEADS, :]               # (2, 128) per-src-node logits

    neg_inf = jnp.float32(-1e30)
    acc = jnp.zeros((TILE_ROWS, HIDDEN_DIM), f32)
    for h in range(HEADS):
        e = s_dst[:, h:h + 1] + s_src_t[h:h + 1, :]                # (128, 128)
        e = jnp.where(e >= 0, e, 0.2 * e)                          # LeakyReLU(0.2)
        e = jnp.where(attn_mask, e, neg_inf)
        m = jnp.max(e, axis=1, keepdims=True)
        p = jnp.where(attn_mask, jnp.exp(e - m), 0.0)
        alpha = p * pl.reciprocal(jnp.sum(p, axis=1, keepdims=True), approx=True)
        acc = acc + dot(alpha.astype(bf16),
                        xh[:, h * HIDDEN_DIM:(h + 1) * HIDDEN_DIM].astype(bf16))
    h3 = jnp.maximum(acc * (1.0 / HEADS) + bgat, 0.0).astype(bf16)  # (128, 128)

    # ---- fc on x.view(1,-1) per graph: gather rows 8g+k (k<3) with tiny
    # selection matmuls, concat on lanes -> (16, 384), one matmul + bias row.
    gid = lax.broadcasted_iota(jnp.int32, (GRAPHS_PER_TILE, TILE_ROWS), 0)
    nid = lax.broadcasted_iota(jnp.int32, (GRAPHS_PER_TILE, TILE_ROWS), 1)
    flat = jnp.concatenate(
        [dot(jnp.where(nid == ROWS_PER_GRAPH * gid + k, 1.0, 0.0).astype(bf16), h3)
         for k in range(N_BODIES)], axis=1).astype(bf16)           # (16, 384)
    out_ref[...] = (dot(flat, wfc_ref[:N_BODIES * HIDDEN_DIM, :])
                    + wfc_ref[N_BODIES * HIDDEN_DIM:N_BODIES * HIDDEN_DIM + 1, :].astype(f32))


def pack_params(params):
    """One-time weight packing (pad / transpose / fuse / fold biases and GAT
    attention vectors, cast to bf16).  Off the per-call hot path."""
    f32 = jnp.float32

    w1rel_t = jnp.zeros((IN_PAD, HIDDEN_DIM), f32).at[:INPUT_DIM].set(params["w1rel"].T)
    w1x_t = jnp.zeros((IN_PAD, HIDDEN_DIM), f32).at[:INPUT_DIM].set(
        (params["w1root"] + params["wres"]).T)
    bias_rows = (jnp.zeros((SLAB_ROWS - _BIAS, HIDDEN_DIM), f32)
                 .at[0].set(params["b1rel"] + params["bres"])
                 .at[1].set(params["b2rel"])
                 .at[2].set(params["bgat"]))
    wslab = jnp.concatenate(
        [w1rel_t, w1x_t, params["w2rel"].T, params["w2root"].T, bias_rows], axis=0)  # (280,128)

    # GAT weight with folded attention projections (lane 256+h = v_dst head h,
    # lane 258+h = v_src head h), lanes padded to 384.
    wgat_t = params["wgat"].T.astype(f32)                          # (128, 256)
    att_cols = jnp.zeros((HIDDEN_DIM, HIDDEN_DIM), f32)
    for h in range(HEADS):
        blk = wgat_t[:, h * HIDDEN_DIM:(h + 1) * HIDDEN_DIM]
        att_cols = att_cols.at[:, h].set(blk @ params["att_dst"][h])
        att_cols = att_cols.at[:, HEADS + h].set(blk @ params["att_src"][h])
    wgat_aug = jnp.concatenate([wgat_t, att_cols], axis=1)         # (128, 384)

    # fc: out-dim padded 18 -> 32 only; bias appended as row 384; rows padded to 392.
    wfc = (jnp.zeros((WFC_ROWS, FC_PAD), f32)
           .at[:N_BODIES * HIDDEN_DIM, :OUTPUT_DIM].set(params["wfc"].T)
           .at[N_BODIES * HIDDEN_DIM, :OUTPUT_DIM].set(params["bfc"]))

    bf16 = jnp.bfloat16
    return {"wslab": wslab.astype(bf16), "wgat": wgat_aug.astype(bf16),
            "wfc": wfc.astype(bf16)}


@jax.jit
def nbody_gnn_forward(x_batch, packed):
    """x_batch: (B, 3, 7) float32 node features for B graphs. Returns (B, 18)."""
    b = x_batch.shape[0]
    n_tiles = (b + GRAPHS_PER_TILE - 1) // GRAPHS_PER_TILE
    bp = n_tiles * GRAPHS_PER_TILE
    # One fused pad+reshape for the whole batch (amortized over B graphs;
    # rollout callers can pre-pack rows once and feed (B*8, 8) directly).
    xr = jnp.zeros((bp, ROWS_PER_GRAPH, IN_PAD), jnp.float32)
    xr = xr.at[:b, :N_BODIES, :INPUT_DIM].set(x_batch)
    xr = xr.reshape(bp * ROWS_PER_GRAPH, IN_PAD)

    out = pl.pallas_call(
        _nbody_gnn_kernel,
        out_shape=jax.ShapeDtypeStruct((bp, FC_PAD), jnp.float32),
        grid=(n_tiles,),
        in_specs=[
            pl.BlockSpec((TILE_ROWS, IN_PAD), lambda i: (i, 0)),        # activations stream
            pl.BlockSpec((SLAB_ROWS, HIDDEN_DIM), lambda i: (0, 0)),    # weights stay resident
            pl.BlockSpec((HIDDEN_DIM, WGAT_LANES), lambda i: (0, 0)),
            pl.BlockSpec((WFC_ROWS, FC_PAD), lambda i: (0, 0)),
        ],
        out_specs=pl.BlockSpec((GRAPHS_PER_TILE, FC_PAD), lambda i: (i, 0)),
        compiler_params=pltpu.CompilerParams(
            dimension_semantics=("parallel",)),   # v7x: split graph-tiles across both TCs
    )(xr, packed["wslab"], packed["wgat"], packed["wfc"])
    return out[:b, :OUTPUT_DIM]


def nbody_gnn_reference(x, params):
    """Pure-JAX f32 reference matching the PyTorch module (eval mode), one graph."""
    adj = jnp.ones((N_BODIES, N_BODIES), jnp.float32) - jnp.eye(N_BODIES, dtype=jnp.float32)
    x_res = x @ params["wres"].T + params["bres"]
    h1 = adj @ x @ params["w1rel"].T + params["b1rel"] + x @ params["w1root"].T
    h1 = jax.nn.relu(h1 + x_res)
    h2 = adj @ h1 @ params["w2rel"].T + params["b2rel"] + h1 @ params["w2root"].T
    h2 = jax.nn.relu(h2)
    xh = (h2 @ params["wgat"].T).reshape(N_BODIES, HEADS, HIDDEN_DIM)
    s_src = jnp.einsum("jhd,hd->hj", xh, params["att_src"])
    s_dst = jnp.einsum("ihd,hd->hi", xh, params["att_dst"])
    e = s_dst[:, :, None] + s_src[:, None, :]
    e = jnp.where(e >= 0, e, 0.2 * e)
    alpha = jax.nn.softmax(e, axis=-1)                  # self-loops included
    out_h = jnp.einsum("hij,jhd->ihd", alpha, xh)
    h3 = jax.nn.relu(out_h.mean(axis=1) + params["bgat"])
    return h3.reshape(1, -1) @ params["wfc"].T + params["bfc"]


def make_params(key):
    keys = jax.random.split(key, 16)
    n = lambda k, shape, s=0.1: (s * jax.random.normal(k, shape)).astype(jnp.float32)
    return {
        # conv1 = GraphConv(7, 128)
        "w1rel": n(keys[0], (HIDDEN_DIM, INPUT_DIM)),
        "b1rel": n(keys[1], (HIDDEN_DIM,), 0.01),
        "w1root": n(keys[2], (HIDDEN_DIM, INPUT_DIM)),
        # conv2 = GraphConv(128, 128)
        "w2rel": n(keys[3], (HIDDEN_DIM, HIDDEN_DIM)),
        "b2rel": n(keys[4], (HIDDEN_DIM,), 0.01),
        "w2root": n(keys[5], (HIDDEN_DIM, HIDDEN_DIM)),
        # conv3 = GATConv(128, 128, heads=2, concat=False)
        "wgat": n(keys[6], (HEADS * HIDDEN_DIM, HIDDEN_DIM)),
        "att_src": n(keys[7], (HEADS, HIDDEN_DIM)),
        "att_dst": n(keys[8], (HEADS, HIDDEN_DIM)),
        "bgat": n(keys[9], (HIDDEN_DIM,), 0.01),
        # residual = Linear(7, 128)
        "wres": n(keys[10], (HIDDEN_DIM, INPUT_DIM)),
        "bres": n(keys[11], (HIDDEN_DIM,), 0.01),
        # fc = Linear(384, 18)
        "wfc": n(keys[12], (OUTPUT_DIM, HIDDEN_DIM * N_BODIES)),
        "bfc": n(keys[13], (OUTPUT_DIM,), 0.01),
    }


if __name__ == "__main__":
    key = jax.random.PRNGKey(0)
    kx, kp = jax.random.split(key)
    B = 32   # 2 grid tiles of 16 graphs
    x_batch = jax.random.normal(kx, (B, N_BODIES, INPUT_DIM), dtype=jnp.float32)
    params = make_params(kp)

    packed = pack_params(params)                     # one-time, off the hot path

    out = jax.block_until_ready(nbody_gnn_forward(x_batch, packed))
    assert out.shape == (B, OUTPUT_DIM)
    assert bool(jnp.all(jnp.isfinite(out)))

    ref = jax.vmap(lambda xi: nbody_gnn_reference(xi, params))(x_batch).reshape(B, OUTPUT_DIM)
    rel_l2 = float(jnp.linalg.norm(out - ref) / jnp.linalg.norm(ref))
    assert rel_l2 < 3e-2, rel_l2                     # bf16 weights/activations, f32 accum
    assert bool(jnp.allclose(out, ref, rtol=5e-2, atol=1e-1)), (out, ref)

    print("KERNEL_OK")
</pallas_src>

<mosaic_0001>
module attributes {stable_mosaic.version = 11 : i64} {
  func.func @_nbody_gnn_kernel(%arg0: i32, %arg1: memref<128x8xf32, #tpu.memory_space<vmem>>, %arg2: memref<280x128xbf16, #tpu.memory_space<vmem>>, %arg3: memref<128x384xbf16, #tpu.memory_space<vmem>>, %arg4: memref<392x32xbf16, #tpu.memory_space<vmem>>, %arg5: memref<16x32xf32, #tpu.memory_space<vmem>>) attributes {dimension_semantics = [#tpu.dimension_semantics<parallel>], iteration_bounds = array<i64: 2>, scalar_prefetch = 0 : i64, scratch_operands = 0 : i64, tpu.core_type = #tpu.core_type<tc>, window_params = [{transform_indices = @transform_0, window_bounds = array<i64: 128, 8>}, {pipeline_mode = #tpu.pipeline_mode<synchronous>, transform_indices = @transform_1, window_bounds = array<i64: 280, 128>}, {pipeline_mode = #tpu.pipeline_mode<synchronous>, transform_indices = @transform_2, window_bounds = array<i64: 128, 384>}, {pipeline_mode = #tpu.pipeline_mode<synchronous>, transform_indices = @transform_3, window_bounds = array<i64: 392, 32>}, {transform_indices = @transform_4, window_bounds = array<i64: 16, 32>}]} {
    %c0 = arith.constant 0 : index
    %c0_0 = arith.constant 0 : index
    %0 = vector.load %arg1[%c0, %c0_0] : memref<128x8xf32, #tpu.memory_space<vmem>>, vector<128x8xf32>
    %1 = arith.truncf %0 : vector<128x8xf32> to vector<128x8xbf16>
    %c0_1 = arith.constant 0 : index
    %c0_2 = arith.constant 0 : index
    %2 = vector.load %arg2[%c0_1, %c0_2] : memref<280x128xbf16, #tpu.memory_space<vmem>>, vector<8x128xbf16>
    %c8 = arith.constant 8 : index
    %c0_3 = arith.constant 0 : index
    %3 = vector.load %arg2[%c8, %c0_3] : memref<280x128xbf16, #tpu.memory_space<vmem>>, vector<8x128xbf16>
    %c16 = arith.constant 16 : index
    %c0_4 = arith.constant 0 : index
    %4 = vector.load %arg2[%c16, %c0_4] : memref<280x128xbf16, #tpu.memory_space<vmem>>, vector<128x128xbf16>
    %c144 = arith.constant 144 : index
    %c0_5 = arith.constant 0 : index
    %5 = vector.load %arg2[%c144, %c0_5] : memref<280x128xbf16, #tpu.memory_space<vmem>>, vector<128x128xbf16>
    %c272 = arith.constant 272 : index
    %c0_6 = arith.constant 0 : index
    %6 = vector.load %arg2[%c272, %c0_6] : memref<280x128xbf16, #tpu.memory_space<vmem>>, vector<8x128xbf16>
    %7 = arith.extf %6 : vector<8x128xbf16> to vector<8x128xf32>
    %8 = vector.extract_strided_slice %7 {offsets = [0, 0], sizes = [1, 128], strides = [1, 1]} : vector<8x128xf32> to vector<1x128xf32>
    %9 = vector.extract_strided_slice %7 {offsets = [1, 0], sizes = [1, 128], strides = [1, 1]} : vector<8x128xf32> to vector<1x128xf32>
    %10 = vector.extract_strided_slice %7 {offsets = [2, 0], sizes = [1, 128], strides = [1, 1]} : vector<8x128xf32> to vector<1x128xf32>
    %11 = tpu.iota {dimensions = array<i32: 0>} : vector<128x128xi32>
    %12 = tpu.iota {dimensions = array<i32: 1>} : vector<128x128xi32>
    %c3_i32 = arith.constant 3 : i32
    %13 = vector.broadcast %c3_i32 : i32 to vector<128x128xi32>
    %14 = arith.shrsi %11, %13 : vector<128x128xi32>
    %c3_i32_7 = arith.constant 3 : i32
    %15 = vector.broadcast %c3_i32_7 : i32 to vector<128x128xi32>
    %16 = arith.shrsi %12, %15 : vector<128x128xi32>
    %17 = arith.cmpi eq, %14, %16 : vector<128x128xi32>
    %c7_i32 = arith.constant 7 : i32
    %18 = vector.broadcast %c7_i32 : i32 to vector<128x128xi32>
    %19 = arith.andi %12, %18 : vector<128x128xi32>
    %c3_i32_8 = arith.constant 3 : i32
    %20 = vector.broadcast %c3_i32_8 : i32 to vector<128x128xi32>
    %21 = arith.cmpi slt, %19, %20 : vector<128x128xi32>
    %c7_i32_9 = arith.constant 7 : i32
    %22 = vector.broadcast %c7_i32_9 : i32 to vector<128x128xi32>
    %23 = arith.andi %11, %22 : vector<128x128xi32>
    %c3_i32_10 = arith.constant 3 : i32
    %24 = vector.broadcast %c3_i32_10 : i32 to vector<128x128xi32>
    %25 = arith.cmpi slt, %23, %24 : vector<128x128xi32>
    %26 = arith.andi %17, %21 : vector<128x128xi1>
    %27 = arith.andi %26, %25 : vector<128x128xi1>
    %28 = arith.cmpi ne, %11, %12 : vector<128x128xi32>
    %29 = arith.andi %27, %28 : vector<128x128xi1>
    %cst = arith.constant 1.000000e+00 : f32
    %cst_11 = arith.constant 0.000000e+00 : f32
    %30 = vector.broadcast %cst : f32 to vector<128x128xf32>
    %31 = vector.broadcast %cst_11 : f32 to vector<128x128xf32>
    %32 = arith.select %29, %30, %31 : vector<128x128xi1>, vector<128x128xf32>
    %33 = arith.truncf %32 : vector<128x128xf32> to vector<128x128xbf16>
    %cst_12 = arith.constant dense<0.000000e+00> : vector<128x8xf32>
    %34 = tpu.matmul %33, %1, %cst_12 {dimension_numbers = #tpu.dot_dimension_numbers<[1], [0], [0], [1], [0, 0, 1, 1], [], []>} : vector<128x128xbf16>, vector<128x8xbf16>, vector<128x8xf32> -> vector<128x8xf32>
    %35 = arith.truncf %34 : vector<128x8xf32> to vector<128x8xbf16>
    %cst_13 = arith.constant dense<0.000000e+00> : vector<128x128xf32>
    %36 = tpu.matmul %35, %2, %cst_13 {dimension_numbers = #tpu.dot_dimension_numbers<[1], [0], [0], [1], [0, 0, 1, 1], [], []>} : vector<128x8xbf16>, vector<8x128xbf16>, vector<128x128xf32> -> vector<128x128xf32>
    %cst_14 = arith.constant dense<0.000000e+00> : vector<128x128xf32>
    %37 = tpu.matmul %1, %3, %cst_14 {dimension_numbers = #tpu.dot_dimension_numbers<[1], [0], [0], [1], [0, 0, 1, 1], [], []>} : vector<128x8xbf16>, vector<8x128xbf16>, vector<128x128xf32> -> vector<128x128xf32>
    %38 = arith.addf %36, %37 : vector<128x128xf32>
    %39 = vector.broadcast %8 : vector<1x128xf32> to vector<128x128xf32>
    %40 = arith.addf %38, %39 : vector<128x128xf32>
    %cst_15 = arith.constant 0.000000e+00 : f32
    %41 = vector.broadcast %cst_15 : f32 to vector<128x128xf32>
    %42 = arith.maximumf %40, %41 : vector<128x128xf32>
    %43 = arith.truncf %42 : vector<128x128xf32> to vector<128x128xbf16>
    %cst_16 = arith.constant dense<0.000000e+00> : vector<128x128xf32>
    %44 = tpu.matmul %33, %43, %cst_16 {dimension_numbers = #tpu.dot_dimension_numbers<[1], [0], [0], [1], [0, 0, 1, 1], [], []>} : vector<128x128xbf16>, vector<128x128xbf16>, vector<128x128xf32> -> vector<128x128xf32>
    %45 = arith.truncf %44 : vector<128x128xf32> to vector<128x128xbf16>
    %cst_17 = arith.constant dense<0.000000e+00> : vector<128x128xf32>
    %46 = tpu.matmul %45, %4, %cst_17 {dimension_numbers = #tpu.dot_dimension_numbers<[1], [0], [0], [1], [0, 0, 1, 1], [], []>} : vector<128x128xbf16>, vector<128x128xbf16>, vector<128x128xf32> -> vector<128x128xf32>
    %cst_18 = arith.constant dense<0.000000e+00> : vector<128x128xf32>
    %47 = tpu.matmul %43, %5, %cst_18 {dimension_numbers = #tpu.dot_dimension_numbers<[1], [0], [0], [1], [0, 0, 1, 1], [], []>} : vector<128x128xbf16>, vector<128x128xbf16>, vector<128x128xf32> -> vector<128x128xf32>
    %48 = arith.addf %46, %47 : vector<128x128xf32>
    %49 = vector.broadcast %9 : vector<1x128xf32> to vector<128x128xf32>
    %50 = arith.addf %48, %49 : vector<128x128xf32>
    %cst_19 = arith.constant 0.000000e+00 : f32
    %51 = vector.broadcast %cst_19 : f32 to vector<128x128xf32>
    %52 = arith.maximumf %50, %51 : vector<128x128xf32>
    %53 = arith.truncf %52 : vector<128x128xf32> to vector<128x128xbf16>
    %c0_20 = arith.constant 0 : index
    %c0_21 = arith.constant 0 : index
    %54 = vector.load %arg3[%c0_20, %c0_21] : memref<128x384xbf16, #tpu.memory_space<vmem>>, vector<128x384xbf16>
    %cst_22 = arith.constant dense<0.000000e+00> : vector<128x384xf32>
    %55 = tpu.matmul %53, %54, %cst_22 {dimension_numbers = #tpu.dot_dimension_numbers<[1], [0], [0], [1], [0, 0, 1, 1], [], []>} : vector<128x128xbf16>, vector<128x384xbf16>, vector<128x384xf32> -> vector<128x384xf32>
    %56 = vector.extract_strided_slice %55 {offsets = [0, 0], sizes = [128, 256], strides = [1, 1]} : vector<128x384xf32> to vector<128x256xf32>
    %57 = vector.extract_strided_slice %55 {offsets = [0, 256], sizes = [128, 128], strides = [1, 1]} : vector<128x384xf32> to vector<128x128xf32>
    %58 = vector.extract_strided_slice %57 {offsets = [0, 0], sizes = [128, 2], strides = [1, 1]} : vector<128x128xf32> to vector<128x2xf32>
    %59 = tpu.transpose %57, [1, 0] : vector<128x128xf32> -> vector<128x128xf32>
    %60 = vector.extract_strided_slice %59 {offsets = [2, 0], sizes = [2, 128], strides = [1, 1]} : vector<128x128xf32> to vector<2x128xf32>
    %cst_23 = arith.constant 0.000000e+00 : f32
    %61 = vector.broadcast %cst_23 : f32 to vector<128x128xf32>
    %62 = vector.extract_strided_slice %58 {offsets = [0, 0], sizes = [128, 1], strides = [1, 1]} : vector<128x2xf32> to vector<128x1xf32>
    %63 = vector.extract_strided_slice %60 {offsets = [0, 0], sizes = [1, 128], strides = [1, 1]} : vector<2x128xf32> to vector<1x128xf32>
    %64 = vector.broadcast %62 : vector<128x1xf32> to vector<128x128xf32>
    %65 = vector.broadcast %63 : vector<1x128xf32> to vector<128x128xf32>
    %66 = arith.addf %64, %65 : vector<128x128xf32>
    %cst_24 = arith.constant 0.000000e+00 : f32
    %67 = vector.broadcast %cst_24 : f32 to vector<128x128xf32>
    %68 = arith.cmpf oge, %66, %67 : vector<128x128xf32>
    %cst_25 = arith.constant 2.000000e-01 : f32
    %69 = vector.broadcast %cst_25 : f32 to vector<128x128xf32>
    %70 = arith.mulf %69, %66 : vector<128x128xf32>
    %71 = arith.select %68, %66, %70 : vector<128x128xi1>, vector<128x128xf32>
    %cst_26 = arith.constant -1.000000e+30 : f32
    %72 = vector.broadcast %cst_26 : f32 to vector<128x128xf32>
    %73 = arith.select %26, %71, %72 : vector<128x128xi1>, vector<128x128xf32>
    %cst_27 = arith.constant dense<0xFF800000> : vector<128xf32>
    %74 = vector.multi_reduction <maximumf>, %73, %cst_27 [1] : vector<128x128xf32> to vector<128xf32>
    %75 = vector.shape_cast %74 : vector<128xf32> to vector<128x1xf32>
    %76 = vector.broadcast %75 : vector<128x1xf32> to vector<128x128xf32>
    %77 = arith.subf %73, %76 : vector<128x128xf32>
    %78 = math.exp %77 : vector<128x128xf32>
    %cst_28 = arith.constant 0.000000e+00 : f32
    %79 = vector.broadcast %cst_28 : f32 to vector<128x128xf32>
    %80 = arith.select %26, %78, %79 : vector<128x128xi1>, vector<128x128xf32>
    %cst_29 = arith.constant dense<0.000000e+00> : vector<128xf32>
    %81 = vector.multi_reduction <add>, %80, %cst_29 [1] : vector<128x128xf32> to vector<128xf32>
    %82 = vector.shape_cast %81 : vector<128xf32> to vector<128x1xf32>
    %83 = tpu.reciprocal %82 {approx = true} : vector<128x1xf32> -> vector<128x1xf32>
    %84 = vector.broadcast %83 : vector<128x1xf32> to vector<128x128xf32>
    %85 = arith.mulf %80, %84 : vector<128x128xf32>
    %86 = arith.truncf %85 : vector<128x128xf32> to vector<128x128xbf16>
    %87 = vector.extract_strided_slice %56 {offsets = [0, 0], sizes = [128, 128], strides = [1, 1]} : vector<128x256xf32> to vector<128x128xf32>
    %88 = arith.truncf %87 : vector<128x128xf32> to vector<128x128xbf16>
    %cst_30 = arith.constant dense<0.000000e+00> : vector<128x128xf32>
    %89 = tpu.matmul %86, %88, %cst_30 {dimension_numbers = #tpu.dot_dimension_numbers<[1], [0], [0], [1], [0, 0, 1, 1], [], []>} : vector<128x128xbf16>, vector<128x128xbf16>, vector<128x128xf32> -> vector<128x128xf32>
    %90 = arith.addf %61, %89 : vector<128x128xf32>
    %91 = vector.extract_strided_slice %58 {offsets = [0, 1], sizes = [128, 1], strides = [1, 1]} : vector<128x2xf32> to vector<128x1xf32>
    %92 = vector.extract_strided_slice %60 {offsets = [1, 0], sizes = [1, 128], strides = [1, 1]} : vector<2x128xf32> to vector<1x128xf32>
    %93 = vector.broadcast %91 : vector<128x1xf32> to vector<128x128xf32>
    %94 = vector.broadcast %92 : vector<1x128xf32> to vector<128x128xf32>
    %95 = arith.addf %93, %94 : vector<128x128xf32>
    %cst_31 = arith.constant 0.000000e+00 : f32
    %96 = vector.broadcast %cst_31 : f32 to vector<128x128xf32>
    %97 = arith.cmpf oge, %95, %96 : vector<128x128xf32>
    %cst_32 = arith.constant 2.000000e-01 : f32
    %98 = vector.broadcast %cst_32 : f32 to vector<128x128xf32>
    %99 = arith.mulf %98, %95 : vector<128x128xf32>
    %100 = arith.select %97, %95, %99 : vector<128x128xi1>, vector<128x128xf32>
    %cst_33 = arith.constant -1.000000e+30 : f32
    %101 = vector.broadcast %cst_33 : f32 to vector<128x128xf32>
    %102 = arith.select %26, %100, %101 : vector<128x128xi1>, vector<128x128xf32>
    %cst_34 = arith.constant dense<0xFF800000> : vector<128xf32>
    %103 = vector.multi_reduction <maximumf>, %102, %cst_34 [1] : vector<128x128xf32> to vector<128xf32>
    %104 = vector.shape_cast %103 : vector<128xf32> to vector<128x1xf32>
    %105 = vector.broadcast %104 : vector<128x1xf32> to vector<128x128xf32>
    %106 = arith.subf %102, %105 : vector<128x128xf32>
    %107 = math.exp %106 : vector<128x128xf32>
    %cst_35 = arith.constant 0.000000e+00 : f32
    %108 = vector.broadcast %cst_35 : f32 to vector<128x128xf32>
    %109 = arith.select %26, %107, %108 : vector<128x128xi1>, vector<128x128xf32>
    %cst_36 = arith.constant dense<0.000000e+00> : vector<128xf32>
    %110 = vector.multi_reduction <add>, %109, %cst_36 [1] : vector<128x128xf32> to vector<128xf32>
    %111 = vector.shape_cast %110 : vector<128xf32> to vector<128x1xf32>
    %112 = tpu.reciprocal %111 {approx = true} : vector<128x1xf32> -> vector<128x1xf32>
    %113 = vector.broadcast %112 : vector<128x1xf32> to vector<128x128xf32>
    %114 = arith.mulf %109, %113 : vector<128x128xf32>
    %115 = arith.truncf %114 : vector<128x128xf32> to vector<128x128xbf16>
    %116 = vector.extract_strided_slice %56 {offsets = [0, 128], sizes = [128, 128], strides = [1, 1]} : vector<128x256xf32> to vector<128x128xf32>
    %117 = arith.truncf %116 : vector<128x128xf32> to vector<128x128xbf16>
    %cst_37 = arith.constant dense<0.000000e+00> : vector<128x128xf32>
    %118 = tpu.matmul %115, %117, %cst_37 {dimension_numbers = #tpu.dot_dimension_numbers<[1], [0], [0], [1], [0, 0, 1, 1], [], []>} : vector<128x128xbf16>, vector<128x128xbf16>, vector<128x128xf32> -> vector<128x128xf32>
    %119 = arith.addf %90, %118 : vector<128x128xf32>
    %cst_38 = arith.constant 5.000000e-01 : f32
    %120 = vector.broadcast %cst_38 : f32 to vector<128x128xf32>
    %121 = arith.mulf %119, %120 : vector<128x128xf32>
    %122 = vector.broadcast %10 : vector<1x128xf32> to vector<128x128xf32>
    %123 = arith.addf %121, %122 : vector<128x128xf32>
    %cst_39 = arith.constant 0.000000e+00 : f32
    %124 = vector.broadcast %cst_39 : f32 to vector<128x128xf32>
    %125 = arith.maximumf %123, %124 : vector<128x128xf32>
    %126 = arith.truncf %125 : vector<128x128xf32> to vector<128x128xbf16>
    %127 = tpu.iota {dimensions = array<i32: 0>} : vector<16x128xi32>
    %128 = tpu.iota {dimensions = array<i32: 1>} : vector<16x128xi32>
    %c8_i32 = arith.constant 8 : i32
    %129 = vector.broadcast %c8_i32 : i32 to vector<16x128xi32>
    %130 = arith.muli %129, %127 : vector<16x128xi32>
    %c0_i32 = arith.constant 0 : i32
    %131 = vector.broadcast %c0_i32 : i32 to vector<16x128xi32>
    %132 = arith.addi %130, %131 : vector<16x128xi32>
    %133 = arith.cmpi eq, %128, %132 : vector<16x128xi32>
    %cst_40 = arith.constant 1.000000e+00 : f32
    %cst_41 = arith.constant 0.000000e+00 : f32
    %134 = vector.broadcast %cst_40 : f32 to vector<16x128xf32>
    %135 = vector.broadcast %cst_41 : f32 to vector<16x128xf32>
    %136 = arith.select %133, %134, %135 : vector<16x128xi1>, vector<16x128xf32>
    %137 = arith.truncf %136 : vector<16x128xf32> to vector<16x128xbf16>
    %cst_42 = arith.constant dense<0.000000e+00> : vector<16x128xf32>
    %138 = tpu.matmul %137, %126, %cst_42 {dimension_numbers = #tpu.dot_dimension_numbers<[1], [0], [0], [1], [0, 0, 1, 1], [], []>} : vector<16x128xbf16>, vector<128x128xbf16>, vector<16x128xf32> -> vector<16x128xf32>
    %c8_i32_43 = arith.constant 8 : i32
    %139 = vector.broadcast %c8_i32_43 : i32 to vector<16x128xi32>
    %140 = arith.muli %139, %127 : vector<16x128xi32>
    %c1_i32 = arith.constant 1 : i32
    %141 = vector.broadcast %c1_i32 : i32 to vector<16x128xi32>
    %142 = arith.addi %140, %141 : vector<16x128xi32>
    %143 = arith.cmpi eq, %128, %142 : vector<16x128xi32>
    %cst_44 = arith.constant 1.000000e+00 : f32
    %cst_45 = arith.constant 0.000000e+00 : f32
    %144 = vector.broadcast %cst_44 : f32 to vector<16x128xf32>
    %145 = vector.broadcast %cst_45 : f32 to vector<16x128xf32>
    %146 = arith.select %143, %144, %145 : vector<16x128xi1>, vector<16x128xf32>
    %147 = arith.truncf %146 : vector<16x128xf32> to vector<16x128xbf16>
    %cst_46 = arith.constant dense<0.000000e+00> : vector<16x128xf32>
    %148 = tpu.matmul %147, %126, %cst_46 {dimension_numbers = #tpu.dot_dimension_numbers<[1], [0], [0], [1], [0, 0, 1, 1], [], []>} : vector<16x128xbf16>, vector<128x128xbf16>, vector<16x128xf32> -> vector<16x128xf32>
    %c8_i32_47 = arith.constant 8 : i32
    %149 = vector.broadcast %c8_i32_47 : i32 to vector<16x128xi32>
    %150 = arith.muli %149, %127 : vector<16x128xi32>
    %c2_i32 = arith.constant 2 : i32
    %151 = vector.broadcast %c2_i32 : i32 to vector<16x128xi32>
    %152 = arith.addi %150, %151 : vector<16x128xi32>
    %153 = arith.cmpi eq, %128, %152 : vector<16x128xi32>
    %cst_48 = arith.constant 1.000000e+00 : f32
    %cst_49 = arith.constant 0.000000e+00 : f32
    %154 = vector.broadcast %cst_48 : f32 to vector<16x128xf32>
    %155 = vector.broadcast %cst_49 : f32 to vector<16x128xf32>
    %156 = arith.select %153, %154, %155 : vector<16x128xi1>, vector<16x128xf32>
    %157 = arith.truncf %156 : vector<16x128xf32> to vector<16x128xbf16>
    %cst_50 = arith.constant dense<0.000000e+00> : vector<16x128xf32>
    %158 = tpu.matmul %157, %126, %cst_50 {dimension_numbers = #tpu.dot_dimension_numbers<[1], [0], [0], [1], [0, 0, 1, 1], [], []>} : vector<16x128xbf16>, vector<128x128xbf16>, vector<16x128xf32> -> vector<16x128xf32>
    %159 = tpu.concatenate %138, %148, %158 in 1 : vector<16x128xf32>, vector<16x128xf32>, vector<16x128xf32> -> vector<16x384xf32>
    %160 = arith.truncf %159 : vector<16x384xf32> to vector<16x384xbf16>
    %c0_51 = arith.constant 0 : index
    %c0_52 = arith.constant 0 : index
    %161 = vector.load %arg4[%c0_51, %c0_52] : memref<392x32xbf16, #tpu.memory_space<vmem>>, vector<384x32xbf16>
    %cst_53 = arith.constant dense<0.000000e+00> : vector<16x32xf32>
    %162 = tpu.matmul %160, %161, %cst_53 {dimension_numbers = #tpu.dot_dimension_numbers<[1], [0], [0], [1], [0, 0, 1, 1], [], []>} : vector<16x384xbf16>, vector<384x32xbf16>, vector<16x32xf32> -> vector<16x32xf32>
    %c384 = arith.constant 384 : index
    %c0_54 = arith.constant 0 : index
    %163 = vector.load %arg4[%c384, %c0_54] : memref<392x32xbf16, #tpu.memory_space<vmem>>, vector<1x32xbf16>
    %164 = arith.extf %163 : vector<1x32xbf16> to vector<1x32xf32>
    %165 = vector.broadcast %164 : vector<1x32xf32> to vector<16x32xf32>
    %166 = arith.addf %162, %165 : vector<16x32xf32>
    %c0_55 = arith.constant 0 : index
    %c0_56 = arith.constant 0 : index
    %167 = vector.load %arg5[%c0_55, %c0_56] : memref<16x32xf32, #tpu.memory_space<vmem>>, vector<16x32xf32>
    tpu.vector_store %arg5[%c0_55, %c0_56], %166 {strides = array<i32>} : memref<16x32xf32, #tpu.memory_space<vmem>>, vector<16x32xf32>,
    return
  }
  func.func @transform_0(%arg0: i32) -> (i32, i32) {
    %c0_i32 = arith.constant 0 : i32
    %c0_i32_0 = arith.constant 0 : i32
    return %arg0, %c0_i32 : i32, i32
  }
  func.func @transform_1(%arg0: i32) -> (i32, i32) {
    %c0_i32 = arith.constant 0 : i32
    %c0_i32_0 = arith.constant 0 : i32
    %c0_i32_1 = arith.constant 0 : i32
    return %c0_i32, %c0_i32_0 : i32, i32
  }
  func.func @transform_2(%arg0: i32) -> (i32, i32) {
    %c0_i32 = arith.constant 0 : i32
    %c0_i32_0 = arith.constant 0 : i32
    %c0_i32_1 = arith.constant 0 : i32
    return %c0_i32, %c0_i32_0 : i32, i32
  }
  func.func @transform_3(%arg0: i32) -> (i32, i32) {
    %c0_i32 = arith.constant 0 : i32
    %c0_i32_0 = arith.constant 0 : i32
    %c0_i32_1 = arith.constant 0 : i32
    return %c0_i32, %c0_i32_0 : i32, i32
  }
  func.func @transform_4(%arg0: i32) -> (i32, i32) {
    %c0_i32 = arith.constant 0 : i32
    %c0_i32_0 = arith.constant 0 : i32
    return %arg0, %c0_i32 : i32, i32
  }
}

</mosaic_0001>

<llo_original>
// kernel: nbody_gnn_forward.1
$region0: #{nbody_gnn_forward.1}
  #allocation0 [shape = 'u32[]', space=smem, size = 0x4, offset = 0x4, fixed_abs, tag = 'smem constant byte address 0x4 - core index']
  #allocation1 [shape = 'u32[144,128]{1,0:T(1,128)}', space=vmem, size = 0x12000, scoped, tag = 'internal scratch']
  %s0 = inlined_call_operand.vmem [shape: f32[256,8], index: 0, kind: input, shape index: {}]
  %s1 = inlined_call_operand.vmem [shape: bf16[280,128], index: 1, kind: input, shape index: {}]
  %s2 = inlined_call_operand.vmem [shape: bf16[128,384], index: 2, kind: input, shape index: {}]
  %s3 = inlined_call_operand.vmem [shape: bf16[392,32], index: 3, kind: input, shape index: {}]
  %s4 = inlined_call_operand.vmem [shape: f32[32,32], index: 4, kind: output, shape index: {}]
  %s5 = sld [smem:[#allocation0]]
  $region49: #{nbody_gnn_forward.1} parent=0
    _
  %s7 = ssub.s32 1, %s5
  %s8 = scalar_select 0, %s7, %s5
  loop: start=0, step=1, limit=4
  $region2: #{nbody_gnn_forward.1} parent=0 // loop_pre_header
    _
  $region3: #{nbody_gnn_forward.1} parent=0 // loop_header
    %s10 = sphi 0, %s14
    %p11 = scmp.ge.s32.totalorder %s10, 4
    %s20 = sphi 0, %s22
    %s23 = sphi 0, %s20
    %s24 = sphi 0, %s23
    %s40 = sphi 0, %s24
    %s44 = sphi 0, %s44
    %s46 = sphi 0, %s44
    %s47 = sphi 0, %s46
    %s61 = sphi 0, %s47
    %s65 = sphi 0, %s65
    %s67 = sphi 0, %s65
    %s68 = sphi 0, %s67
    %s82 = sphi 0, %s68
    %s86 = sphi 0, %s86
    %s88 = sphi 0, %s86
    %s89 = sphi 0, %s88
    %s103 = sphi 0, %s89
    %s109 = sphi 0, %s111
    %s112 = sphi 0, %s109
    %s113 = sphi 0, %s112
    %s129 = sphi 0, %s113
  $region4: #{nbody_gnn_forward.1} parent=0 // loop_header_branch
    %13 = sbr.rel (%p11) target = $region8
  $region5: #{nbody_gnn_forward.1} parent=0 // loop_body
    %s15 = ssub.s32 %s10, 1
    %s16 = ssub.s32 %s10, 2
    %s17 = sadd.s32 %s10, 1
    %s18 = ssub.s32 %s10, %s17
    %p19 = scmp.eq.s32.totalorder %s18, 0
    %s21 = sadd.s32 %s20, 1
    %s22 = scalar_select %p19, %s20, %s21
    %p25 = pneg %p19
    %p26 = scmp.eq.s32.totalorder %s10, 1
    %p27 = por %p25, %p26
    %p28 = scmp.ne.s32.totalorder %s20, %s23
    %p29 = scmp.eq.s32.totalorder %s10, 0
    %p30 = por %p28, %p29
    %p31 = scmp.ne.s32.totalorder %s20, %s23
    %p32 = scmp.eq.s32.totalorder %s15, 1
    %p33 = por %p31, %p32
    %p34 = scmp.ne.s32.totalorder %s23, %s24
    %p35 = scmp.eq.s32.totalorder %s15, 0
    %p36 = por %p34, %p35
    %p37 = scmp.ne.s32.totalorder %s23, %s24
    %p38 = scmp.eq.s32.totalorder %s16, 1
    %p39 = por %p37, %p38
    %p41 = scmp.ne.s32.totalorder %s24, %s40
    %p42 = scmp.eq.s32.totalorder %s16, 0
    %p43 = por %p41, %p42
    %s45 = sadd.s32 %s44, 1
    %p48 = scmp.eq.s32.totalorder %s10, 1
    %p49 = scmp.ne.s32.totalorder %s44, %s46
    %p50 = scmp.eq.s32.totalorder %s10, 0
    %p51 = por %p49, %p50
    %p52 = scmp.ne.s32.totalorder %s44, %s46
    %p53 = scmp.eq.s32.totalorder %s15, 1
    %p54 = por %p52, %p53
    %p55 = scmp.ne.s32.totalorder %s46, %s47
    %p56 = scmp.eq.s32.totalorder %s15, 0
    %p57 = por %p55, %p56
    %p58 = scmp.ne.s32.totalorder %s46, %s47
    %p59 = scmp.eq.s32.totalorder %s16, 1
    %p60 = por %p58, %p59
    %p62 = scmp.ne.s32.totalorder %s47, %s61
    %p63 = scmp.eq.s32.totalorder %s16, 0
    %p64 = por %p62, %p63
    %s66 = sadd.s32 %s65, 1
    %p69 = scmp.eq.s32.totalorder %s10, 1
    %p70 = scmp.ne.s32.totalorder %s65, %s67
    %p71 = scmp.eq.s32.totalorder %s10, 0
    %p72 = por %p70, %p71
    %p73 = scmp.ne.s32.totalorder %s65, %s67
    %p74 = scmp.eq.s32.totalorder %s15, 1
    %p75 = por %p73, %p74
    %p76 = scmp.ne.s32.totalorder %s67, %s68
    %p77 = scmp.eq.s32.totalorder %s15, 0
    %p78 = por %p76, %p77
    %p79 = scmp.ne.s32.totalorder %s67, %s68
    %p80 = scmp.eq.s32.totalorder %s16, 1
    %p81 = por %p79, %p80
    %p83 = scmp.ne.s32.totalorder %s68, %s82
    %p84 = scmp.eq.s32.totalorder %s16, 0
    %p85 = por %p83, %p84
    %s87 = sadd.s32 %s86, 1
    %p90 = scmp.eq.s32.totalorder %s10, 1
    %p91 = scmp.ne.s32.totalorder %s86, %s88
    %p92 = scmp.eq.s32.totalorder %s10, 0
    %p93 = por %p91, %p92
    %p94 = scmp.ne.s32.totalorder %s86, %s88
    %p95 = scmp.eq.s32.totalorder %s15, 1
    %p96 = por %p94, %p95
    %p97 = scmp.ne.s32.totalorder %s88, %s89
    %p98 = scmp.eq.s32.totalorder %s15, 0
    %p99 = por %p97, %p98
    %p100 = scmp.ne.s32.totalorder %s88, %s89
    %p101 = scmp.eq.s32.totalorder %s16, 1
    %p102 = por %p100, %p101
    %p104 = scmp.ne.s32.totalorder %s89, %s103
    %p105 = scmp.eq.s32.totalorder %s16, 0
    %p106 = por %p104, %p105
    %s107 = ssub.s32 %s10, %s17
    %p108 = scmp.eq.s32.totalorder %s107, 0
    %s110 = sadd.s32 %s109, 1
    %s111 = scalar_select %p108, %s109, %s110
    %p114 = pneg %p108
    %p115 = scmp.eq.s32.totalorder %s10, 1
    %p116 = por %p114, %p115
    %p117 = scmp.ne.s32.totalorder %s109, %s112
    %p118 = scmp.eq.s32.totalorder %s10, 0
    %p119 = por %p117, %p118
    %p120 = scmp.ne.s32.totalorder %s109, %s112
    %p121 = scmp.eq.s32.totalorder %s15, 1
    %p122 = por %p120, %p121
    %p123 = scmp.ne.s32.totalorder %s112, %s113
    %p124 = scmp.eq.s32.totalorder %s15, 0
    %p125 = por %p123, %p124
    %p126 = scmp.ne.s32.totalorder %s112, %s113
    %p127 = scmp.eq.s32.totalorder %s16, 1
    %p128 = por %p126, %p127
    %p130 = scmp.ne.s32.totalorder %s113, %s129
    %p131 = scmp.eq.s32.totalorder %s16, 0
    %p132 = por %p130, %p131
    %p133 = scmp.le.s32.totalorder 1, %s10
    %p134 = scmp.lt.s32.totalorder %s10, 3
    %p135 = pnand %p133, %p134
    %p136 = pneg %p135
    // Predicated region
    $region9: #{nbody_gnn_forward.1} parent=5 // pred_check
      _
    $region10: #{nbody_gnn_forward.1} parent=5 // pred_check_branch
      %138 = sbr.rel (%p135) target = $region12
    $region11: #{nbody_gnn_forward.1} parent=5 // pred_region
      %s139 = ssub.s32 %s10, 1
      // Predicated region
      $region13: #{nbody_gnn_forward.1} parent=11 // pred_check
        %p140 = pneg %p57
      $region14: #{nbody_gnn_forward.1} parent=11 // pred_check_branch
        %142 = sbr.rel (%p140) target = $region16
      $region15: #{nbody_gnn_forward.1} parent=11 // pred_region
        _
      $region16: #{nbody_gnn_forward.1} parent=11 // pred_fallthru
        _
      // Predicated region
      $region17: #{nbody_gnn_forward.1} parent=11 // pred_check
        %p143 = pneg %p78
      $region18: #{nbody_gnn_forward.1} parent=11 // pred_check_branch
        %145 = sbr.rel (%p143) target = $region20
      $region19: #{nbody_gnn_forward.1} parent=11 // pred_region
        _
      $region20: #{nbody_gnn_forward.1} parent=11 // pred_fallthru
        _
      // Predicated region
      $region21: #{nbody_gnn_forward.1} parent=11 // pred_check
        %p146 = pneg %p99
      $region22: #{nbody_gnn_forward.1} parent=11 // pred_check_branch
        %148 = sbr.rel (%p146) target = $region24
      $region23: #{nbody_gnn_forward.1} parent=11 // pred_region
        _
      $region24: #{nbody_gnn_forward.1} parent=11 // pred_fallthru
        _
    $region12: #{nbody_gnn_forward.1} parent=5 // pred_fallthru
      _
    %p149 = scmp.lt.s32.totalorder %s10, 2
    // Predicated region
    $region25: #{nbody_gnn_forward.1} parent=5 // pred_check
      %p150 = pneg %p149
    $region26: #{nbody_gnn_forward.1} parent=5 // pred_check_branch
      %152 = sbr.rel (%p150) target = $region28
    $region27: #{nbody_gnn_forward.1} parent=5 // pred_region
      // Predicated region
      $region29: #{nbody_gnn_forward.1} parent=27 // pred_check
        %p153 = pneg %p30
      $region30: #{nbody_gnn_forward.1} parent=27 // pred_check_branch
        %155 = sbr.rel (%p153) target = $region32
      $region31: #{nbody_gnn_forward.1} parent=27 // pred_region
        %s156 = smul.u32 16, %s10
        %p157 = scmp.lt.s32.totalorder %s156, 31
        %s158 = scalar_select %p157, %s156, 31
        %s159 = smul.addr %s158, 8
        %s160 = scalar_lea.vmem %s0, %s159
        %s161 = smul.u32 16, %s10
      $region32: #{nbody_gnn_forward.1} parent=27 // pred_fallthru
        _
    $region28: #{nbody_gnn_forward.1} parent=5 // pred_fallthru
      _
    %p162 = scmp.le.s32.totalorder 1, %s10
    %p163 = scmp.lt.s32.totalorder %s10, 3
    %p164 = pnand %p162, %p163
    %p165 = pneg %p164
    // Predicated region
    $region33: #{nbody_gnn_forward.1} parent=5 // pred_check
      _
    $region34: #{nbody_gnn_forward.1} parent=5 // pred_check_branch
      %167 = sbr.rel (%p164) target = $region36
    $region35: #{nbody_gnn_forward.1} parent=5 // pred_region
      %s168 = ssub.s32 %s10, 1
      %s169 = smul.u32 16, %s15
      %p170 = scmp.lt.s32.totalorder %s169, 31
      %s171 = scalar_select %p170, %s169, 31
      %s172 = smul.addr %s171, 8
      %s173 = scalar_lea.vmem %s0, %s172
      %p174 = pneg %p36
      %p175 = pneg %p33
      %p176 = pneg %p57
      %p177 = pneg %p54
      %p178 = pneg %p78
      %p179 = pneg %p75
      %p180 = pneg %p99
      %p181 = pneg %p96
      %p182 = pneg %p125
      %p183 = pneg %p122
      %s184 = smul.u32 2, %s15
      %p185 = scmp.lt.s32.totalorder %s184, 3
      %s186 = scalar_select %p185, %s184, 3
      %s187 = smul.addr %s186, 8
      %s188 = scalar_lea.vmem %s4, %s187
      %s189 = smul.u32 16, %s15
      %p190 = scmp.lt.s32.totalorder %s189, 31
      %s191 = scalar_select %p190, %s189, 31
      %s192 = smul.addr %s191, 8
      %s193 = scalar_lea.vmem %s0, %s192
      %s194 = smul.u32 16, %s15
      %s195 = smul.u32 2, %s15
      %p196 = scmp.lt.s32.totalorder %s195, 3
      %s197 = scalar_select %p196, %s195, 3
      %s198 = smul.addr %s197, 8
      %s199 = scalar_lea.vmem %s4, %s198
      %s200 = smul.u32 2, %s15
      %v202 = vld [vmem:[%s193] sm:$0xff]
      %v203 = vld [vmem:[%s193 + $0x8] sm:$0xff]
      %v204 = vld [vmem:[%s193 + $0x10] sm:$0xff]
      %v205 = vld [vmem:[%s193 + $0x18] sm:$0xff]
      %v206 = vld [vmem:[%s193 + $0x20] sm:$0xff]
      %v207 = vld [vmem:[%s193 + $0x28] sm:$0xff]
      %v208 = vld [vmem:[%s193 + $0x30] sm:$0xff]
      %v209 = vld [vmem:[%s193 + $0x38] sm:$0xff]
      %v210 = vld [vmem:[%s193 + $0x40] sm:$0xff]
      %v211 = vld [vmem:[%s193 + $0x48] sm:$0xff]
      %v212 = vld [vmem:[%s193 + $0x50] sm:$0xff]
      %v213 = vld [vmem:[%s193 + $0x58] sm:$0xff]
      %v214 = vld [vmem:[%s193 + $0x60] sm:$0xff]
      %v215 = vld [vmem:[%s193 + $0x68] sm:$0xff]
      %v216 = vld [vmem:[%s193 + $0x70] sm:$0xff]
      %v217 = vld [vmem:[%s193 + $0x78] sm:$0xff]
      %v218 = vpack.c.bf16 %v203, %v202
      %v219 = vpack.c.bf16 %v205, %v204
      %v220 = vpack.c.bf16 %v207, %v206
      %v221 = vpack.c.bf16 %v209, %v208
      %v222 = vpack.c.bf16 %v211, %v210
      %v223 = vpack.c.bf16 %v213, %v212
      %v224 = vpack.c.bf16 %v215, %v214
      %v225 = vpack.c.bf16 %v217, %v216
      %v226 = vld [vmem:[%s1] sm:$0xf]
      %v227 = vld [vmem:[%s1 + $0x4] sm:$0xf]
      %v228 = vld [vmem:[%s1 + $0x8] sm:$0xf]
      %v229 = vld [vmem:[%s1 + $0xc] sm:$0xf]
      %v230 = vld [vmem:[%s1 + $0x10] sm:$0xf]
      %v231 = vld [vmem:[%s1 + $0x14] sm:$0xf]
      %v232 = vld [vmem:[%s1 + $0x18] sm:$0xf]
      %v233 = vld [vmem:[%s1 + $0x1c] sm:$0xf]
      %v234 = vld [vmem:[%s1 + $0x20] sm:$0xf]
      %v235 = vld [vmem:[%s1 + $0x24] sm:$0xf]
      %v236 = vld [vmem:[%s1 + $0x28] sm:$0xf]
      %v237 = vld [vmem:[%s1 + $0x2c] sm:$0xf]
      %v238 = vld [vmem:[%s1 + $0x30] sm:$0xf]
      %v239 = vld [vmem:[%s1 + $0x34] sm:$0xf]
      %v240 = vld [vmem:[%s1 + $0x38] sm:$0xf]
      %v241 = vld [vmem:[%s1 + $0x3c] sm:$0xf]
      %v242 = vld [vmem:[%s1 + $0x40] sm:$0xf]
      %v243 = vld [vmem:[%s1 + $0x44] sm:$0xf]
      %v244 = vld [vmem:[%s1 + $0x48] sm:$0xf]
      %v245 = vld [vmem:[%s1 + $0x4c] sm:$0xf]
      %v246 = vld [vmem:[%s1 + $0x50] sm:$0xf]
      %v247 = vld [vmem:[%s1 + $0x54] sm:$0xf]
      %v248 = vld [vmem:[%s1 + $0x58] sm:$0xf]
      %v249 = vld [vmem:[%s1 + $0x5c] sm:$0xf]
      %v250 = vld [vmem:[%s1 + $0x60] sm:$0xf]
      %v251 = vld [vmem:[%s1 + $0x64] sm:$0xf]
      %v252 = vld [vmem:[%s1 + $0x68] sm:$0xf]
      %v253 = vld [vmem:[%s1 + $0x6c] sm:$0xf]
      %v254 = vld [vmem:[%s1 + $0x70] sm:$0xf]
      %v255 = vld [vmem:[%s1 + $0x74] sm:$0xf]
      %v256 = vld [vmem:[%s1 + $0x78] sm:$0xf]
      %v257 = vld [vmem:[%s1 + $0x7c] sm:$0xf]
      %v258 = vld [vmem:[%s1 + $0x80] sm:$0xf]
      %v259 = vld [vmem:[%s1 + $0x84] sm:$0xf]
      %v260 = vld [vmem:[%s1 + $0x88] sm:$0xf]
      %v261 = vunpack.c.l.bf16 %v260
      %v262 = vlaneseq
      %v263 = vshrl.u32 %v262, 7
      %v264 = vadd.s32 %v263, 8
      %v265 = vadd.s32 %v263, 16
      %v266 = vadd.s32 %v263, 24
      %v267 = vadd.s32 %v263, 32
      %v268 = vadd.s32 %v263, 40
      %v269 = vadd.s32 %v263, 48
      %v270 = vadd.s32 %v263, 56
      %v271 = vadd.s32 %v263, 64
      %v272 = vadd.s32 %v263, 72
      %v273 = vadd.s32 %v263, 80
      %v274 = vadd.s32 %v263, 88
      %v275 = vadd.s32 %v263, 96
      %v276 = vadd.s32 %v263, 104
      %v277 = vadd.s32 %v263, 112
      %v278 = vadd.s32 %v263, 120
      %v279 = vlaneseq
      %v280 = vand.u32 %v279, 127
      %v281 = vshra.s32 %v263, 3
      %v282 = vshra.s32 %v264, 3
      %v283 = vshra.s32 %v265, 3
      %v284 = vshra.s32 %v266, 3
      %v285 = vshra.s32 %v267, 3
      %v286 = vshra.s32 %v268, 3
      %v287 = vshra.s32 %v269, 3
      %v288 = vshra.s32 %v270, 3
      %v289 = vshra.s32 %v271, 3
      %v290 = vshra.s32 %v272, 3
      %v291 = vshra.s32 %v273, 3
      %v292 = vshra.s32 %v274, 3
      %v293 = vshra.s32 %v275, 3
      %v294 = vshra.s32 %v276, 3
      %v295 = vshra.s32 %v277, 3
      %v296 = vshra.s32 %v278, 3
      %v297 = vshra.s32 %v280, 3
      %vm298 = vcmp.eq.s32.totalorder %v281, %v297
      %vm299 = vcmp.eq.s32.totalorder %v282, %v297
      %vm300 = vcmp.eq.s32.totalorder %v283, %v297
      %vm301 = vcmp.eq.s32.totalorder %v284, %v297
      %vm302 = vcmp.eq.s32.totalorder %v285, %v297
      %vm303 = vcmp.eq.s32.totalorder %v286, %v297
      %vm304 = vcmp.eq.s32.totalorder %v287, %v297
      %vm305 = vcmp.eq.s32.totalorder %v288, %v297
      %vm306 = vcmp.eq.s32.totalorder %v289, %v297
      %vm307 = vcmp.eq.s32.totalorder %v290, %v297
      %vm308 = vcmp.eq.s32.totalorder %v291, %v297
      %vm309 = vcmp.eq.s32.totalorder %v292, %v297
      %vm310 = vcmp.eq.s32.totalorder %v293, %v297
      %vm311 = vcmp.eq.s32.totalorder %v294, %v297
      %vm312 = vcmp.eq.s32.totalorder %v295, %v297
      %vm313 = vcmp.eq.s32.totalorder %v296, %v297
      %v314 = vand.u32 %v280, 7
      %vm315 = vcmp.lt.s32.totalorder %v314, 3
      %v316 = vand.u32 %v263, 7
      %v317 = vand.u32 %v264, 7
      %v318 = vand.u32 %v265, 7
      %v319 = vand.u32 %v266, 7
      %v320 = vand.u32 %v267, 7
      %v321 = vand.u32 %v268, 7
      %v322 = vand.u32 %v269, 7
      %v323 = vand.u32 %v270, 7
      %v324 = vand.u32 %v271, 7
      %v325 = vand.u32 %v272, 7
      %v326 = vand.u32 %v273, 7
      %v327 = vand.u32 %v274, 7
      %v328 = vand.u32 %v275, 7
      %v329 = vand.u32 %v276, 7
      %v330 = vand.u32 %v277, 7
      %v331 = vand.u32 %v278, 7
      %vm332 = vcmp.lt.s32.totalorder %v316, 3
      %vm333 = vcmp.lt.s32.totalorder %v317, 3
      %vm334 = vcmp.lt.s32.totalorder %v318, 3
      %vm335 = vcmp.lt.s32.totalorder %v319, 3
      %vm336 = vcmp.lt.s32.totalorder %v320, 3
      %vm337 = vcmp.lt.s32.totalorder %v321, 3
      %vm338 = vcmp.lt.s32.totalorder %v322, 3
      %vm339 = vcmp.lt.s32.totalorder %v323, 3
      %vm340 = vcmp.lt.s32.totalorder %v324, 3
      %vm341 = vcmp.lt.s32.totalorder %v325, 3
      %vm342 = vcmp.lt.s32.totalorder %v326, 3
      %vm343 = vcmp.lt.s32.totalorder %v327, 3
      %vm344 = vcmp.lt.s32.totalorder %v328, 3
      %vm345 = vcmp.lt.s32.totalorder %v329, 3
      %vm346 = vcmp.lt.s32.totalorder %v330, 3
      %vm347 = vcmp.lt.s32.totalorder %v331, 3
      %vm348 = vmand %vm298, %vm315
      %vm349 = vmand %vm299, %vm315
      %vm350 = vmand %vm300, %vm315
      %vm351 = vmand %vm301, %vm315
      %vm352 = vmand %vm302, %vm315
      %vm353 = vmand %vm303, %vm315
      %vm354 = vmand %vm304, %vm315
      %vm355 = vmand %vm305, %vm315
      %vm356 = vmand %vm306, %vm315
      %vm357 = vmand %vm307, %vm315
      %vm358 = vmand %vm308, %vm315
      %vm359 = vmand %vm309, %vm315
      %vm360 = vmand %vm310, %vm315
      %vm361 = vmand %vm311, %vm315
      %vm362 = vmand %vm312, %vm315
      %vm363 = vmand %vm313, %vm315
      %vm364 = vmand %vm348, %vm332
      %vm365 = vmand %vm349, %vm333
      %vm366 = vmand %vm350, %vm334
      %vm367 = vmand %vm351, %vm335
      %vm368 = vmand %vm352, %vm336
      %vm369 = vmand %vm353, %vm337
      %vm370 = vmand %vm354, %vm338
      %vm371 = vmand %vm355, %vm339
      %vm372 = vmand %vm356, %vm340
      %vm373 = vmand %vm357, %vm341
      %vm374 = vmand %vm358, %vm342
      %vm375 = vmand %vm359, %vm343
      %vm376 = vmand %vm360, %vm344
      %vm377 = vmand %vm361, %vm345
      %vm378 = vmand %vm362, %vm346
      %vm379 = vmand %vm363, %vm347
      %vm380 = vcmp.ne.s32.totalorder %v263, %v280
      %vm381 = vcmp.ne.s32.totalorder %v264, %v280
      %vm382 = vcmp.ne.s32.totalorder %v265, %v280
      %vm383 = vcmp.ne.s32.totalorder %v266, %v280
      %vm384 = vcmp.ne.s32.totalorder %v267, %v280
      %vm385 = vcmp.ne.s32.totalorder %v268, %v280
      %vm386 = vcmp.ne.s32.totalorder %v269, %v280
      %vm387 = vcmp.ne.s32.totalorder %v270, %v280
      %vm388 = vcmp.ne.s32.totalorder %v271, %v280
      %vm389 = vcmp.ne.s32.totalorder %v272, %v280
      %vm390 = vcmp.ne.s32.totalorder %v273, %v280
      %vm391 = vcmp.ne.s32.totalorder %v274, %v280
      %vm392 = vcmp.ne.s32.totalorder %v275, %v280
      %vm393 = vcmp.ne.s32.totalorder %v276, %v280
      %vm394 = vcmp.ne.s32.totalorder %v277, %v280
      %vm395 = vcmp.ne.s32.totalorder %v278, %v280
      %vm396 = vmand %vm364, %vm380
      %vm397 = vmand %vm365, %vm381
      %vm398 = vmand %vm366, %vm382
      %vm399 = vmand %vm367, %vm383
      %vm400 = vmand %vm368, %vm384
      %vm401 = vmand %vm369, %vm385
      %vm402 = vmand %vm370, %vm386
      %vm403 = vmand %vm371, %vm387
      %vm404 = vmand %vm372, %vm388
      %vm405 = vmand %vm373, %vm389
      %vm406 = vmand %vm374, %vm390
      %vm407 = vmand %vm375, %vm391
      %vm408 = vmand %vm376, %vm392
      %vm409 = vmand %vm377, %vm393
      %vm410 = vmand %vm378, %vm394
      %vm411 = vmand %vm379, %vm395
      %v412 = vsel %vm396, 1.0, 0.0
      %v413 = vsel %vm397, 1.0, 0.0
      %v414 = vsel %vm398, 1.0, 0.0
      %v415 = vsel %vm399, 1.0, 0.0
      %v416 = vsel %vm400, 1.0, 0.0
      %v417 = vsel %vm401, 1.0, 0.0
      %v418 = vsel %vm402, 1.0, 0.0
      %v419 = vsel %vm403, 1.0, 0.0
      %v420 = vsel %vm404, 1.0, 0.0
      %v421 = vsel %vm405, 1.0, 0.0
      %v422 = vsel %vm406, 1.0, 0.0
      %v423 = vsel %vm407, 1.0, 0.0
      %v424 = vsel %vm408, 1.0, 0.0
      %v425 = vsel %vm409, 1.0, 0.0
      %v426 = vsel %vm410, 1.0, 0.0
      %v427 = vsel %vm411, 1.0, 0.0
      %v428 = vpack.c.bf16 %v413, %v412
      %v429 = vpack.c.bf16 %v415, %v414
      %v430 = vpack.c.bf16 %v417, %v416
      %v431 = vpack.c.bf16 %v419, %v418
      %v432 = vpack.c.bf16 %v421, %v420
      %v433 = vpack.c.bf16 %v423, %v422
      %v434 = vpack.c.bf16 %v425, %v424
      %v435 = vpack.c.bf16 %v427, %v426
      %436 = vmatprep.subr.bf16.mxu0 0
      %437 = vmatpush1.bf16.msra.mxu0 %v218
      %438 = vmatprep.subr.bf16.mxu0 0
      %439 = vmatpush1.bf16.msra.mxu0 %v219
      %440 = vmatprep.subr.bf16.mxu0 0
      %441 = vmatpush1.bf16.msra.mxu0 %v220
      %442 = vmatprep.subr.bf16.mxu0 0
      %443 = vmatpush1.bf16.msra.mxu0 %v221
      %444 = vmatprep.subr.bf16.mxu0 0
      %445 = vmatpush1.bf16.msra.mxu0 %v222
      %446 = vmatprep.subr.bf16.mxu0 0
      %447 = vmatpush1.bf16.msra.mxu0 %v223
      %448 = vmatprep.subr.bf16.mxu0 0
      %449 = vmatpush1.bf16.msra.mxu0 %v224
      %450 = vmatprep.subr.bf16.mxu0 0
      %451 = vmatpush1.bf16.msra.mxu0 %v225
      %452 = vmatprep.subr.bf16.mxu0 0
      %453 = vmatpush1.bf16.msra.mxu0 0
      %454 = vmatprep.subr.bf16.mxu0 0
      %455 = vmatpush1.bf16.msra.mxu0 0
      %456 = vmatprep.subr.bf16.mxu0 0
      %457 = vmatpush1.bf16.msra.mxu0 0
      %458 = vmatprep.subr.bf16.mxu0 0
      %459 = vmatpush1.bf16.msra.mxu0 0
      %460 = vmatprep.subr.bf16.mxu0 0
      %461 = vmatpush1.bf16.msra.mxu0 0
      %462 = vmatprep.subr.bf16.mxu0 0
      %463 = vmatpush1.bf16.msra.mxu0 0
      %464 = vmatprep.subr.bf16.mxu0 0
      %465 = vmatpush1.bf16.msra.mxu0 0
      %466 = vmatprep.subr.bf16.mxu0 0
      %467 = vmatpush1.bf16.msra.mxu0 0
      %468 = vmatprep.mubr.bf16.mxu0 0
      %469 = vmatmul.mubr.bf16.gmra.mrb[0].mxu0 %v428
      %v470 = vpop.f32.mrb[0].mxu0
      %v471 = vadd.f32 0.0, %v470
      %v472 = vpop.f32.mrb[0].mxu0
      %v473 = vpop.f32.mrb[0].mxu0
      %v474 = vadd.f32 0.0, %v473
      %v475 = vpop.f32.mrb[0].mxu0
      %476 = vmatprep.mubr.bf16.mxu0 0
      %477 = vmatmul.mubr.bf16.gmra.mrb[0].mxu0 %v429
      %v478 = vpop.f32.mrb[0].mxu0
      %v479 = vadd.f32 0.0, %v478
      %v480 = vpop.f32.mrb[0].mxu0
      %v481 = vpop.f32.mrb[0].mxu0
      %v482 = vadd.f32 0.0, %v481
      %v483 = vpop.f32.mrb[0].mxu0
      %484 = vmatprep.mubr.bf16.mxu0 0
      %485 = vmatmul.mubr.bf16.gmra.mrb[0].mxu0 %v430
      %v486 = vpop.f32.mrb[0].mxu0
      %v487 = vadd.f32 0.0, %v486
      %v488 = vpop.f32.mrb[0].mxu0
      %v489 = vpop.f32.mrb[0].mxu0
      %v490 = vadd.f32 0.0, %v489
      %v491 = vpop.f32.mrb[0].mxu0
      %492 = vmatprep.mubr.bf16.mxu0 0
      %493 = vmatmul.mubr.bf16.gmra.mrb[0].mxu0 %v431
      %v494 = vpop.f32.mrb[0].mxu0
      %v495 = vadd.f32 0.0, %v494
      %v496 = vpop.f32.mrb[0].mxu0
      %v497 = vpop.f32.mrb[0].mxu0
      %v498 = vadd.f32 0.0, %v497
      %v499 = vpop.f32.mrb[0].mxu0
      %500 = vmatprep.mubr.bf16.mxu0 0
      %501 = vmatmul.mubr.bf16.gmra.mrb[0].mxu0 %v432
      %v502 = vpop.f32.mrb[0].mxu0
      %v503 = vadd.f32 0.0, %v502
      %v504 = vpop.f32.mrb[0].mxu0
      %v505 = vpop.f32.mrb[0].mxu0
      %v506 = vadd.f32 0.0, %v505
      %v507 = vpop.f32.mrb[0].mxu0
      %508 = vmatprep.mubr.bf16.mxu0 0
      %509 = vmatmul.mubr.bf16.gmra.mrb[0].mxu0 %v433
      %v510 = vpop.f32.mrb[0].mxu0
      %v511 = vadd.f32 0.0, %v510
      %v512 = vpop.f32.mrb[0].mxu0
      %v513 = vpop.f32.mrb[0].mxu0
      %v514 = vadd.f32 0.0, %v513
      %v515 = vpop.f32.mrb[0].mxu0
      %516 = vmatprep.mubr.bf16.mxu0 0
      %517 = vmatmul.mubr.bf16.gmra.mrb[0].mxu0 %v434
      %v518 = vpop.f32.mrb[0].mxu0
      %v519 = vadd.f32 0.0, %v518
      %v520 = vpop.f32.mrb[0].mxu0
      %v521 = vpop.f32.mrb[0].mxu0
      %v522 = vadd.f32 0.0, %v521
      %v523 = vpop.f32.mrb[0].mxu0
      %524 = vmatprep.mubr.bf16.mxu0 0
      %525 = vmatmul.mubr.bf16.gmra.mrb[0].mxu0 %v435
      %v526 = vpop.f32.mrb[0].mxu0
      %v527 = vadd.f32 0.0, %v526
      %v528 = vpop.f32.mrb[0].mxu0
      %v529 = vpop.f32.mrb[0].mxu0
      %v530 = vadd.f32 0.0, %v529
      %v531 = vpop.f32.mrb[0].mxu0
      %532 = vdwg.mxu0
      %v533 = vpack.c.bf16 %v474, %v471
      %v534 = vpack.c.bf16 %v482, %v479
      %v535 = vpack.c.bf16 %v490, %v487
      %v536 = vpack.c.bf16 %v498, %v495
      %v537 = vpack.c.bf16 %v506, %v503
      %v538 = vpack.c.bf16 %v514, %v511
      %v539 = vpack.c.bf16 %v522, %v519
      %v540 = vpack.c.bf16 %v530, %v527
      %vm541 = vcmask 64512
      %v543 = vsel %vm541, %v218, 0
      %v546 = vsel %vm541, %v219, 0
      %v549 = vsel %vm541, %v220, 0
      %v552 = vsel %vm541, %v221, 0
      %v555 = vsel %vm541, %v222, 0
      %v558 = vsel %vm541, %v223, 0
      %v561 = vsel %vm541, %v224, 0
      %v564 = vsel %vm541, %v225, 0
      %vm566 = vcmask 1043456
      %v568 = vsel %vm566, %v227, 0
      %570 = vmatprep.subr.bf16.mxu0 0
      %571 = vmatpush1.bf16.msra.mxu0 %v568
      %572 = vmatprep.subr.bf16.mxu0 0
      %573 = vmatpush1.bf16.msra.mxu0 0
      %574 = vmatprep.subr.bf16.mxu0 0
      %575 = vmatpush1.bf16.msra.mxu0 0
      %576 = vmatprep.subr.bf16.mxu0 0
      %577 = vmatpush1.bf16.msra.mxu0 0
      %578 = vmatprep.subr.bf16.mxu0 0
      %579 = vmatpush1.bf16.msra.mxu0 0
      %580 = vmatprep.subr.bf16.mxu0 0
      %581 = vmatpush1.bf16.msra.mxu0 0
      %582 = vmatprep.subr.bf16.mxu0 0
      %583 = vmatpush1.bf16.msra.mxu0 0
      %584 = vmatprep.subr.bf16.mxu0 0
      %585 = vmatpush1.bf16.msra.mxu0 0
      %586 = vmatprep.subr.bf16.mxu0 0
      %587 = vmatpush1.bf16.msra.mxu0 0
      %588 = vmatprep.subr.bf16.mxu0 0
      %589 = vmatpush1.bf16.msra.mxu0 0
      %590 = vmatprep.subr.bf16.mxu0 0
      %591 = vmatpush1.bf16.msra.mxu0 0
      %592 = vmatprep.subr.bf16.mxu0 0
      %593 = vmatpush1.bf16.msra.mxu0 0
      %594 = vmatprep.subr.bf16.mxu0 0
      %595 = vmatpush1.bf16.msra.mxu0 0
      %596 = vmatprep.subr.bf16.mxu0 0
      %597 = vmatpush1.bf16.msra.mxu0 0
      %598 = vmatprep.subr.bf16.mxu0 0
      %599 = vmatpush1.bf16.msra.mxu0 0
      %600 = vmatprep.subr.bf16.mxu0 0
      %601 = vmatpush1.bf16.msra.mxu0 0
      %602 = vmatprep.mubr.bf16.mxu0 0
      %603 = vmatmul.mubr.bf16.gmra.mrb[0].mxu0 %v543
      %v604 = vpop.f32.mrb[0].mxu0
      %v605 = vadd.f32 0.0, %v604
      %v606 = vpop.f32.mrb[0].mxu0
      %v607 = vpop.f32.mrb[0].mxu0
      %v608 = vadd.f32 0.0, %v607
      %v609 = vpop.f32.mrb[0].mxu0
      %610 = vmatprep.mubr.bf16.mxu0 0
      %611 = vmatmul.mubr.bf16.gmra.mrb[0].mxu0 %v546
      %v612 = vpop.f32.mrb[0].mxu0
      %v613 = vadd.f32 0.0, %v612
      %v614 = vpop.f32.mrb[0].mxu0
      %v615 = vpop.f32.mrb[0].mxu0
      %v616 = vadd.f32 0.0, %v615
      %v617 = vpop.f32.mrb[0].mxu0
      %618 = vmatprep.mubr.bf16.mxu0 0
      %619 = vmatmul.mubr.bf16.gmra.mrb[0].mxu0 %v549
      %v620 = vpop.f32.mrb[0].mxu0
      %v621 = vadd.f32 0.0, %v620
      %v622 = vpop.f32.mrb[0].mxu0
      %v623 = vpop.f32.mrb[0].mxu0
      %v624 = vadd.f32 0.0, %v623
      %v625 = vpop.f32.mrb[0].mxu0
      %626 = vmatprep.mubr.bf16.mxu0 0
      %627 = vmatmul.mubr.bf16.gmra.mrb[0].mxu0 %v552
      %v628 = vpop.f32.mrb[0].mxu0
      %v629 = vadd.f32 0.0, %v628
      %v630 = vpop.f32.mrb[0].mxu0
      %v631 = vpop.f32.mrb[0].mxu0
      %v632 = vadd.f32 0.0, %v631
      %v633 = vpop.f32.mrb[0].mxu0
      %634 = vmatprep.mubr.bf16.mxu0 0
      %635 = vmatmul.mubr.bf16.gmra.mrb[0].mxu0 %v555
      %v636 = vpop.f32.mrb[0].mxu0
      %v637 = vadd.f32 0.0, %v636
      %v638 = vpop.f32.mrb[0].mxu0
      %v639 = vpop.f32.mrb[0].mxu0
      %v640 = vadd.f32 0.0, %v639
      %v641 = vpop.f32.mrb[0].mxu0
      %642 = vmatprep.mubr.bf16.mxu0 0
      %643 = vmatmul.mubr.bf16.gmra.mrb[0].mxu0 %v558
      %v644 = vpop.f32.mrb[0].mxu0
      %v645 = vadd.f32 0.0, %v644
      %v646 = vpop.f32.mrb[0].mxu0
      %v647 = vpop.f32.mrb[0].mxu0
      %v648 = vadd.f32 0.0, %v647
      %v649 = vpop.f32.mrb[0].mxu0
      %650 = vmatprep.mubr.bf16.mxu0 0
      %651 = vmatmul.mubr.bf16.gmra.mrb[0].mxu0 %v561
      %v652 = vpop.f32.mrb[0].mxu0
      %v653 = vadd.f32 0.0, %v652
      %v654 = vpop.f32.mrb[0].mxu0
      %v655 = vpop.f32.mrb[0].mxu0
      %v656 = vadd.f32 0.0, %v655
      %v657 = vpop.f32.mrb[0].mxu0
      %658 = vmatprep.mubr.bf16.mxu0 0
      %659 = vmatmul.mubr.bf16.gmra.mrb[0].mxu0 %v564
      %v660 = vpop.f32.mrb[0].mxu0
      %v661 = vadd.f32 0.0, %v660
      %v662 = vpop.f32.mrb[0].mxu0
      %v663 = vpop.f32.mrb[0].mxu0
      %v664 = vadd.f32 0.0, %v663
      %v665 = vpop.f32.mrb[0].mxu0
      %666 = vdwg.mxu0
      %v668 = vsel %vm541, %v533, 0
      %v671 = vsel %vm541, %v534, 0
      %v674 = vsel %vm541, %v535, 0
      %v677 = vsel %vm541, %v536, 0
      %v680 = vsel %vm541, %v537, 0
      %v683 = vsel %vm541, %v538, 0
      %v686 = vsel %vm541, %v539, 0
      %v689 = vsel %vm541, %v540, 0
      %v692 = vsel %vm566, %v226, 0
      %694 = vmatprep.subr.bf16.mxu0 0
      %695 = vmatpush1.bf16.msra.mxu0 %v692
      %696 = vmatprep.subr.bf16.mxu0 0
      %697 = vmatpush1.bf16.msra.mxu0 0
      %698 = vmatprep.subr.bf16.mxu0 0
      %699 = vmatpush1.bf16.msra.mxu0 0
      %700 = vmatprep.subr.bf16.mxu0 0
      %701 = vmatpush1.bf16.msra.mxu0 0
      %702 = vmatprep.subr.bf16.mxu0 0
      %703 = vmatpush1.bf16.msra.mxu0 0
      %704 = vmatprep.subr.bf16.mxu0 0
      %705 = vmatpush1.bf16.msra.mxu0 0
      %706 = vmatprep.subr.bf16.mxu0 0
      %707 = vmatpush1.bf16.msra.mxu0 0
      %708 = vmatprep.subr.bf16.mxu0 0
      %709 = vmatpush1.bf16.msra.mxu0 0
      %710 = vmatprep.subr.bf16.mxu0 0
      %711 = vmatpush1.bf16.msra.mxu0 0
      %712 = vmatprep.subr.bf16.mxu0 0
      %713 = vmatpush1.bf16.msra.mxu0 0
      %714 = vmatprep.subr.bf16.mxu0 0
      %715 = vmatpush1.bf16.msra.mxu0 0
      %716 = vmatprep.subr.bf16.mxu0 0
      %717 = vmatpush1.bf16.msra.mxu0 0
      %718 = vmatprep.subr.bf16.mxu0 0
      %719 = vmatpush1.bf16.msra.mxu0 0
      %720 = vmatprep.subr.bf16.mxu0 0
      %721 = vmatpush1.bf16.msra.mxu0 0
      %722 = vmatprep.subr.bf16.mxu0 0
      %723 = vmatpush1.bf16.msra.mxu0 0
      %724 = vmatprep.subr.bf16.mxu0 0
      %725 = vmatpush1.bf16.msra.mxu0 0
      %726 = vmatprep.mubr.bf16.mxu0 0
      %727 = vmatmul.mubr.bf16.gmra.mrb[0].mxu0 %v668
      %v728 = vpop.f32.mrb[0].mxu0
      %v729 = vadd.f32 %v605, %v728
      %v730 = vpop.f32.mrb[0].mxu0
      %v731 = vpop.f32.mrb[0].mxu0
      %v732 = vadd.f32 %v608, %v731
      %v733 = vpop.f32.mrb[0].mxu0
      %734 = vmatprep.mubr.bf16.mxu0 0
      %735 = vmatmul.mubr.bf16.gmra.mrb[0].mxu0 %v671
      %v736 = vpop.f32.mrb[0].mxu0
      %v737 = vadd.f32 %v613, %v736
      %v738 = vpop.f32.mrb[0].mxu0
      %v739 = vpop.f32.mrb[0].mxu0
      %v740 = vadd.f32 %v616, %v739
      %v741 = vpop.f32.mrb[0].mxu0
      %742 = vmatprep.mubr.bf16.mxu0 0
      %743 = vmatmul.mubr.bf16.gmra.mrb[0].mxu0 %v674
      %v744 = vpop.f32.mrb[0].mxu0
      %v745 = vadd.f32 %v621, %v744
      %v746 = vpop.f32.mrb[0].mxu0
      %v747 = vpop.f32.mrb[0].mxu0
      %v748 = vadd.f32 %v624, %v747
      %v749 = vpop.f32.mrb[0].mxu0
      %750 = vmatprep.mubr.bf16.mxu0 0
      %751 = vmatmul.mubr.bf16.gmra.mrb[0].mxu0 %v677
      %v752 = vpop.f32.mrb[0].mxu0
      %v753 = vadd.f32 %v629, %v752
      %v754 = vpop.f32.mrb[0].mxu0
      %v755 = vpop.f32.mrb[0].mxu0
      %v756 = vadd.f32 %v632, %v755
      %v757 = vpop.f32.mrb[0].mxu0
      %758 = vmatprep.mubr.bf16.mxu0 0
      %759 = vmatmul.mubr.bf16.gmra.mrb[0].mxu0 %v680
      %v760 = vpop.f32.mrb[0].mxu0
      %v761 = vadd.f32 %v637, %v760
      %v762 = vpop.f32.mrb[0].mxu0
      %v763 = vpop.f32.mrb[0].mxu0
      %v764 = vadd.f32 %v640, %v763
      %v765 = vpop.f32.mrb[0].mxu0
      %766 = vmatprep.mubr.bf16.mxu0 0
      %767 = vmatmul.mubr.bf16.gmra.mrb[0].mxu0 %v683
      %v768 = vpop.f32.mrb[0].mxu0
      %v769 = vadd.f32 %v645, %v768
      %v770 = vpop.f32.mrb[0].mxu0
      %v771 = vpop.f32.mrb[0].mxu0
      %v772 = vadd.f32 %v648, %v771
      %v773 = vpop.f32.mrb[0].mxu0
      %774 = vmatprep.mubr.bf16.mxu0 0
      %775 = vmatmul.mubr.bf16.gmra.mrb[0].mxu0 %v686
      %v776 = vpop.f32.mrb[0].mxu0
      %v777 = vadd.f32 %v653, %v776
      %v778 = vpop.f32.mrb[0].mxu0
      %v779 = vpop.f32.mrb[0].mxu0
      %v780 = vadd.f32 %v656, %v779
      %v781 = vpop.f32.mrb[0].mxu0
      %782 = vmatprep.mubr.bf16.mxu0 0
      %783 = vmatmul.mubr.bf16.gmra.mrb[0].mxu0 %v689
      %v784 = vpop.f32.mrb[0].mxu0
      %v785 = vadd.f32 %v661, %v784
      %v786 = vpop.f32.mrb[0].mxu0
      %v787 = vpop.f32.mrb[0].mxu0
      %v788 = vadd.f32 %v664, %v787
      %v789 = vpop.f32.mrb[0].mxu0
      %790 = vdwg.mxu0
      %v791 = vlaneseq
      %v792 = vshrl.u32 %v791, 7
      %v793 = vsub.s32 0, %v792
      %v794 = vrot.slane %v261, %v793
      %v795 = vadd.f32 %v729, %v794
      %v796 = vadd.f32 %v732, %v794
      %v797 = vadd.f32 %v737, %v794
      %v798 = vadd.f32 %v740, %v794
      %v799 = vadd.f32 %v745, %v794
      %v800 = vadd.f32 %v748, %v794
      %v801 = vadd.f32 %v753, %v794
      %v802 = vadd.f32 %v756, %v794
      %v803 = vadd.f32 %v761, %v794
      %v804 = vadd.f32 %v764, %v794
      %v805 = vadd.f32 %v769, %v794
      %v806 = vadd.f32 %v772, %v794
      %v807 = vadd.f32 %v777, %v794
      %v808 = vadd.f32 %v780, %v794
      %v809 = vadd.f32 %v785, %v794
      %v810 = vadd.f32 %v788, %v794
      %v811 = vmax.f32 %v795, 0.0
      %v812 = vmax.f32 %v796, 0.0
      %v813 = vmax.f32 %v797, 0.0
      %v814 = vmax.f32 %v798, 0.0
      %v815 = vmax.f32 %v799, 0.0
      %v816 = vmax.f32 %v800, 0.0
      %v817 = vmax.f32 %v801, 0.0
      %v818 = vmax.f32 %v802, 0.0
      %v819 = vmax.f32 %v803, 0.0
      %v820 = vmax.f32 %v804, 0.0
      %v821 = vmax.f32 %v805, 0.0
      %v822 = vmax.f32 %v806, 0.0
      %v823 = vmax.f32 %v807, 0.0
      %v824 = vmax.f32 %v808, 0.0
      %v825 = vmax.f32 %v809, 0.0
      %v826 = vmax.f32 %v810, 0.0
      %v827 = vpack.c.bf16 %v812, %v811
      %v828 = vpack.c.bf16 %v814, %v813
      %v829 = vpack.c.bf16 %v816, %v815
      %v830 = vpack.c.bf16 %v818, %v817
      %v831 = vpack.c.bf16 %v820, %v819
      %v832 = vpack.c.bf16 %v822, %v821
      %v833 = vpack.c.bf16 %v824, %v823
      %v834 = vpack.c.bf16 %v826, %v825
      %835 = vmatprep.subr.bf16.mxu0 0
      %836 = vmatpush1.bf16.msra.mxu0 %v827
      %837 = vmatprep.subr.bf16.mxu0 0
      %838 = vmatpush1.bf16.msra.mxu0 %v828
      %839 = vmatprep.subr.bf16.mxu0 0
      %840 = vmatpush1.bf16.msra.mxu0 %v829
      %841 = vmatprep.subr.bf16.mxu0 0
      %842 = vmatpush1.bf16.msra.mxu0 %v830
      %843 = vmatprep.subr.bf16.mxu0 0
      %844 = vmatpush1.bf16.msra.mxu0 %v831
      %845 = vmatprep.subr.bf16.mxu0 0
      %846 = vmatpush1.bf16.msra.mxu0 %v832
      %847 = vmatprep.subr.bf16.mxu0 0
      %848 = vmatpush1.bf16.msra.mxu0 %v833
      %849 = vmatprep.subr.bf16.mxu0 0
      %850 = vmatpush1.bf16.msra.mxu0 %v834
      %851 = vmatprep.subr.bf16.mxu0 0
      %852 = vmatpush1.bf16.msra.mxu0 0
      %853 = vmatprep.subr.bf16.mxu0 0
      %854 = vmatpush1.bf16.msra.mxu0 0
      %855 = vmatprep.subr.bf16.mxu0 0
      %856 = vmatpush1.bf16.msra.mxu0 0
      %857 = vmatprep.subr.bf16.mxu0 0
      %858 = vmatpush1.bf16.msra.mxu0 0
      %859 = vmatprep.subr.bf16.mxu0 0
      %860 = vmatpush1.bf16.msra.mxu0 0
      %861 = vmatprep.subr.bf16.mxu0 0
      %862 = vmatpush1.bf16.msra.mxu0 0
      %863 = vmatprep.subr.bf16.mxu0 0
      %864 = vmatpush1.bf16.msra.mxu0 0
      %865 = vmatprep.subr.bf16.mxu0 0
      %866 = vmatpush1.bf16.msra.mxu0 0
      %867 = vmatprep.mubr.bf16.mxu0 0
      %868 = vmatmul.mubr.bf16.gmra.mrb[0].mxu0 %v428
      %v869 = vpop.f32.mrb[0].mxu0
      %v870 = vadd.f32 0.0, %v869
      %v871 = vpop.f32.mrb[0].mxu0
      %v872 = vpop.f32.mrb[0].mxu0
      %v873 = vadd.f32 0.0, %v872
      %v874 = vpop.f32.mrb[0].mxu0
      %875 = vmatprep.mubr.bf16.mxu0 0
      %876 = vmatmul.mubr.bf16.gmra.mrb[0].mxu0 %v429
      %v877 = vpop.f32.mrb[0].mxu0
      %v878 = vadd.f32 0.0, %v877
      %v879 = vpop.f32.mrb[0].mxu0
      %v880 = vpop.f32.mrb[0].mxu0
      %v881 = vadd.f32 0.0, %v880
      %v882 = vpop.f32.mrb[0].mxu0
      %883 = vmatprep.mubr.bf16.mxu0 0
      %884 = vmatmul.mubr.bf16.gmra.mrb[0].mxu0 %v430
      %v885 = vpop.f32.mrb[0].mxu0
      %v886 = vadd.f32 0.0, %v885
      %v887 = vpop.f32.mrb[0].mxu0
      %v888 = vpop.f32.mrb[0].mxu0
      %v889 = vadd.f32 0.0, %v888
      %v890 = vpop.f32.mrb[0].mxu0
      %891 = vmatprep.mubr.bf16.mxu0 0
      %892 = vmatmul.mubr.bf16.gmra.mrb[0].mxu0 %v431
      %v893 = vpop.f32.mrb[0].mxu0
      %v894 = vadd.f32 0.0, %v893
      %v895 = vpop.f32.mrb[0].mxu0
      %v896 = vpop.f32.mrb[0].mxu0
      %v897 = vadd.f32 0.0, %v896
      %v898 = vpop.f32.mrb[0].mxu0
      %899 = vmatprep.mubr.bf16.mxu0 0
      %900 = vmatmul.mubr.bf16.gmra.mrb[0].mxu0 %v432
      %v901 = vpop.f32.mrb[0].mxu0
      %v902 = vadd.f32 0.0, %v901
      %v903 = vpop.f32.mrb[0].mxu0
      %v904 = vpop.f32.mrb[0].mxu0
      %v905 = vadd.f32 0.0, %v904
      %v906 = vpop.f32.mrb[0].mxu0
      %907 = vmatprep.mubr.bf16.mxu0 0
      %908 = vmatmul.mubr.bf16.gmra.mrb[0].mxu0 %v433
      %v909 = vpop.f32.mrb[0].mxu0
      %v910 = vadd.f32 0.0, %v909
      %v911 = vpop.f32.mrb[0].mxu0
      %v912 = vpop.f32.mrb[0].mxu0
      %v913 = vadd.f32 0.0, %v912
      %v914 = vpop.f32.mrb[0].mxu0
      %915 = vmatprep.mubr.bf16.mxu0 0
      %916 = vmatmul.mubr.bf16.gmra.mrb[0].mxu0 %v434
      %v917 = vpop.f32.mrb[0].mxu0
      %v918 = vadd.f32 0.0, %v917
      %v919 = vpop.f32.mrb[0].mxu0
      %v920 = vpop.f32.mrb[0].mxu0
      %v921 = vadd.f32 0.0, %v920
      %v922 = vpop.f32.mrb[0].mxu0
      %923 = vmatprep.mubr.bf16.mxu0 0
      %924 = vmatmul.mubr.bf16.gmra.mrb[0].mxu0 %v435
      %v925 = vpop.f32.mrb[0].mxu0
      %v926 = vadd.f32 0.0, %v925
      %v927 = vpop.f32.mrb[0].mxu0
      %v928 = vpop.f32.mrb[0].mxu0
      %v929 = vadd.f32 0.0, %v928
      %v930 = vpop.f32.mrb[0].mxu0
      %931 = vdwg.mxu0
      %v932 = vpack.c.bf16 %v873, %v870
      %v933 = vpack.c.bf16 %v881, %v878
      %v934 = vpack.c.bf16 %v889, %v886
      %v935 = vpack.c.bf16 %v897, %v894
      %v936 = vpack.c.bf16 %v905, %v902
      %v937 = vpack.c.bf16 %v913, %v910
      %v938 = vpack.c.bf16 %v921, %v918
      %v939 = vpack.c.bf16 %v929, %v926
      %v956 = vunpack.c.l.b16 %v244
      %v957 = vunpack.c.l.b16 %v245
      %v958 = vunpack.c.l.b16 %v246
      %v959 = vunpack.c.l.b16 %v247
      %v960 = vunpack.c.l.b16 %v248
      %v961 = vunpack.c.l.b16 %v249
      %v962 = vunpack.c.l.b16 %v250
      %v963 = vunpack.c.l.b16 %v251
      %v964 = vunpack.c.l.b16 %v252
      %v965 = vunpack.c.l.b16 %v253
      %v966 = vunpack.c.l.b16 %v254
      %v967 = vunpack.c.l.b16 %v255
      %v968 = vunpack.c.l.b16 %v256
      %v969 = vunpack.c.l.b16 %v257
      %v970 = vunpack.c.l.b16 %v258
      %v971 = vunpack.c.l.b16 %v259
      %v972 = vpack.c.b16 %v957, %v956
      %v973 = vpack.c.b16 %v959, %v958
      %v974 = vpack.c.b16 %v961, %v960
      %v975 = vpack.c.b16 %v963, %v962
      %v976 = vpack.c.b16 %v965, %v964
      %v977 = vpack.c.b16 %v967, %v966
      %v978 = vpack.c.b16 %v969, %v968
      %v979 = vpack.c.b16 %v971, %v970
      %988 = vmatprep.subr.bf16.mxu0 0
      %989 = vmatpush1.bf16.msra.mxu0 %v972
      %990 = vmatprep.subr.bf16.mxu0 0
      %991 = vmatpush1.bf16.msra.mxu0 %v973
      %992 = vmatprep.subr.bf16.mxu0 0
      %993 = vmatpush1.bf16.msra.mxu0 %v974
      %994 = vmatprep.subr.bf16.mxu0 0
      %995 = vmatpush1.bf16.msra.mxu0 %v975
      %996 = vmatprep.subr.bf16.mxu0 0
      %997 = vmatpush1.bf16.msra.mxu0 %v976
      %998 = vmatprep.subr.bf16.mxu0 0
      %999 = vmatpush1.bf16.msra.mxu0 %v977
      %1000 = vmatprep.subr.bf16.mxu0 0
      %1001 = vmatpush1.bf16.msra.mxu0 %v978
      %1002 = vmatprep.subr.bf16.mxu0 0
      %1003 = vmatpush1.bf16.msra.mxu0 %v979
      %1004 = vmatprep.subr.bf16.mxu0 0
      %1005 = vmatpush1.bf16.msra.mxu0 0
      %1006 = vmatprep.subr.bf16.mxu0 0
      %1007 = vmatpush1.bf16.msra.mxu0 0
      %1008 = vmatprep.subr.bf16.mxu0 0
      %1009 = vmatpush1.bf16.msra.mxu0 0
      %1010 = vmatprep.subr.bf16.mxu0 0
      %1011 = vmatpush1.bf16.msra.mxu0 0
      %1012 = vmatprep.subr.bf16.mxu0 0
      %1013 = vmatpush1.bf16.msra.mxu0 0
      %1014 = vmatprep.subr.bf16.mxu0 0
      %1015 = vmatpush1.bf16.msra.mxu0 0
      %1016 = vmatprep.subr.bf16.mxu0 0
      %1017 = vmatpush1.bf16.msra.mxu0 0
      %1018 = vmatprep.subr.bf16.mxu0 0
      %1019 = vmatpush1.bf16.msra.mxu0 0
      %1020 = vmatprep.mubr.bf16.mxu0 0
      %1021 = vmatmul.mubr.bf16.gmra.mrb[0].mxu0 %v827
      %v1022 = vpop.f32.mrb[0].mxu0
      %v1023 = vadd.f32 0.0, %v1022
      %v1024 = vpop.f32.mrb[0].mxu0
      %v1025 = vpop.f32.mrb[0].mxu0
      %v1026 = vadd.f32 0.0, %v1025
      %v1027 = vpop.f32.mrb[0].mxu0
      %1028 = vmatprep.mubr.bf16.mxu0 0
      %1029 = vmatmul.mubr.bf16.gmra.mrb[0].mxu0 %v828
      %v1030 = vpop.f32.mrb[0].mxu0
      %v1031 = vadd.f32 0.0, %v1030
      %v1032 = vpop.f32.mrb[0].mxu0
      %v1033 = vpop.f32.mrb[0].mxu0
      %v1034 = vadd.f32 0.0, %v1033
      %v1035 = vpop.f32.mrb[0].mxu0
      %1036 = vmatprep.mubr.bf16.mxu0 0
      %1037 = vmatmul.mubr.bf16.gmra.mrb[0].mxu0 %v829
      %v1038 = vpop.f32.mrb[0].mxu0
      %v1039 = vadd.f32 0.0, %v1038
      %v1040 = vpop.f32.mrb[0].mxu0
      %v1041 = vpop.f32.mrb[0].mxu0
      %v1042 = vadd.f32 0.0, %v1041
      %v1043 = vpop.f32.mrb[0].mxu0
      %1044 = vmatprep.mubr.bf16.mxu0 0
      %1045 = vmatmul.mubr.bf16.gmra.mrb[0].mxu0 %v830
      %v1046 = vpop.f32.mrb[0].mxu0
      %v1047 = vadd.f32 0.0, %v1046
      %v1048 = vpop.f32.mrb[0].mxu0
      %v1049 = vpop.f32.mrb[0].mxu0
      %v1050 = vadd.f32 0.0, %v1049
      %v1051 = vpop.f32.mrb[0].mxu0
      %1052 = vmatprep.mubr.bf16.mxu0 0
      %1053 = vmatmul.mubr.bf16.gmra.mrb[0].mxu0 %v831
      %v1054 = vpop.f32.mrb[0].mxu0
      %v1055 = vadd.f32 0.0, %v1054
      %v1056 = vpop.f32.mrb[0].mxu0
      %v1057 = vpop.f32.mrb[0].mxu0
      %v1058 = vadd.f32 0.0, %v1057
      %v1059 = vpop.f32.mrb[0].mxu0
      %1060 = vmatprep.mubr.bf16.mxu0 0
      %1061 = vmatmul.mubr.bf16.gmra.mrb[0].mxu0 %v832
      %v1062 = vpop.f32.mrb[0].mxu0
      %v1063 = vadd.f32 0.0, %v1062
      %v1064 = vpop.f32.mrb[0].mxu0
      %v1065 = vpop.f32.mrb[0].mxu0
      %v1066 = vadd.f32 0.0, %v1065
      %v1067 = vpop.f32.mrb[0].mxu0
      %1068 = vmatprep.mubr.bf16.mxu0 0
      %1069 = vmatmul.mubr.bf16.gmra.mrb[0].mxu0 %v833
      %v1070 = vpop.f32.mrb[0].mxu0
      %v1071 = vadd.f32 0.0, %v1070
      %v1072 = vpop.f32.mrb[0].mxu0
      %v1073 = vpop.f32.mrb[0].mxu0
      %v1074 = vadd.f32 0.0, %v1073
      %v1075 = vpop.f32.mrb[0].mxu0
      %1076 = vmatprep.mubr.bf16.mxu0 0
      %1077 = vmatmul.mubr.bf16.gmra.mrb[0].mxu0 %v834
      %v1078 = vpop.f32.mrb[0].mxu0
      %v1079 = vadd.f32 0.0, %v1078
      %v1080 = vpop.f32.mrb[0].mxu0
      %v1081 = vpop.f32.mrb[0].mxu0
      %v1082 = vadd.f32 0.0, %v1081
      %v1083 = vpop.f32.mrb[0].mxu0
      %1084 = vdwg.mxu0
      %v1101 = vunpack.c.l.b16 %v228
      %v1102 = vunpack.c.l.b16 %v229
      %v1103 = vunpack.c.l.b16 %v230
      %v1104 = vunpack.c.l.b16 %v231
      %v1105 = vunpack.c.l.b16 %v232
      %v1106 = vunpack.c.l.b16 %v233
      %v1107 = vunpack.c.l.b16 %v234
      %v1108 = vunpack.c.l.b16 %v235
      %v1109 = vunpack.c.l.b16 %v236
      %v1110 = vunpack.c.l.b16 %v237
      %v1111 = vunpack.c.l.b16 %v238
      %v1112 = vunpack.c.l.b16 %v239
      %v1113 = vunpack.c.l.b16 %v240
      %v1114 = vunpack.c.l.b16 %v241
      %v1115 = vunpack.c.l.b16 %v242
      %v1116 = vunpack.c.l.b16 %v243
      %v1117 = vpack.c.b16 %v1102, %v1101
      %v1118 = vpack.c.b16 %v1104, %v1103
      %v1119 = vpack.c.b16 %v1106, %v1105
      %v1120 = vpack.c.b16 %v1108, %v1107
      %v1121 = vpack.c.b16 %v1110, %v1109
      %v1122 = vpack.c.b16 %v1112, %v1111
      %v1123 = vpack.c.b16 %v1114, %v1113
      %v1124 = vpack.c.b16 %v1116, %v1115
      %1133 = vmatprep.subr.bf16.mxu0 0
      %1134 = vmatpush1.bf16.msra.mxu0 %v1117
      %1135 = vmatprep.subr.bf16.mxu0 0
      %1136 = vmatpush1.bf16.msra.mxu0 %v1118
      %1137 = vmatprep.subr.bf16.mxu0 0
      %1138 = vmatpush1.bf16.msra.mxu0 %v1119
      %1139 = vmatprep.subr.bf16.mxu0 0
      %1140 = vmatpush1.bf16.msra.mxu0 %v1120
      %1141 = vmatprep.subr.bf16.mxu0 0
      %1142 = vmatpush1.bf16.msra.mxu0 %v1121
      %1143 = vmatprep.subr.bf16.mxu0 0
      %1144 = vmatpush1.bf16.msra.mxu0 %v1122
      %1145 = vmatprep.subr.bf16.mxu0 0
      %1146 = vmatpush1.bf16.msra.mxu0 %v1123
      %1147 = vmatprep.subr.bf16.mxu0 0
      %1148 = vmatpush1.bf16.msra.mxu0 %v1124
      %1149 = vmatprep.subr.bf16.mxu0 0
      %1150 = vmatpush1.bf16.msra.mxu0 0
      %1151 = vmatprep.subr.bf16.mxu0 0
      %1152 = vmatpush1.bf16.msra.mxu0 0
      %1153 = vmatprep.subr.bf16.mxu0 0
      %1154 = vmatpush1.bf16.msra.mxu0 0
      %1155 = vmatprep.subr.bf16.mxu0 0
      %1156 = vmatpush1.bf16.msra.mxu0 0
      %1157 = vmatprep.subr.bf16.mxu0 0
      %1158 = vmatpush1.bf16.msra.mxu0 0
      %1159 = vmatprep.subr.bf16.mxu0 0
      %1160 = vmatpush1.bf16.msra.mxu0 0
      %1161 = vmatprep.subr.bf16.mxu0 0
      %1162 = vmatpush1.bf16.msra.mxu0 0
      %1163 = vmatprep.subr.bf16.mxu0 0
      %1164 = vmatpush1.bf16.msra.mxu0 0
      %1165 = vmatprep.mubr.bf16.mxu0 0
      %1166 = vmatmul.mubr.bf16.gmra.mrb[0].mxu0 %v932
      %v1167 = vpop.f32.mrb[0].mxu0
      %v1168 = vadd.f32 %v1023, %v1167
      %v1169 = vpop.f32.mrb[0].mxu0
      %v1170 = vpop.f32.mrb[0].mxu0
      %v1171 = vadd.f32 %v1026, %v1170
      %v1172 = vpop.f32.mrb[0].mxu0
      %1173 = vmatprep.mubr.bf16.mxu0 0
      %1174 = vmatmul.mubr.bf16.gmra.mrb[0].mxu0 %v933
      %v1175 = vpop.f32.mrb[0].mxu0
      %v1176 = vadd.f32 %v1031, %v1175
      %v1177 = vpop.f32.mrb[0].mxu0
      %v1178 = vpop.f32.mrb[0].mxu0
      %v1179 = vadd.f32 %v1034, %v1178
      %v1180 = vpop.f32.mrb[0].mxu0
      %1181 = vmatprep.mubr.bf16.mxu0 0
      %1182 = vmatmul.mubr.bf16.gmra.mrb[0].mxu0 %v934
      %v1183 = vpop.f32.mrb[0].mxu0
      %v1184 = vadd.f32 %v1039, %v1183
      %v1185 = vpop.f32.mrb[0].mxu0
      %v1186 = vpop.f32.mrb[0].mxu0
      %v1187 = vadd.f32 %v1042, %v1186
      %v1188 = vpop.f32.mrb[0].mxu0
      %1189 = vmatprep.mubr.bf16.mxu0 0
      %1190 = vmatmul.mubr.bf16.gmra.mrb[0].mxu0 %v935
      %v1191 = vpop.f32.mrb[0].mxu0
      %v1192 = vadd.f32 %v1047, %v1191
      %v1193 = vpop.f32.mrb[0].mxu0
      %v1194 = vpop.f32.mrb[0].mxu0
      %v1195 = vadd.f32 %v1050, %v1194
      %v1196 = vpop.f32.mrb[0].mxu0
      %1197 = vmatprep.mubr.bf16.mxu0 0
      %1198 = vmatmul.mubr.bf16.gmra.mrb[0].mxu0 %v936
      %v1199 = vpop.f32.mrb[0].mxu0
      %v1200 = vadd.f32 %v1055, %v1199
      %v1201 = vpop.f32.mrb[0].mxu0
      %v1202 = vpop.f32.mrb[0].mxu0
      %v1203 = vadd.f32 %v1058, %v1202
      %v1204 = vpop.f32.mrb[0].mxu0
      %1205 = vmatprep.mubr.bf16.mxu0 0
      %1206 = vmatmul.mubr.bf16.gmra.mrb[0].mxu0 %v937
      %v1207 = vpop.f32.mrb[0].mxu0
      %v1208 = vadd.f32 %v1063, %v1207
      %v1209 = vpop.f32.mrb[0].mxu0
      %v1210 = vpop.f32.mrb[0].mxu0
      %v1211 = vadd.f32 %v1066, %v1210
      %v1212 = vpop.f32.mrb[0].mxu0
      %1213 = vmatprep.mubr.bf16.mxu0 0
      %1214 = vmatmul.mubr.bf16.gmra.mrb[0].mxu0 %v938
      %v1215 = vpop.f32.mrb[0].mxu0
      %v1216 = vadd.f32 %v1071, %v1215
      %v1217 = vpop.f32.mrb[0].mxu0
      %v1218 = vpop.f32.mrb[0].mxu0
      %v1219 = vadd.f32 %v1074, %v1218
      %v1220 = vpop.f32.mrb[0].mxu0
      %1221 = vmatprep.mubr.bf16.mxu0 0
      %1222 = vmatmul.mubr.bf16.gmra.mrb[0].mxu0 %v939
      %v1223 = vpop.f32.mrb[0].mxu0
      %v1224 = vadd.f32 %v1079, %v1223
      %v1225 = vpop.f32.mrb[0].mxu0
      %v1226 = vpop.f32.mrb[0].mxu0
      %v1227 = vadd.f32 %v1082, %v1226
      %v1228 = vpop.f32.mrb[0].mxu0
      %1229 = vdwg.mxu0
      %v1230 = vlaneseq
      %v1231 = vshrl.u32 %v1230, 7
      %v1232 = vsub.s32 1, %v1231
      %v1233 = vrot.slane %v261, %v1232
      %v1234 = vadd.f32 %v1168, %v1233
      %v1235 = vadd.f32 %v1171, %v1233
      %v1236 = vadd.f32 %v1176, %v1233
      %v1237 = vadd.f32 %v1179, %v1233
      %v1238 = vadd.f32 %v1184, %v1233
      %v1239 = vadd.f32 %v1187, %v1233
      %v1240 = vadd.f32 %v1192, %v1233
      %v1241 = vadd.f32 %v1195, %v1233
      %v1242 = vadd.f32 %v1200, %v1233
      %v1243 = vadd.f32 %v1203, %v1233
      %v1244 = vadd.f32 %v1208, %v1233
      %v1245 = vadd.f32 %v1211, %v1233
      %v1246 = vadd.f32 %v1216, %v1233
      %v1247 = vadd.f32 %v1219, %v1233
      %v1248 = vadd.f32 %v1224, %v1233
      %v1249 = vadd.f32 %v1227, %v1233
      %v1250 = vmax.f32 %v1234, 0.0
      %v1251 = vmax.f32 %v1235, 0.0
      %v1252 = vmax.f32 %v1236, 0.0
      %v1253 = vmax.f32 %v1237, 0.0
      %v1254 = vmax.f32 %v1238, 0.0
      %v1255 = vmax.f32 %v1239, 0.0
      %v1256 = vmax.f32 %v1240, 0.0
      %v1257 = vmax.f32 %v1241, 0.0
      %v1258 = vmax.f32 %v1242, 0.0
      %v1259 = vmax.f32 %v1243, 0.0
      %v1260 = vmax.f32 %v1244, 0.0
      %v1261 = vmax.f32 %v1245, 0.0
      %v1262 = vmax.f32 %v1246, 0.0
      %v1263 = vmax.f32 %v1247, 0.0
      %v1264 = vmax.f32 %v1248, 0.0
      %v1265 = vmax.f32 %v1249, 0.0
      %v1266 = vpack.c.bf16 %v1251, %v1250
      %v1267 = vpack.c.bf16 %v1253, %v1252
      %v1268 = vpack.c.bf16 %v1255, %v1254
      %v1269 = vpack.c.bf16 %v1257, %v1256
      %v1270 = vpack.c.bf16 %v1259, %v1258
      %v1271 = vpack.c.bf16 %v1261, %v1260
      %v1272 = vpack.c.bf16 %v1263, %v1262
      %v1273 = vpack.c.bf16 %v1265, %v1264
      %v1274 = vld [vmem:[%s2] sm:$0xff]
      %v1275 = vld [vmem:[%s2 + $0x8] sm:$0xf]
      %v1276 = vld [vmem:[%s2 + $0xc] sm:$0xff]
      %v1277 = vld [vmem:[%s2 + $0x14] sm:$0xf]
      %v1278 = vld [vmem:[%s2 + $0x18] sm:$0xff]
      %v1279 = vld [vmem:[%s2 + $0x20] sm:$0xf]
      %v1280 = vld [vmem:[%s2 + $0x24] sm:$0xff]
      %v1281 = vld [vmem:[%s2 + $0x2c] sm:$0xf]
      %v1282 = vld [vmem:[%s2 + $0x30] sm:$0xff]
      %v1283 = vld [vmem:[%s2 + $0x38] sm:$0xf]
      %v1284 = vld [vmem:[%s2 + $0x3c] sm:$0xff]
      %v1285 = vld [vmem:[%s2 + $0x44] sm:$0xf]
      %v1286 = vld [vmem:[%s2 + $0x48] sm:$0xff]
      %v1287 = vld [vmem:[%s2 + $0x50] sm:$0xf]
      %v1288 = vld [vmem:[%s2 + $0x54] sm:$0xff]
      %v1289 = vld [vmem:[%s2 + $0x5c] sm:$0xf]
      %v1290 = vld [vmem:[%s2 + $0x60] sm:$0xff]
      %v1291 = vld [vmem:[%s2 + $0x68] sm:$0xf]
      %v1292 = vld [vmem:[%s2 + $0x6c] sm:$0xff]
      %v1293 = vld [vmem:[%s2 + $0x74] sm:$0xf]
      %v1294 = vld [vmem:[%s2 + $0x78] sm:$0xff]
      %v1295 = vld [vmem:[%s2 + $0x80] sm:$0xf]
      %v1296 = vld [vmem:[%s2 + $0x84] sm:$0xff]
      %v1297 = vld [vmem:[%s2 + $0x8c] sm:$0xf]
      %v1298 = vld [vmem:[%s2 + $0x90] sm:$0xff]
      %v1299 = vld [vmem:[%s2 + $0x98] sm:$0xf]
      %v1300 = vld [vmem:[%s2 + $0x9c] sm:$0xff]
      %v1301 = vld [vmem:[%s2 + $0xa4] sm:$0xf]
      %v1302 = vld [vmem:[%s2 + $0xa8] sm:$0xff]
      %v1303 = vld [vmem:[%s2 + $0xb0] sm:$0xf]
      %v1304 = vld [vmem:[%s2 + $0xb4] sm:$0xff]
      %v1305 = vld [vmem:[%s2 + $0xbc] sm:$0xf]
      %v1338 = vunpack.c.l.b16 %v1274
      %v1339 = vunpack.c.h.b16 %v1274
      %v1340 = vunpack.c.l.b16 %v1275
      %v1341 = vunpack.c.l.b16 %v1276
      %v1342 = vunpack.c.h.b16 %v1276
      %v1343 = vunpack.c.l.b16 %v1277
      %v1344 = vunpack.c.l.b16 %v1278
      %v1345 = vunpack.c.h.b16 %v1278
      %v1346 = vunpack.c.l.b16 %v1279
      %v1347 = vunpack.c.l.b16 %v1280
      %v1348 = vunpack.c.h.b16 %v1280
      %v1349 = vunpack.c.l.b16 %v1281
      %v1350 = vunpack.c.l.b16 %v1282
      %v1351 = vunpack.c.h.b16 %v1282
      %v1352 = vunpack.c.l.b16 %v1283
      %v1353 = vunpack.c.l.b16 %v1284
      %v1354 = vunpack.c.h.b16 %v1284
      %v1355 = vunpack.c.l.b16 %v1285
      %v1356 = vunpack.c.l.b16 %v1286
      %v1357 = vunpack.c.h.b16 %v1286
      %v1358 = vunpack.c.l.b16 %v1287
      %v1359 = vunpack.c.l.b16 %v1288
      %v1360 = vunpack.c.h.b16 %v1288
      %v1361 = vunpack.c.l.b16 %v1289
      %v1362 = vunpack.c.l.b16 %v1290
      %v1363 = vunpack.c.h.b16 %v1290
      %v1364 = vunpack.c.l.b16 %v1291
      %v1365 = vunpack.c.l.b16 %v1292
      %v1366 = vunpack.c.h.b16 %v1292
      %v1367 = vunpack.c.l.b16 %v1293
      %v1368 = vunpack.c.l.b16 %v1294
      %v1369 = vunpack.c.h.b16 %v1294
      %v1370 = vunpack.c.l.b16 %v1295
      %v1371 = vunpack.c.l.b16 %v1296
      %v1372 = vunpack.c.h.b16 %v1296
      %v1373 = vunpack.c.l.b16 %v1297
      %v1374 = vunpack.c.l.b16 %v1298
      %v1375 = vunpack.c.h.b16 %v1298
      %v1376 = vunpack.c.l.b16 %v1299
      %v1377 = vunpack.c.l.b16 %v1300
      %v1378 = vunpack.c.h.b16 %v1300
      %v1379 = vunpack.c.l.b16 %v1301
      %v1380 = vunpack.c.l.b16 %v1302
      %v1381 = vunpack.c.h.b16 %v1302
      %v1382 = vunpack.c.l.b16 %v1303
      %v1383 = vunpack.c.l.b16 %v1304
      %v1384 = vunpack.c.h.b16 %v1304
      %v1385 = vunpack.c.l.b16 %v1305
      %v1386 = vpack.c.b16 %v1341, %v1338
      %v1387 = vpack.c.b16 %v1342, %v1339
      %v1388 = vpack.c.b16 %v1343, %v1340
      %v1389 = vpack.c.b16 %v1347, %v1344
      %v1390 = vpack.c.b16 %v1348, %v1345
      %v1391 = vpack.c.b16 %v1349, %v1346
      %v1392 = vpack.c.b16 %v1353, %v1350
      %v1393 = vpack.c.b16 %v1354, %v1351
      %v1394 = vpack.c.b16 %v1355, %v1352
      %v1395 = vpack.c.b16 %v1359, %v1356
      %v1396 = vpack.c.b16 %v1360, %v1357
      %v1397 = vpack.c.b16 %v1361, %v1358
      %v1398 = vpack.c.b16 %v1365, %v1362
      %v1399 = vpack.c.b16 %v1366, %v1363
      %v1400 = vpack.c.b16 %v1367, %v1364
      %v1401 = vpack.c.b16 %v1371, %v1368
      %v1402 = vpack.c.b16 %v1372, %v1369
      %v1403 = vpack.c.b16 %v1373, %v1370
      %v1404 = vpack.c.b16 %v1377, %v1374
      %v1405 = vpack.c.b16 %v1378, %v1375
      %v1406 = vpack.c.b16 %v1379, %v1376
      %v1407 = vpack.c.b16 %v1383, %v1380
      %v1408 = vpack.c.b16 %v1384, %v1381
      %v1409 = vpack.c.b16 %v1385, %v1382
      %1434 = vmatprep.subr.bf16.mxu0 %v1387
      %1435 = vmatpush1.bf16.msra.mxu0 %v1386
      %1436 = vmatprep.subr.bf16.mxu0 %v1390
      %1437 = vmatpush1.bf16.msra.mxu0 %v1389
      %1438 = vmatprep.subr.bf16.mxu0 %v1393
      %1439 = vmatpush1.bf16.msra.mxu0 %v1392
      %1440 = vmatprep.subr.bf16.mxu0 %v1396
      %1441 = vmatpush1.bf16.msra.mxu0 %v1395
      %1442 = vmatprep.subr.bf16.mxu0 %v1399
      %1443 = vmatpush1.bf16.msra.mxu0 %v1398
      %1444 = vmatprep.subr.bf16.mxu0 %v1402
      %1445 = vmatpush1.bf16.msra.mxu0 %v1401
      %1446 = vmatprep.subr.bf16.mxu0 %v1405
      %1447 = vmatpush1.bf16.msra.mxu0 %v1404
      %1448 = vmatprep.subr.bf16.mxu0 %v1408
      %1449 = vmatpush1.bf16.msra.mxu0 %v1407
      %1450 = vmatprep.subr.bf16.mxu0 0
      %1451 = vmatpush1.bf16.msra.mxu0 0
      %1452 = vmatprep.subr.bf16.mxu0 0
      %1453 = vmatpush1.bf16.msra.mxu0 0
      %1454 = vmatprep.subr.bf16.mxu0 0
      %1455 = vmatpush1.bf16.msra.mxu0 0
      %1456 = vmatprep.subr.bf16.mxu0 0
      %1457 = vmatpush1.bf16.msra.mxu0 0
      %1458 = vmatprep.subr.bf16.mxu0 0
      %1459 = vmatpush1.bf16.msra.mxu0 0
      %1460 = vmatprep.subr.bf16.mxu0 0
      %1461 = vmatpush1.bf16.msra.mxu0 0
      %1462 = vmatprep.subr.bf16.mxu0 0
      %1463 = vmatpush1.bf16.msra.mxu0 0
      %1464 = vmatprep.subr.bf16.mxu0 0
      %1465 = vmatpush1.bf16.msra.mxu0 0
      %1466 = vmatprep.mubr.bf16.mxu0 0
      %1467 = vmatmul.mubr.bf16.gmra.mrb[0].mxu0 %v1266
      %v1468 = vpop.f32.mrb[0].mxu0
      %v1469 = vadd.f32 0.0, %v1468
      %v1470 = vpop.f32.mrb[0].mxu0
      %v1471 = vadd.f32 0.0, %v1470
      %v1472 = vpop.f32.mrb[0].mxu0
      %v1473 = vadd.f32 0.0, %v1472
      %v1474 = vpop.f32.mrb[0].mxu0
      %v1475 = vadd.f32 0.0, %v1474
      %1476 = vmatprep.mubr.bf16.mxu0 0
      %1477 = vmatmul.mubr.bf16.gmra.mrb[0].mxu0 %v1267
      %v1478 = vpop.f32.mrb[0].mxu0
      %v1479 = vadd.f32 0.0, %v1478
      %v1480 = vpop.f32.mrb[0].mxu0
      %v1481 = vadd.f32 0.0, %v1480
      %v1482 = vpop.f32.mrb[0].mxu0
      %v1483 = vadd.f32 0.0, %v1482
      %v1484 = vpop.f32.mrb[0].mxu0
      %v1485 = vadd.f32 0.0, %v1484
      %1486 = vmatprep.mubr.bf16.mxu0 0
      %1487 = vmatmul.mubr.bf16.gmra.mrb[0].mxu0 %v1268
      %v1488 = vpop.f32.mrb[0].mxu0
      %v1489 = vadd.f32 0.0, %v1488
      %v1490 = vpop.f32.mrb[0].mxu0
      %v1491 = vadd.f32 0.0, %v1490
      %v1492 = vpop.f32.mrb[0].mxu0
      %v1493 = vadd.f32 0.0, %v1492
      %v1494 = vpop.f32.mrb[0].mxu0
      %v1495 = vadd.f32 0.0, %v1494
      %1496 = vmatprep.mubr.bf16.mxu0 0
      %1497 = vmatmul.mubr.bf16.gmra.mrb[0].mxu0 %v1269
      %v1498 = vpop.f32.mrb[0].mxu0
      %v1499 = vadd.f32 0.0, %v1498
      %v1500 = vpop.f32.mrb[0].mxu0
      %v1501 = vadd.f32 0.0, %v1500
      %v1502 = vpop.f32.mrb[0].mxu0
      %v1503 = vadd.f32 0.0, %v1502
      %v1504 = vpop.f32.mrb[0].mxu0
      %v1505 = vadd.f32 0.0, %v1504
      %1506 = vmatprep.mubr.bf16.mxu0 0
      %1507 = vmatmul.mubr.bf16.gmra.mrb[0].mxu0 %v1270
      %v1508 = vpop.f32.mrb[0].mxu0
      %v1509 = vadd.f32 0.0, %v1508
      %v1510 = vpop.f32.mrb[0].mxu0
      %v1511 = vadd.f32 0.0, %v1510
      %v1512 = vpop.f32.mrb[0].mxu0
      %v1513 = vadd.f32 0.0, %v1512
      %v1514 = vpop.f32.mrb[0].mxu0
      %v1515 = vadd.f32 0.0, %v1514
      %1516 = vmatprep.mubr.bf16.mxu0 0
      %1517 = vmatmul.mubr.bf16.gmra.mrb[0].mxu0 %v1271
      %v1518 = vpop.f32.mrb[0].mxu0
      %v1519 = vadd.f32 0.0, %v1518
      %v1520 = vpop.f32.mrb[0].mxu0
      %v1521 = vadd.f32 0.0, %v1520
      %v1522 = vpop.f32.mrb[0].mxu0
      %v1523 = vadd.f32 0.0, %v1522
      %v1524 = vpop.f32.mrb[0].mxu0
      %v1525 = vadd.f32 0.0, %v1524
      %1526 = vmatprep.mubr.bf16.mxu0 0
      %1527 = vmatmul.mubr.bf16.gmra.mrb[0].mxu0 %v1272
      %v1528 = vpop.f32.mrb[0].mxu0
      %v1529 = vadd.f32 0.0, %v1528
      %v1530 = vpop.f32.mrb[0].mxu0
      %v1531 = vadd.f32 0.0, %v1530
      %v1532 = vpop.f32.mrb[0].mxu0
      %v1533 = vadd.f32 0.0, %v1532
      %v1534 = vpop.f32.mrb[0].mxu0
      %v1535 = vadd.f32 0.0, %v1534
      %1536 = vmatprep.mubr.bf16.mxu0 0
      %1537 = vmatmul.mubr.bf16.gmra.mrb[0].mxu0 %v1273
      %v1538 = vpop.f32.mrb[0].mxu0
      %v1539 = vadd.f32 0.0, %v1538
      %v1540 = vpop.f32.mrb[0].mxu0
      %v1541 = vadd.f32 0.0, %v1540
      %v1542 = vpop.f32.mrb[0].mxu0
      %v1543 = vadd.f32 0.0, %v1542
      %v1544 = vpop.f32.mrb[0].mxu0
      %v1545 = vadd.f32 0.0, %v1544
      %1546 = vdwg.mxu0
      %1547 = vmatprep.subr.bf16.mxu0 0
      %1548 = vmatpush1.bf16.msra.mxu0 %v1388
      %1549 = vmatprep.subr.bf16.mxu0 0
      %1550 = vmatpush1.bf16.msra.mxu0 %v1391
      %1551 = vmatprep.subr.bf16.mxu0 0
      %1552 = vmatpush1.bf16.msra.mxu0 %v1394
      %1553 = vmatprep.subr.bf16.mxu0 0
      %1554 = vmatpush1.bf16.msra.mxu0 %v1397
      %1555 = vmatprep.subr.bf16.mxu0 0
      %1556 = vmatpush1.bf16.msra.mxu0 %v1400
      %1557 = vmatprep.subr.bf16.mxu0 0
      %1558 = vmatpush1.bf16.msra.mxu0 %v1403
      %1559 = vmatprep.subr.bf16.mxu0 0
      %1560 = vmatpush1.bf16.msra.mxu0 %v1406
      %1561 = vmatprep.subr.bf16.mxu0 0
      %1562 = vmatpush1.bf16.msra.mxu0 %v1409
      %1563 = vmatprep.subr.bf16.mxu0 0
      %1564 = vmatpush1.bf16.msra.mxu0 0
      %1565 = vmatprep.subr.bf16.mxu0 0
      %1566 = vmatpush1.bf16.msra.mxu0 0
      %1567 = vmatprep.subr.bf16.mxu0 0
      %1568 = vmatpush1.bf16.msra.mxu0 0
      %1569 = vmatprep.subr.bf16.mxu0 0
      %1570 = vmatpush1.bf16.msra.mxu0 0
      %1571 = vmatprep.subr.bf16.mxu0 0
      %1572 = vmatpush1.bf16.msra.mxu0 0
      %1573 = vmatprep.subr.bf16.mxu0 0
      %1574 = vmatpush1.bf16.msra.mxu0 0
      %1575 = vmatprep.subr.bf16.mxu0 0
      %1576 = vmatpush1.bf16.msra.mxu0 0
      %1577 = vmatprep.subr.bf16.mxu0 0
      %1578 = vmatpush1.bf16.msra.mxu0 0
      %1579 = vmatprep.mubr.bf16.mxu0 0
      %1580 = vmatmul.mubr.bf16.gmra.mrb[0].mxu0 %v1266
      %v1581 = vpop.f32.mrb[0].mxu0
      %v1582 = vadd.f32 0.0, %v1581
      %v1583 = vpop.f32.mrb[0].mxu0
      %v1584 = vpop.f32.mrb[0].mxu0
      %v1585 = vadd.f32 0.0, %v1584
      %v1586 = vpop.f32.mrb[0].mxu0
      %1587 = vmatprep.mubr.bf16.mxu0 0
      %1588 = vmatmul.mubr.bf16.gmra.mrb[0].mxu0 %v1267
      %v1589 = vpop.f32.mrb[0].mxu0
      %v1590 = vadd.f32 0.0, %v1589
      %v1591 = vpop.f32.mrb[0].mxu0
      %v1592 = vpop.f32.mrb[0].mxu0
      %v1593 = vadd.f32 0.0, %v1592
      %v1594 = vpop.f32.mrb[0].mxu0
      %1595 = vmatprep.mubr.bf16.mxu0 0
      %1596 = vmatmul.mubr.bf16.gmra.mrb[0].mxu0 %v1268
      %v1597 = vpop.f32.mrb[0].mxu0
      %v1598 = vadd.f32 0.0, %v1597
      %v1599 = vpop.f32.mrb[0].mxu0
      %v1600 = vpop.f32.mrb[0].mxu0
      %v1601 = vadd.f32 0.0, %v1600
      %v1602 = vpop.f32.mrb[0].mxu0
      %1603 = vmatprep.mubr.bf16.mxu0 0
      %1604 = vmatmul.mubr.bf16.gmra.mrb[0].mxu0 %v1269
      %v1605 = vpop.f32.mrb[0].mxu0
      %v1606 = vadd.f32 0.0, %v1605
      %v1607 = vpop.f32.mrb[0].mxu0
      %v1608 = vpop.f32.mrb[0].mxu0
      %v1609 = vadd.f32 0.0, %v1608
      %v1610 = vpop.f32.mrb[0].mxu0
      %1611 = vmatprep.mubr.bf16.mxu0 0
      %1612 = vmatmul.mubr.bf16.gmra.mrb[0].mxu0 %v1270
      %v1613 = vpop.f32.mrb[0].mxu0
      %v1614 = vadd.f32 0.0, %v1613
      %v1615 = vpop.f32.mrb[0].mxu0
      %v1616 = vpop.f32.mrb[0].mxu0
      %v1617 = vadd.f32 0.0, %v1616
      %v1618 = vpop.f32.mrb[0].mxu0
      %1619 = vmatprep.mubr.bf16.mxu0 0
      %1620 = vmatmul.mubr.bf16.gmra.mrb[0].mxu0 %v1271
      %v1621 = vpop.f32.mrb[0].mxu0
      %v1622 = vadd.f32 0.0, %v1621
      %v1623 = vpop.f32.mrb[0].mxu0
      %v1624 = vpop.f32.mrb[0].mxu0
      %v1625 = vadd.f32 0.0, %v1624
      %v1626 = vpop.f32.mrb[0].mxu0
      %1627 = vmatprep.mubr.bf16.mxu0 0
      %1628 = vmatmul.mubr.bf16.gmra.mrb[0].mxu0 %v1272
      %v1629 = vpop.f32.mrb[0].mxu0
      %v1630 = vadd.f32 0.0, %v1629
      %v1631 = vpop.f32.mrb[0].mxu0
      %v1632 = vpop.f32.mrb[0].mxu0
      %v1633 = vadd.f32 0.0, %v1632
      %v1634 = vpop.f32.mrb[0].mxu0
      %1635 = vmatprep.mubr.bf16.mxu0 0
      %1636 = vmatmul.mubr.bf16.gmra.mrb[0].mxu0 %v1273
      %v1637 = vpop.f32.mrb[0].mxu0
      %v1638 = vadd.f32 0.0, %v1637
      %v1639 = vpop.f32.mrb[0].mxu0
      %v1640 = vpop.f32.mrb[0].mxu0
      %v1641 = vadd.f32 0.0, %v1640
      %v1642 = vpop.f32.mrb[0].mxu0
      %1643 = vdwg.mxu0
      %1644 = vxpose.xlu0.b32.start [1/16] %v1582, 128
      %1645 = vxpose.xlu0.b32.cont [2/16] %v1585, 128
      %1646 = vxpose.xlu0.b32.cont [3/16] %v1590, 128
      %1647 = vxpose.xlu0.b32.cont [4/16] %v1593, 128
      %1648 = vxpose.xlu0.b32.cont [5/16] %v1598, 128
      %1649 = vxpose.xlu0.b32.cont [6/16] %v1601, 128
      %1650 = vxpose.xlu0.b32.cont [7/16] %v1606, 128
      %1651 = vxpose.xlu0.b32.cont [8/16] %v1609, 128
      %1652 = vxpose.xlu0.b32.cont [9/16] %v1614, 128
      %1653 = vxpose.xlu0.b32.cont [10/16] %v1617, 128
      %1654 = vxpose.xlu0.b32.cont [11/16] %v1622, 128
      %1655 = vxpose.xlu0.b32.cont [12/16] %v1625, 128
      %1656 = vxpose.xlu0.b32.cont [13/16] %v1630, 128
      %1657 = vxpose.xlu0.b32.cont [14/16] %v1633, 128
      %1658 = vxpose.xlu0.b32.cont [15/16] %v1638, 128
      %1659 = vxpose.xlu0.b32.end [16/16] %v1641, 128
      %v1660 = vpop.trf.xlu0
      %v1661 = vpop.trf.xlu0
      %v1662 = vpop.trf.xlu0
      %v1663 = vpop.trf.xlu0
      %v1664 = vpop.trf.xlu0
      %v1665 = vpop.trf.xlu0
      %v1666 = vpop.trf.xlu0
      %v1667 = vpop.trf.xlu0
      %v1668 = vpop.trf.xlu0
      %v1669 = vpop.trf.xlu0
      %v1670 = vpop.trf.xlu0
      %v1671 = vpop.trf.xlu0
      %v1672 = vpop.trf.xlu0
      %v1673 = vpop.trf.xlu0
      %v1674 = vpop.trf.xlu0
      %v1675 = vpop.trf.xlu0
      %1677 = vset.pattern.permute.xlu0 0
      %1678 = vperm.xlu0 %1677, %v1582
      %v1679 = vpop.permute.xlu0 %1678
      %1682 = vset.pattern.permute.xlu0 0
      %1683 = vperm.xlu0 %1682, %v1585
      %v1684 = vpop.permute.xlu0 %1683
      %1687 = vset.pattern.permute.xlu0 0
      %1688 = vperm.xlu0 %1687, %v1590
      %v1689 = vpop.permute.xlu0 %1688
      %1692 = vset.pattern.permute.xlu0 0
      %1693 = vperm.xlu0 %1692, %v1593
      %v1694 = vpop.permute.xlu0 %1693
      %1697 = vset.pattern.permute.xlu0 0
      %1698 = vperm.xlu0 %1697, %v1598
      %v1699 = vpop.permute.xlu0 %1698
      %1702 = vset.pattern.permute.xlu0 0
      %1703 = vperm.xlu0 %1702, %v1601
      %v1704 = vpop.permute.xlu0 %1703
      %1707 = vset.pattern.permute.xlu0 0
      %1708 = vperm.xlu0 %1707, %v1606
      %v1709 = vpop.permute.xlu0 %1708
      %1712 = vset.pattern.permute.xlu0 0
      %1713 = vperm.xlu0 %1712, %v1609
      %v1714 = vpop.permute.xlu0 %1713
      %1717 = vset.pattern.permute.xlu0 0
      %1718 = vperm.xlu0 %1717, %v1614
      %v1719 = vpop.permute.xlu0 %1718
      %1722 = vset.pattern.permute.xlu0 0
      %1723 = vperm.xlu0 %1722, %v1617
      %v1724 = vpop.permute.xlu0 %1723
      %1727 = vset.pattern.permute.xlu0 0
      %1728 = vperm.xlu0 %1727, %v1622
      %v1729 = vpop.permute.xlu0 %1728
      %1732 = vset.pattern.permute.xlu0 0
      %1733 = vperm.xlu0 %1732, %v1625
      %v1734 = vpop.permute.xlu0 %1733
      %1737 = vset.pattern.permute.xlu0 0
      %1738 = vperm.xlu0 %1737, %v1630
      %v1739 = vpop.permute.xlu0 %1738
      %1742 = vset.pattern.permute.xlu0 0
      %1743 = vperm.xlu0 %1742, %v1633
      %v1744 = vpop.permute.xlu0 %1743
      %1747 = vset.pattern.permute.xlu0 0
      %1748 = vperm.xlu0 %1747, %v1638
      %v1749 = vpop.permute.xlu0 %1748
      %1752 = vset.pattern.permute.xlu0 0
      %1753 = vperm.xlu0 %1752, %v1641
      %v1754 = vpop.permute.xlu0 %1753
      %v1756 = vlaneseq
      %v1757 = vshrl.u32 %v1756, 7
      %v1758 = vsub.s32 2, %v1757
      %v1759 = vrot.slane %v1660, %v1758
      %v1760 = vadd.f32 %v1679, %v1759
      %v1761 = vadd.f32 %v1684, %v1759
      %v1762 = vadd.f32 %v1689, %v1759
      %v1763 = vadd.f32 %v1694, %v1759
      %v1764 = vadd.f32 %v1699, %v1759
      %v1765 = vadd.f32 %v1704, %v1759
      %v1766 = vadd.f32 %v1709, %v1759
      %v1767 = vadd.f32 %v1714, %v1759
      %v1768 = vadd.f32 %v1719, %v1759
      %v1769 = vadd.f32 %v1724, %v1759
      %v1770 = vadd.f32 %v1729, %v1759
      %v1771 = vadd.f32 %v1734, %v1759
      %v1772 = vadd.f32 %v1739, %v1759
      %v1773 = vadd.f32 %v1744, %v1759
      %v1774 = vadd.f32 %v1749, %v1759
      %v1775 = vadd.f32 %v1754, %v1759
      %vm1776 = vcmp.ge.f32.partialorder %v1760, 0.0
      %vm1777 = vcmp.ge.f32.partialorder %v1761, 0.0
      %vm1778 = vcmp.ge.f32.partialorder %v1762, 0.0
      %vm1779 = vcmp.ge.f32.partialorder %v1763, 0.0
      %vm1780 = vcmp.ge.f32.partialorder %v1764, 0.0
      %vm1781 = vcmp.ge.f32.partialorder %v1765, 0.0
      %vm1782 = vcmp.ge.f32.partialorder %v1766, 0.0
      %vm1783 = vcmp.ge.f32.partialorder %v1767, 0.0
      %vm1784 = vcmp.ge.f32.partialorder %v1768, 0.0
      %vm1785 = vcmp.ge.f32.partialorder %v1769, 0.0
      %vm1786 = vcmp.ge.f32.partialorder %v1770, 0.0
      %vm1787 = vcmp.ge.f32.partialorder %v1771, 0.0
      %vm1788 = vcmp.ge.f32.partialorder %v1772, 0.0
      %vm1789 = vcmp.ge.f32.partialorder %v1773, 0.0
      %vm1790 = vcmp.ge.f32.partialorder %v1774, 0.0
      %vm1791 = vcmp.ge.f32.partialorder %v1775, 0.0
      %v1792 = vmul.f32 %v1760, 0.2
      %v1793 = vmul.f32 %v1761, 0.2
      %v1794 = vmul.f32 %v1762, 0.2
      %v1795 = vmul.f32 %v1763, 0.2
      %v1796 = vmul.f32 %v1764, 0.2
      %v1797 = vmul.f32 %v1765, 0.2
      %v1798 = vmul.f32 %v1766, 0.2
      %v1799 = vmul.f32 %v1767, 0.2
      %v1800 = vmul.f32 %v1768, 0.2
      %v1801 = vmul.f32 %v1769, 0.2
      %v1802 = vmul.f32 %v1770, 0.2
      %v1803 = vmul.f32 %v1771, 0.2
      %v1804 = vmul.f32 %v1772, 0.2
      %v1805 = vmul.f32 %v1773, 0.2
      %v1806 = vmul.f32 %v1774, 0.2
      %v1807 = vmul.f32 %v1775, 0.2
      %v1808 = vsel %vm1776, %v1760, %v1792
      %v1809 = vsel %vm1777, %v1761, %v1793
      %v1810 = vsel %vm1778, %v1762, %v1794
      %v1811 = vsel %vm1779, %v1763, %v1795
      %v1812 = vsel %vm1780, %v1764, %v1796
      %v1813 = vsel %vm1781, %v1765, %v1797
      %v1814 = vsel %vm1782, %v1766, %v1798
      %v1815 = vsel %vm1783, %v1767, %v1799
      %v1816 = vsel %vm1784, %v1768, %v1800
      %v1817 = vsel %vm1785, %v1769, %v1801
      %v1818 = vsel %vm1786, %v1770, %v1802
      %v1819 = vsel %vm1787, %v1771, %v1803
      %v1820 = vsel %vm1788, %v1772, %v1804
      %v1821 = vsel %vm1789, %v1773, %v1805
      %v1822 = vsel %vm1790, %v1774, %v1806
      %v1823 = vsel %vm1791, %v1775, %v1807
      %v1824 = vsel %vm348, %v1808, -1e+30
      %v1825 = vsel %vm349, %v1809, -1e+30
      %v1826 = vsel %vm350, %v1810, -1e+30
      %v1827 = vsel %vm351, %v1811, -1e+30
      %v1828 = vsel %vm352, %v1812, -1e+30
      %v1829 = vsel %vm353, %v1813, -1e+30
      %v1830 = vsel %vm354, %v1814, -1e+30
      %v1831 = vsel %vm355, %v1815, -1e+30
      %v1832 = vsel %vm356, %v1816, -1e+30
      %v1833 = vsel %vm357, %v1817, -1e+30
      %v1834 = vsel %vm358, %v1818, -1e+30
      %v1835 = vsel %vm359, %v1819, -1e+30
      %v1836 = vsel %vm360, %v1820, -1e+30
      %v1837 = vsel %vm361, %v1821, -1e+30
      %v1838 = vsel %vm362, %v1822, -1e+30
      %v1839 = vsel %vm363, %v1823, -1e+30
      %1840 = vmax.xlane.f32.xlu0 %v1824
      %v1841 = vpop.xlane.xlu0 %1840
      %1842 = vmax.xlane.f32.xlu0 %v1825
      %v1843 = vpop.xlane.xlu0 %1842
      %1844 = vmax.xlane.f32.xlu0 %v1826
      %v1845 = vpop.xlane.xlu0 %1844
      %1846 = vmax.xlane.f32.xlu0 %v1827
      %v1847 = vpop.xlane.xlu0 %1846
      %1848 = vmax.xlane.f32.xlu0 %v1828
      %v1849 = vpop.xlane.xlu0 %1848
      %1850 = vmax.xlane.f32.xlu0 %v1829
      %v1851 = vpop.xlane.xlu0 %1850
      %1852 = vmax.xlane.f32.xlu0 %v1830
      %v1853 = vpop.xlane.xlu0 %1852
      %1854 = vmax.xlane.f32.xlu0 %v1831
      %v1855 = vpop.xlane.xlu0 %1854
      %1856 = vmax.xlane.f32.xlu0 %v1832
      %v1857 = vpop.xlane.xlu0 %1856
      %1858 = vmax.xlane.f32.xlu0 %v1833
      %v1859 = vpop.xlane.xlu0 %1858
      %1860 = vmax.xlane.f32.xlu0 %v1834
      %v1861 = vpop.xlane.xlu0 %1860
      %1862 = vmax.xlane.f32.xlu0 %v1835
      %v1863 = vpop.xlane.xlu0 %1862
      %1864 = vmax.xlane.f32.xlu0 %v1836
      %v1865 = vpop.xlane.xlu0 %1864
      %1866 = vmax.xlane.f32.xlu0 %v1837
      %v1867 = vpop.xlane.xlu0 %1866
      %1868 = vmax.xlane.f32.xlu0 %v1838
      %v1869 = vpop.xlane.xlu0 %1868
      %1870 = vmax.xlane.f32.xlu0 %v1839
      %v1871 = vpop.xlane.xlu0 %1870
      %v1872 = vsub.f32 %v1824, %v1841
      %v1873 = vsub.f32 %v1825, %v1843
      %v1874 = vsub.f32 %v1826, %v1845
      %v1875 = vsub.f32 %v1827, %v1847
      %v1876 = vsub.f32 %v1828, %v1849
      %v1877 = vsub.f32 %v1829, %v1851
      %v1878 = vsub.f32 %v1830, %v1853
      %v1879 = vsub.f32 %v1831, %v1855
      %v1880 = vsub.f32 %v1832, %v1857
      %v1881 = vsub.f32 %v1833, %v1859
      %v1882 = vsub.f32 %v1834, %v1861
      %v1883 = vsub.f32 %v1835, %v1863
      %v1884 = vsub.f32 %v1836, %v1865
      %v1885 = vsub.f32 %v1837, %v1867
      %v1886 = vsub.f32 %v1838, %v1869
      %v1887 = vsub.f32 %v1839, %v1871
      %v1888 = vmul.f32 %v1872, 1.442695
      %v1889 = vpow.pop %v1888
      %v1890 = vmul.f32 %v1873, 1.442695
      %v1891 = vpow.pop %v1890
      %v1892 = vmul.f32 %v1874, 1.442695
      %v1893 = vpow.pop %v1892
      %v1894 = vmul.f32 %v1875, 1.442695
      %v1895 = vpow.pop %v1894
      %v1896 = vmul.f32 %v1876, 1.442695
      %v1897 = vpow.pop %v1896
      %v1898 = vmul.f32 %v1877, 1.442695
      %v1899 = vpow.pop %v1898
      %v1900 = vmul.f32 %v1878, 1.442695
      %v1901 = vpow.pop %v1900
      %v1902 = vmul.f32 %v1879, 1.442695
      %v1903 = vpow.pop %v1902
      %v1904 = vmul.f32 %v1880, 1.442695
      %v1905 = vpow.pop %v1904
      %v1906 = vmul.f32 %v1881, 1.442695
      %v1907 = vpow.pop %v1906
      %v1908 = vmul.f32 %v1882, 1.442695
      %v1909 = vpow.pop %v1908
      %v1910 = vmul.f32 %v1883, 1.442695
      %v1911 = vpow.pop %v1910
      %v1912 = vmul.f32 %v1884, 1.442695
      %v1913 = vpow.pop %v1912
      %v1914 = vmul.f32 %v1885, 1.442695
      %v1915 = vpow.pop %v1914
      %v1916 = vmul.f32 %v1886, 1.442695
      %v1917 = vpow.pop %v1916
      %v1918 = vmul.f32 %v1887, 1.442695
      %v1919 = vpow.pop %v1918
      %v1920 = vsel %vm348, %v1889, 0.0
      %v1921 = vsel %vm349, %v1891, 0.0
      %v1922 = vsel %vm350, %v1893, 0.0
      %v1923 = vsel %vm351, %v1895, 0.0
      %v1924 = vsel %vm352, %v1897, 0.0
      %v1925 = vsel %vm353, %v1899, 0.0
      %v1926 = vsel %vm354, %v1901, 0.0
      %v1927 = vsel %vm355, %v1903, 0.0
      %v1928 = vsel %vm356, %v1905, 0.0
      %v1929 = vsel %vm357, %v1907, 0.0
      %v1930 = vsel %vm358, %v1909, 0.0
      %v1931 = vsel %vm359, %v1911, 0.0
      %v1932 = vsel %vm360, %v1913, 0.0
      %v1933 = vsel %vm361, %v1915, 0.0
      %v1934 = vsel %vm362, %v1917, 0.0
      %v1935 = vsel %vm363, %v1919, 0.0
      %1936 = vadd.xlane.f32.xlu0 %v1920
      %v1937 = vpop.xlane.xlu0 %1936
      %1938 = vadd.xlane.f32.xlu0 %v1921
      %v1939 = vpop.xlane.xlu0 %1938
      %1940 = vadd.xlane.f32.xlu0 %v1922
      %v1941 = vpop.xlane.xlu0 %1940
      %1942 = vadd.xlane.f32.xlu0 %v1923
      %v1943 = vpop.xlane.xlu0 %1942
      %1944 = vadd.xlane.f32.xlu0 %v1924
      %v1945 = vpop.xlane.xlu0 %1944
      %1946 = vadd.xlane.f32.xlu0 %v1925
      %v1947 = vpop.xlane.xlu0 %1946
      %1948 = vadd.xlane.f32.xlu0 %v1926
      %v1949 = vpop.xlane.xlu0 %1948
      %1950 = vadd.xlane.f32.xlu0 %v1927
      %v1951 = vpop.xlane.xlu0 %1950
      %1952 = vadd.xlane.f32.xlu0 %v1928
      %v1953 = vpop.xlane.xlu0 %1952
      %1954 = vadd.xlane.f32.xlu0 %v1929
      %v1955 = vpop.xlane.xlu0 %1954
      %1956 = vadd.xlane.f32.xlu0 %v1930
      %v1957 = vpop.xlane.xlu0 %1956
      %1958 = vadd.xlane.f32.xlu0 %v1931
      %v1959 = vpop.xlane.xlu0 %1958
      %1960 = vadd.xlane.f32.xlu0 %v1932
      %v1961 = vpop.xlane.xlu0 %1960
      %1962 = vadd.xlane.f32.xlu0 %v1933
      %v1963 = vpop.xlane.xlu0 %1962
      %1964 = vadd.xlane.f32.xlu0 %v1934
      %v1965 = vpop.xlane.xlu0 %1964
      %1966 = vadd.xlane.f32.xlu0 %v1935
      %v1967 = vpop.xlane.xlu0 %1966
      %v1968 = vrcp.pop %v1937
      %v1969 = vrcp.pop %v1939
      %v1970 = vrcp.pop %v1941
      %v1971 = vrcp.pop %v1943
      %v1972 = vrcp.pop %v1945
      %v1973 = vrcp.pop %v1947
      %v1974 = vrcp.pop %v1949
      %v1975 = vrcp.pop %v1951
      %v1976 = vrcp.pop %v1953
      %v1977 = vrcp.pop %v1955
      %v1978 = vrcp.pop %v1957
      %v1979 = vrcp.pop %v1959
      %v1980 = vrcp.pop %v1961
      %v1981 = vrcp.pop %v1963
      %v1982 = vrcp.pop %v1965
      %v1983 = vrcp.pop %v1967
      %v1984 = vmul.f32 %v1920, %v1968
      %v1985 = vmul.f32 %v1921, %v1969
      %v1986 = vmul.f32 %v1922, %v1970
      %v1987 = vmul.f32 %v1923, %v1971
      %v1988 = vmul.f32 %v1924, %v1972
      %v1989 = vmul.f32 %v1925, %v1973
      %v1990 = vmul.f32 %v1926, %v1974
      %v1991 = vmul.f32 %v1927, %v1975
      %v1992 = vmul.f32 %v1928, %v1976
      %v1993 = vmul.f32 %v1929, %v1977
      %v1994 = vmul.f32 %v1930, %v1978
      %v1995 = vmul.f32 %v1931, %v1979
      %v1996 = vmul.f32 %v1932, %v1980
      %v1997 = vmul.f32 %v1933, %v1981
      %v1998 = vmul.f32 %v1934, %v1982
      %v1999 = vmul.f32 %v1935, %v1983
      %v2000 = vpack.c.bf16 %v1985, %v1984
      %v2001 = vpack.c.bf16 %v1987, %v1986
      %v2002 = vpack.c.bf16 %v1989, %v1988
      %v2003 = vpack.c.bf16 %v1991, %v1990
      %v2004 = vpack.c.bf16 %v1993, %v1992
      %v2005 = vpack.c.bf16 %v1995, %v1994
      %v2006 = vpack.c.bf16 %v1997, %v1996
      %v2007 = vpack.c.bf16 %v1999, %v1998
      %v2008 = vpack.c.bf16 %v1473, %v1469
      %v2009 = vpack.c.bf16 %v1483, %v1479
      %v2010 = vpack.c.bf16 %v1493, %v1489
      %v2011 = vpack.c.bf16 %v1503, %v1499
      %v2012 = vpack.c.bf16 %v1513, %v1509
      %v2013 = vpack.c.bf16 %v1523, %v1519
      %v2014 = vpack.c.bf16 %v1533, %v1529
      %v2015 = vpack.c.bf16 %v1543, %v1539
      %2016 = vset.pattern.permute.xlu0 1
      %2017 = vperm.xlu0 %2016, %v1582
      %v2018 = vpop.permute.xlu0 %2017
      %2020 = vset.pattern.permute.xlu0 1
      %2021 = vperm.xlu0 %2020, %v1585
      %v2022 = vpop.permute.xlu0 %2021
      %2024 = vset.pattern.permute.xlu0 1
      %2025 = vperm.xlu0 %2024, %v1590
      %v2026 = vpop.permute.xlu0 %2025
      %2028 = vset.pattern.permute.xlu0 1
      %2029 = vperm.xlu0 %2028, %v1593
      %v2030 = vpop.permute.xlu0 %2029
      %2032 = vset.pattern.permute.xlu0 1
      %2033 = vperm.xlu0 %2032, %v1598
      %v2034 = vpop.permute.xlu0 %2033
      %2036 = vset.pattern.permute.xlu0 1
      %2037 = vperm.xlu0 %2036, %v1601
      %v2038 = vpop.permute.xlu0 %2037
      %2040 = vset.pattern.permute.xlu0 1
      %2041 = vperm.xlu0 %2040, %v1606
      %v2042 = vpop.permute.xlu0 %2041
      %2044 = vset.pattern.permute.xlu0 1
      %2045 = vperm.xlu0 %2044, %v1609
      %v2046 = vpop.permute.xlu0 %2045
      %2048 = vset.pattern.permute.xlu0 1
      %2049 = vperm.xlu0 %2048, %v1614
      %v2050 = vpop.permute.xlu0 %2049
      %2052 = vset.pattern.permute.xlu0 1
      %2053 = vperm.xlu0 %2052, %v1617
      %v2054 = vpop.permute.xlu0 %2053
      %2056 = vset.pattern.permute.xlu0 1
      %2057 = vperm.xlu0 %2056, %v1622
      %v2058 = vpop.permute.xlu0 %2057
      %2060 = vset.pattern.permute.xlu0 1
      %2061 = vperm.xlu0 %2060, %v1625
      %v2062 = vpop.permute.xlu0 %2061
      %2064 = vset.pattern.permute.xlu0 1
      %2065 = vperm.xlu0 %2064, %v1630
      %v2066 = vpop.permute.xlu0 %2065
      %2068 = vset.pattern.permute.xlu0 1
      %2069 = vperm.xlu0 %2068, %v1633
      %v2070 = vpop.permute.xlu0 %2069
      %2072 = vset.pattern.permute.xlu0 1
      %2073 = vperm.xlu0 %2072, %v1638
      %v2074 = vpop.permute.xlu0 %2073
      %2076 = vset.pattern.permute.xlu0 1
      %2077 = vperm.xlu0 %2076, %v1641
      %v2078 = vpop.permute.xlu0 %2077
      %v2080 = vlaneseq
      %v2081 = vshrl.u32 %v2080, 7
      %v2082 = vsub.s32 3, %v2081
      %v2083 = vrot.slane %v1660, %v2082
      %v2084 = vadd.f32 %v2018, %v2083
      %v2085 = vadd.f32 %v2022, %v2083
      %v2086 = vadd.f32 %v2026, %v2083
      %v2087 = vadd.f32 %v2030, %v2083
      %v2088 = vadd.f32 %v2034, %v2083
      %v2089 = vadd.f32 %v2038, %v2083
      %v2090 = vadd.f32 %v2042, %v2083
      %v2091 = vadd.f32 %v2046, %v2083
      %v2092 = vadd.f32 %v2050, %v2083
      %v2093 = vadd.f32 %v2054, %v2083
      %v2094 = vadd.f32 %v2058, %v2083
      %v2095 = vadd.f32 %v2062, %v2083
      %v2096 = vadd.f32 %v2066, %v2083
      %v2097 = vadd.f32 %v2070, %v2083
      %v2098 = vadd.f32 %v2074, %v2083
      %v2099 = vadd.f32 %v2078, %v2083
      %vm2100 = vcmp.ge.f32.partialorder %v2084, 0.0
      %vm2101 = vcmp.ge.f32.partialorder %v2085, 0.0
      %vm2102 = vcmp.ge.f32.partialorder %v2086, 0.0
      %vm2103 = vcmp.ge.f32.partialorder %v2087, 0.0
      %vm2104 = vcmp.ge.f32.partialorder %v2088, 0.0
      %vm2105 = vcmp.ge.f32.partialorder %v2089, 0.0
      %vm2106 = vcmp.ge.f32.partialorder %v2090, 0.0
      %vm2107 = vcmp.ge.f32.partialorder %v2091, 0.0
      %vm2108 = vcmp.ge.f32.partialorder %v2092, 0.0
      %vm2109 = vcmp.ge.f32.partialorder %v2093, 0.0
      %vm2110 = vcmp.ge.f32.partialorder %v2094, 0.0
      %vm2111 = vcmp.ge.f32.partialorder %v2095, 0.0
      %vm2112 = vcmp.ge.f32.partialorder %v2096, 0.0
      %vm2113 = vcmp.ge.f32.partialorder %v2097, 0.0
      %vm2114 = vcmp.ge.f32.partialorder %v2098, 0.0
      %vm2115 = vcmp.ge.f32.partialorder %v2099, 0.0
      %v2116 = vmul.f32 %v2084, 0.2
      %v2117 = vmul.f32 %v2085, 0.2
      %v2118 = vmul.f32 %v2086, 0.2
      %v2119 = vmul.f32 %v2087, 0.2
      %v2120 = vmul.f32 %v2088, 0.2
      %v2121 = vmul.f32 %v2089, 0.2
      %v2122 = vmul.f32 %v2090, 0.2
      %v2123 = vmul.f32 %v2091, 0.2
      %v2124 = vmul.f32 %v2092, 0.2
      %v2125 = vmul.f32 %v2093, 0.2
      %v2126 = vmul.f32 %v2094, 0.2
      %v2127 = vmul.f32 %v2095, 0.2
      %v2128 = vmul.f32 %v2096, 0.2
      %v2129 = vmul.f32 %v2097, 0.2
      %v2130 = vmul.f32 %v2098, 0.2
      %v2131 = vmul.f32 %v2099, 0.2
      %v2132 = vsel %vm2100, %v2084, %v2116
      %v2133 = vsel %vm2101, %v2085, %v2117
      %v2134 = vsel %vm2102, %v2086, %v2118
      %v2135 = vsel %vm2103, %v2087, %v2119
      %v2136 = vsel %vm2104, %v2088, %v2120
      %v2137 = vsel %vm2105, %v2089, %v2121
      %v2138 = vsel %vm2106, %v2090, %v2122
      %v2139 = vsel %vm2107, %v2091, %v2123
      %v2140 = vsel %vm2108, %v2092, %v2124
      %v2141 = vsel %vm2109, %v2093, %v2125
      %v2142 = vsel %vm2110, %v2094, %v2126
      %v2143 = vsel %vm2111, %v2095, %v2127
      %v2144 = vsel %vm2112, %v2096, %v2128
      %v2145 = vsel %vm2113, %v2097, %v2129
      %v2146 = vsel %vm2114, %v2098, %v2130
      %v2147 = vsel %vm2115, %v2099, %v2131
      %v2148 = vsel %vm348, %v2132, -1e+30
      %v2149 = vsel %vm349, %v2133, -1e+30
      %v2150 = vsel %vm350, %v2134, -1e+30
      %v2151 = vsel %vm351, %v2135, -1e+30
      %v2152 = vsel %vm352, %v2136, -1e+30
      %v2153 = vsel %vm353, %v2137, -1e+30
      %v2154 = vsel %vm354, %v2138, -1e+30
      %v2155 = vsel %vm355, %v2139, -1e+30
      %v2156 = vsel %vm356, %v2140, -1e+30
      %v2157 = vsel %vm357, %v2141, -1e+30
      %v2158 = vsel %vm358, %v2142, -1e+30
      %v2159 = vsel %vm359, %v2143, -1e+30
      %v2160 = vsel %vm360, %v2144, -1e+30
      %v2161 = vsel %vm361, %v2145, -1e+30
      %v2162 = vsel %vm362, %v2146, -1e+30
      %v2163 = vsel %vm363, %v2147, -1e+30
      %2164 = vmax.xlane.f32.xlu0 %v2148
      %v2165 = vpop.xlane.xlu0 %2164
      %2166 = vmax.xlane.f32.xlu0 %v2149
      %v2167 = vpop.xlane.xlu0 %2166
      %2168 = vmax.xlane.f32.xlu0 %v2150
      %v2169 = vpop.xlane.xlu0 %2168
      %2170 = vmax.xlane.f32.xlu0 %v2151
      %v2171 = vpop.xlane.xlu0 %2170
      %2172 = vmax.xlane.f32.xlu0 %v2152
      %v2173 = vpop.xlane.xlu0 %2172
      %2174 = vmax.xlane.f32.xlu0 %v2153
      %v2175 = vpop.xlane.xlu0 %2174
      %2176 = vmax.xlane.f32.xlu0 %v2154
      %v2177 = vpop.xlane.xlu0 %2176
      %2178 = vmax.xlane.f32.xlu0 %v2155
      %v2179 = vpop.xlane.xlu0 %2178
      %2180 = vmax.xlane.f32.xlu0 %v2156
      %v2181 = vpop.xlane.xlu0 %2180
      %2182 = vmax.xlane.f32.xlu0 %v2157
      %v2183 = vpop.xlane.xlu0 %2182
      %2184 = vmax.xlane.f32.xlu0 %v2158
      %v2185 = vpop.xlane.xlu0 %2184
      %2186 = vmax.xlane.f32.xlu0 %v2159
      %v2187 = vpop.xlane.xlu0 %2186
      %2188 = vmax.xlane.f32.xlu0 %v2160
      %v2189 = vpop.xlane.xlu0 %2188
      %2190 = vmax.xlane.f32.xlu0 %v2161
      %v2191 = vpop.xlane.xlu0 %2190
      %2192 = vmax.xlane.f32.xlu0 %v2162
      %v2193 = vpop.xlane.xlu0 %2192
      %2194 = vmax.xlane.f32.xlu0 %v2163
      %v2195 = vpop.xlane.xlu0 %2194
      %v2196 = vsub.f32 %v2148, %v2165
      %v2197 = vsub.f32 %v2149, %v2167
      %v2198 = vsub.f32 %v2150, %v2169
      %v2199 = vsub.f32 %v2151, %v2171
      %v2200 = vsub.f32 %v2152, %v2173
      %v2201 = vsub.f32 %v2153, %v2175
      %v2202 = vsub.f32 %v2154, %v2177
      %v2203 = vsub.f32 %v2155, %v2179
      %v2204 = vsub.f32 %v2156, %v2181
      %v2205 = vsub.f32 %v2157, %v2183
      %v2206 = vsub.f32 %v2158, %v2185
      %v2207 = vsub.f32 %v2159, %v2187
      %v2208 = vsub.f32 %v2160, %v2189
      %v2209 = vsub.f32 %v2161, %v2191
      %v2210 = vsub.f32 %v2162, %v2193
      %v2211 = vsub.f32 %v2163, %v2195
      %v2212 = vmul.f32 %v2196, 1.442695
      %v2213 = vpow.pop %v2212
      %v2214 = vmul.f32 %v2197, 1.442695
      %v2215 = vpow.pop %v2214
      %v2216 = vmul.f32 %v2198, 1.442695
      %v2217 = vpow.pop %v2216
      %v2218 = vmul.f32 %v2199, 1.442695
      %v2219 = vpow.pop %v2218
      %v2220 = vmul.f32 %v2200, 1.442695
      %v2221 = vpow.pop %v2220
      %v2222 = vmul.f32 %v2201, 1.442695
      %v2223 = vpow.pop %v2222
      %v2224 = vmul.f32 %v2202, 1.442695
      %v2225 = vpow.pop %v2224
      %v2226 = vmul.f32 %v2203, 1.442695
      %v2227 = vpow.pop %v2226
      %v2228 = vmul.f32 %v2204, 1.442695
      %v2229 = vpow.pop %v2228
      %v2230 = vmul.f32 %v2205, 1.442695
      %v2231 = vpow.pop %v2230
      %v2232 = vmul.f32 %v2206, 1.442695
      %v2233 = vpow.pop %v2232
      %v2234 = vmul.f32 %v2207, 1.442695
      %v2235 = vpow.pop %v2234
      %v2236 = vmul.f32 %v2208, 1.442695
      %v2237 = vpow.pop %v2236
      %v2238 = vmul.f32 %v2209, 1.442695
      %v2239 = vpow.pop %v2238
      %v2240 = vmul.f32 %v2210, 1.442695
      %v2241 = vpow.pop %v2240
      %v2242 = vmul.f32 %v2211, 1.442695
      %v2243 = vpow.pop %v2242
      %v2244 = vsel %vm348, %v2213, 0.0
      %v2245 = vsel %vm349, %v2215, 0.0
      %v2246 = vsel %vm350, %v2217, 0.0
      %v2247 = vsel %vm351, %v2219, 0.0
      %v2248 = vsel %vm352, %v2221, 0.0
      %v2249 = vsel %vm353, %v2223, 0.0
      %v2250 = vsel %vm354, %v2225, 0.0
      %v2251 = vsel %vm355, %v2227, 0.0
      %v2252 = vsel %vm356, %v2229, 0.0
      %v2253 = vsel %vm357, %v2231, 0.0
      %v2254 = vsel %vm358, %v2233, 0.0
      %v2255 = vsel %vm359, %v2235, 0.0
      %v2256 = vsel %vm360, %v2237, 0.0
      %v2257 = vsel %vm361, %v2239, 0.0
      %v2258 = vsel %vm362, %v2241, 0.0
      %v2259 = vsel %vm363, %v2243, 0.0
      %2260 = vadd.xlane.f32.xlu0 %v2244
      %v2261 = vpop.xlane.xlu0 %2260
      %2262 = vadd.xlane.f32.xlu0 %v2245
      %v2263 = vpop.xlane.xlu0 %2262
      %2264 = vadd.xlane.f32.xlu0 %v2246
      %v2265 = vpop.xlane.xlu0 %2264
      %2266 = vadd.xlane.f32.xlu0 %v2247
      %v2267 = vpop.xlane.xlu0 %2266
      %2268 = vadd.xlane.f32.xlu0 %v2248
      %v2269 = vpop.xlane.xlu0 %2268
      %2270 = vadd.xlane.f32.xlu0 %v2249
      %v2271 = vpop.xlane.xlu0 %2270
      %2272 = vadd.xlane.f32.xlu0 %v2250
      %v2273 = vpop.xlane.xlu0 %2272
      %2274 = vadd.xlane.f32.xlu0 %v2251
      %v2275 = vpop.xlane.xlu0 %2274
      %2276 = vadd.xlane.f32.xlu0 %v2252
      %v2277 = vpop.xlane.xlu0 %2276
      %2278 = vadd.xlane.f32.xlu0 %v2253
      %v2279 = vpop.xlane.xlu0 %2278
      %2280 = vadd.xlane.f32.xlu0 %v2254
      %v2281 = vpop.xlane.xlu0 %2280
      %2282 = vadd.xlane.f32.xlu0 %v2255
      %v2283 = vpop.xlane.xlu0 %2282
      %2284 = vadd.xlane.f32.xlu0 %v2256
      %v2285 = vpop.xlane.xlu0 %2284
      %2286 = vadd.xlane.f32.xlu0 %v2257
      %v2287 = vpop.xlane.xlu0 %2286
      %2288 = vadd.xlane.f32.xlu0 %v2258
      %v2289 = vpop.xlane.xlu0 %2288
      %2290 = vadd.xlane.f32.xlu0 %v2259
      %v2291 = vpop.xlane.xlu0 %2290
      %v2292 = vrcp.pop %v2261
      %v2293 = vrcp.pop %v2263
      %v2294 = vrcp.pop %v2265
      %v2295 = vrcp.pop %v2267
      %v2296 = vrcp.pop %v2269
      %v2297 = vrcp.pop %v2271
      %v2298 = vrcp.pop %v2273
      %v2299 = vrcp.pop %v2275
      %v2300 = vrcp.pop %v2277
      %v2301 = vrcp.pop %v2279
      %v2302 = vrcp.pop %v2281
      %v2303 = vrcp.pop %v2283
      %v2304 = vrcp.pop %v2285
      %v2305 = vrcp.pop %v2287
      %v2306 = vrcp.pop %v2289
      %v2307 = vrcp.pop %v2291
      %v2308 = vmul.f32 %v2244, %v2292
      %v2309 = vmul.f32 %v2245, %v2293
      %v2310 = vmul.f32 %v2246, %v2294
      %v2311 = vmul.f32 %v2247, %v2295
      %v2312 = vmul.f32 %v2248, %v2296
      %v2313 = vmul.f32 %v2249, %v2297
      %v2314 = vmul.f32 %v2250, %v2298
      %v2315 = vmul.f32 %v2251, %v2299
      %v2316 = vmul.f32 %v2252, %v2300
      %v2317 = vmul.f32 %v2253, %v2301
      %v2318 = vmul.f32 %v2254, %v2302
      %v2319 = vmul.f32 %v2255, %v2303
      %v2320 = vmul.f32 %v2256, %v2304
      %v2321 = vmul.f32 %v2257, %v2305
      %v2322 = vmul.f32 %v2258, %v2306
      %v2323 = vmul.f32 %v2259, %v2307
      %v2324 = vpack.c.bf16 %v2309, %v2308
      %v2325 = vpack.c.bf16 %v2311, %v2310
      %v2326 = vpack.c.bf16 %v2313, %v2312
      %v2327 = vpack.c.bf16 %v2315, %v2314
      %v2328 = vpack.c.bf16 %v2317, %v2316
      %v2329 = vpack.c.bf16 %v2319, %v2318
      %v2330 = vpack.c.bf16 %v2321, %v2320
      %v2331 = vpack.c.bf16 %v2323, %v2322
      %v2332 = vpack.c.bf16 %v1475, %v1471
      %v2333 = vpack.c.bf16 %v1485, %v1481
      %v2334 = vpack.c.bf16 %v1495, %v1491
      %v2335 = vpack.c.bf16 %v1505, %v1501
      %v2336 = vpack.c.bf16 %v1515, %v1511
      %v2337 = vpack.c.bf16 %v1525, %v1521
      %v2338 = vpack.c.bf16 %v1535, %v1531
      %v2339 = vpack.c.bf16 %v1545, %v1541
      %2340 = vmatprep.subr.bf16.mxu0 0
      %2341 = vmatpush1.bf16.msra.mxu0 %v2332
      %2342 = vmatprep.subr.bf16.mxu0 0
      %2343 = vmatpush1.bf16.msra.mxu0 %v2333
      %2344 = vmatprep.subr.bf16.mxu0 0
      %2345 = vmatpush1.bf16.msra.mxu0 %v2334
      %2346 = vmatprep.subr.bf16.mxu0 0
      %2347 = vmatpush1.bf16.msra.mxu0 %v2335
      %2348 = vmatprep.subr.bf16.mxu0 0
      %2349 = vmatpush1.bf16.msra.mxu0 %v2336
      %2350 = vmatprep.subr.bf16.mxu0 0
      %2351 = vmatpush1.bf16.msra.mxu0 %v2337
      %2352 = vmatprep.subr.bf16.mxu0 0
      %2353 = vmatpush1.bf16.msra.mxu0 %v2338
      %2354 = vmatprep.subr.bf16.mxu0 0
      %2355 = vmatpush1.bf16.msra.mxu0 %v2339
      %2356 = vmatprep.subr.bf16.mxu0 0
      %2357 = vmatpush1.bf16.msra.mxu0 0
      %2358 = vmatprep.subr.bf16.mxu0 0
      %2359 = vmatpush1.bf16.msra.mxu0 0
      %2360 = vmatprep.subr.bf16.mxu0 0
      %2361 = vmatpush1.bf16.msra.mxu0 0
      %2362 = vmatprep.subr.bf16.mxu0 0
      %2363 = vmatpush1.bf16.msra.mxu0 0
      %2364 = vmatprep.subr.bf16.mxu0 0
      %2365 = vmatpush1.bf16.msra.mxu0 0
      %2366 = vmatprep.subr.bf16.mxu0 0
      %2367 = vmatpush1.bf16.msra.mxu0 0
      %2368 = vmatprep.subr.bf16.mxu0 0
      %2369 = vmatpush1.bf16.msra.mxu0 0
      %2370 = vmatprep.subr.bf16.mxu0 0
      %2371 = vmatpush1.bf16.msra.mxu0 0
      %2372 = vmatprep.mubr.bf16.mxu0 0
      %2373 = vmatmul.mubr.bf16.gmra.mrb[0].mxu0 %v2324
      %v2374 = vpop.f32.mrb[0].mxu0
      %v2375 = vadd.f32 0.0, %v2374
      %v2376 = vpop.f32.mrb[0].mxu0
      %v2377 = vpop.f32.mrb[0].mxu0
      %v2378 = vadd.f32 0.0, %v2377
      %v2379 = vpop.f32.mrb[0].mxu0
      %2380 = vmatprep.mubr.bf16.mxu0 0
      %2381 = vmatmul.mubr.bf16.gmra.mrb[0].mxu0 %v2325
      %v2382 = vpop.f32.mrb[0].mxu0
      %v2383 = vadd.f32 0.0, %v2382
      %v2384 = vpop.f32.mrb[0].mxu0
      %v2385 = vpop.f32.mrb[0].mxu0
      %v2386 = vadd.f32 0.0, %v2385
      %v2387 = vpop.f32.mrb[0].mxu0
      %2388 = vmatprep.mubr.bf16.mxu0 0
      %2389 = vmatmul.mubr.bf16.gmra.mrb[0].mxu0 %v2326
      %v2390 = vpop.f32.mrb[0].mxu0
      %v2391 = vadd.f32 0.0, %v2390
      %v2392 = vpop.f32.mrb[0].mxu0
      %v2393 = vpop.f32.mrb[0].mxu0
      %v2394 = vadd.f32 0.0, %v2393
      %v2395 = vpop.f32.mrb[0].mxu0
      %2396 = vmatprep.mubr.bf16.mxu0 0
      %2397 = vmatmul.mubr.bf16.gmra.mrb[0].mxu0 %v2327
      %v2398 = vpop.f32.mrb[0].mxu0
      %v2399 = vadd.f32 0.0, %v2398
      %v2400 = vpop.f32.mrb[0].mxu0
      %v2401 = vpop.f32.mrb[0].mxu0
      %v2402 = vadd.f32 0.0, %v2401
      %v2403 = vpop.f32.mrb[0].mxu0
      %2404 = vmatprep.mubr.bf16.mxu0 0
      %2405 = vmatmul.mubr.bf16.gmra.mrb[0].mxu0 %v2328
      %v2406 = vpop.f32.mrb[0].mxu0
      %v2407 = vadd.f32 0.0, %v2406
      %v2408 = vpop.f32.mrb[0].mxu0
      %v2409 = vpop.f32.mrb[0].mxu0
      %v2410 = vadd.f32 0.0, %v2409
      %v2411 = vpop.f32.mrb[0].mxu0
      %2412 = vmatprep.mubr.bf16.mxu0 0
      %2413 = vmatmul.mubr.bf16.gmra.mrb[0].mxu0 %v2329
      %v2414 = vpop.f32.mrb[0].mxu0
      %v2415 = vadd.f32 0.0, %v2414
      %v2416 = vpop.f32.mrb[0].mxu0
      %v2417 = vpop.f32.mrb[0].mxu0
      %v2418 = vadd.f32 0.0, %v2417
      %v2419 = vpop.f32.mrb[0].mxu0
      %2420 = vmatprep.mubr.bf16.mxu0 0
      %2421 = vmatmul.mubr.bf16.gmra.mrb[0].mxu0 %v2330
      %v2422 = vpop.f32.mrb[0].mxu0
      %v2423 = vadd.f32 0.0, %v2422
      %v2424 = vpop.f32.mrb[0].mxu0
      %v2425 = vpop.f32.mrb[0].mxu0
      %v2426 = vadd.f32 0.0, %v2425
      %v2427 = vpop.f32.mrb[0].mxu0
      %2428 = vmatprep.mubr.bf16.mxu0 0
      %2429 = vmatmul.mubr.bf16.gmra.mrb[0].mxu0 %v2331
      %v2430 = vpop.f32.mrb[0].mxu0
      %v2431 = vadd.f32 0.0, %v2430
      %v2432 = vpop.f32.mrb[0].mxu0
      %v2433 = vpop.f32.mrb[0].mxu0
      %v2434 = vadd.f32 0.0, %v2433
      %v2435 = vpop.f32.mrb[0].mxu0
      %2436 = vdwg.mxu0
      %2437 = vmatprep.subr.bf16.mxu0 0
      %2438 = vmatpush1.bf16.msra.mxu0 %v2008
      %2439 = vmatprep.subr.bf16.mxu0 0
      %2440 = vmatpush1.bf16.msra.mxu0 %v2009
      %2441 = vmatprep.subr.bf16.mxu0 0
      %2442 = vmatpush1.bf16.msra.mxu0 %v2010
      %2443 = vmatprep.subr.bf16.mxu0 0
      %2444 = vmatpush1.bf16.msra.mxu0 %v2011
      %2445 = vmatprep.subr.bf16.mxu0 0
      %2446 = vmatpush1.bf16.msra.mxu0 %v2012
      %2447 = vmatprep.subr.bf16.mxu0 0
      %2448 = vmatpush1.bf16.msra.mxu0 %v2013
      %2449 = vmatprep.subr.bf16.mxu0 0
      %2450 = vmatpush1.bf16.msra.mxu0 %v2014
      %2451 = vmatprep.subr.bf16.mxu0 0
      %2452 = vmatpush1.bf16.msra.mxu0 %v2015
      %2453 = vmatprep.subr.bf16.mxu0 0
      %2454 = vmatpush1.bf16.msra.mxu0 0
      %2455 = vmatprep.subr.bf16.mxu0 0
      %2456 = vmatpush1.bf16.msra.mxu0 0
      %2457 = vmatprep.subr.bf16.mxu0 0
      %2458 = vmatpush1.bf16.msra.mxu0 0
      %2459 = vmatprep.subr.bf16.mxu0 0
      %2460 = vmatpush1.bf16.msra.mxu0 0
      %2461 = vmatprep.subr.bf16.mxu0 0
      %2462 = vmatpush1.bf16.msra.mxu0 0
      %2463 = vmatprep.subr.bf16.mxu0 0
      %2464 = vmatpush1.bf16.msra.mxu0 0
      %2465 = vmatprep.subr.bf16.mxu0 0
      %2466 = vmatpush1.bf16.msra.mxu0 0
      %2467 = vmatprep.subr.bf16.mxu0 0
      %2468 = vmatpush1.bf16.msra.mxu0 0
      %2469 = vmatprep.mubr.bf16.mxu0 0
      %2470 = vmatmul.mubr.bf16.gmra.mrb[0].mxu0 %v2000
      %v2471 = vpop.f32.mrb[0].mxu0
      %v2472 = vadd.f32 %v2375, %v2471
      %v2473 = vpop.f32.mrb[0].mxu0
      %v2474 = vpop.f32.mrb[0].mxu0
      %v2475 = vadd.f32 %v2378, %v2474
      %v2476 = vpop.f32.mrb[0].mxu0
      %2477 = vmatprep.mubr.bf16.mxu0 0
      %2478 = vmatmul.mubr.bf16.gmra.mrb[0].mxu0 %v2001
      %v2479 = vpop.f32.mrb[0].mxu0
      %v2480 = vadd.f32 %v2383, %v2479
      %v2481 = vpop.f32.mrb[0].mxu0
      %v2482 = vpop.f32.mrb[0].mxu0
      %v2483 = vadd.f32 %v2386, %v2482
      %v2484 = vpop.f32.mrb[0].mxu0
      %2485 = vmatprep.mubr.bf16.mxu0 0
      %2486 = vmatmul.mubr.bf16.gmra.mrb[0].mxu0 %v2002
      %v2487 = vpop.f32.mrb[0].mxu0
      %v2488 = vadd.f32 %v2391, %v2487
      %v2489 = vpop.f32.mrb[0].mxu0
      %v2490 = vpop.f32.mrb[0].mxu0
      %v2491 = vadd.f32 %v2394, %v2490
      %v2492 = vpop.f32.mrb[0].mxu0
      %2493 = vmatprep.mubr.bf16.mxu0 0
      %2494 = vmatmul.mubr.bf16.gmra.mrb[0].mxu0 %v2003
      %v2495 = vpop.f32.mrb[0].mxu0
      %v2496 = vadd.f32 %v2399, %v2495
      %v2497 = vpop.f32.mrb[0].mxu0
      %v2498 = vpop.f32.mrb[0].mxu0
      %v2499 = vadd.f32 %v2402, %v2498
      %v2500 = vpop.f32.mrb[0].mxu0
      %2501 = vmatprep.mubr.bf16.mxu0 0
      %2502 = vmatmul.mubr.bf16.gmra.mrb[0].mxu0 %v2004
      %v2503 = vpop.f32.mrb[0].mxu0
      %v2504 = vadd.f32 %v2407, %v2503
      %v2505 = vpop.f32.mrb[0].mxu0
      %v2506 = vpop.f32.mrb[0].mxu0
      %v2507 = vadd.f32 %v2410, %v2506
      %v2508 = vpop.f32.mrb[0].mxu0
      %2509 = vmatprep.mubr.bf16.mxu0 0
      %2510 = vmatmul.mubr.bf16.gmra.mrb[0].mxu0 %v2005
      %v2511 = vpop.f32.mrb[0].mxu0
      %v2512 = vadd.f32 %v2415, %v2511
      %v2513 = vpop.f32.mrb[0].mxu0
      %v2514 = vpop.f32.mrb[0].mxu0
      %v2515 = vadd.f32 %v2418, %v2514
      %v2516 = vpop.f32.mrb[0].mxu0
      %2517 = vmatprep.mubr.bf16.mxu0 0
      %2518 = vmatmul.mubr.bf16.gmra.mrb[0].mxu0 %v2006
      %v2519 = vpop.f32.mrb[0].mxu0
      %v2520 = vadd.f32 %v2423, %v2519
      %v2521 = vpop.f32.mrb[0].mxu0
      %v2522 = vpop.f32.mrb[0].mxu0
      %v2523 = vadd.f32 %v2426, %v2522
      %v2524 = vpop.f32.mrb[0].mxu0
      %2525 = vmatprep.mubr.bf16.mxu0 0
      %2526 = vmatmul.mubr.bf16.gmra.mrb[0].mxu0 %v2007
      %v2527 = vpop.f32.mrb[0].mxu0
      %v2528 = vadd.f32 %v2431, %v2527
      %v2529 = vpop.f32.mrb[0].mxu0
      %v2530 = vpop.f32.mrb[0].mxu0
      %v2531 = vadd.f32 %v2434, %v2530
      %v2532 = vpop.f32.mrb[0].mxu0
      %2533 = vdwg.mxu0
      %v2534 = vmul.f32 %v2472, 0.5
      %v2535 = vmul.f32 %v2475, 0.5
      %v2536 = vmul.f32 %v2480, 0.5
      %v2537 = vmul.f32 %v2483, 0.5
      %v2538 = vmul.f32 %v2488, 0.5
      %v2539 = vmul.f32 %v2491, 0.5
      %v2540 = vmul.f32 %v2496, 0.5
      %v2541 = vmul.f32 %v2499, 0.5
      %v2542 = vmul.f32 %v2504, 0.5
      %v2543 = vmul.f32 %v2507, 0.5
      %v2544 = vmul.f32 %v2512, 0.5
      %v2545 = vmul.f32 %v2515, 0.5
      %v2546 = vmul.f32 %v2520, 0.5
      %v2547 = vmul.f32 %v2523, 0.5
      %v2548 = vmul.f32 %v2528, 0.5
      %v2549 = vmul.f32 %v2531, 0.5
      %v2550 = vlaneseq
      %v2551 = vshrl.u32 %v2550, 7
      %v2552 = vsub.s32 2, %v2551
      %v2553 = vrot.slane %v261, %v2552
      %v2554 = vadd.f32 %v2534, %v2553
      %v2555 = vadd.f32 %v2535, %v2553
      %v2556 = vadd.f32 %v2536, %v2553
      %v2557 = vadd.f32 %v2537, %v2553
      %v2558 = vadd.f32 %v2538, %v2553
      %v2559 = vadd.f32 %v2539, %v2553
      %v2560 = vadd.f32 %v2540, %v2553
      %v2561 = vadd.f32 %v2541, %v2553
      %v2562 = vadd.f32 %v2542, %v2553
      %v2563 = vadd.f32 %v2543, %v2553
      %v2564 = vadd.f32 %v2544, %v2553
      %v2565 = vadd.f32 %v2545, %v2553
      %v2566 = vadd.f32 %v2546, %v2553
      %v2567 = vadd.f32 %v2547, %v2553
      %v2568 = vadd.f32 %v2548, %v2553
      %v2569 = vadd.f32 %v2549, %v2553
      %v2570 = vmax.f32 %v2554, 0.0
      %v2571 = vmax.f32 %v2555, 0.0
      %v2572 = vmax.f32 %v2556, 0.0
      %v2573 = vmax.f32 %v2557, 0.0
      %v2574 = vmax.f32 %v2558, 0.0
      %v2575 = vmax.f32 %v2559, 0.0
      %v2576 = vmax.f32 %v2560, 0.0
      %v2577 = vmax.f32 %v2561, 0.0
      %v2578 = vmax.f32 %v2562, 0.0
      %v2579 = vmax.f32 %v2563, 0.0
      %v2580 = vmax.f32 %v2564, 0.0
      %v2581 = vmax.f32 %v2565, 0.0
      %v2582 = vmax.f32 %v2566, 0.0
      %v2583 = vmax.f32 %v2567, 0.0
      %v2584 = vmax.f32 %v2568, 0.0
      %v2585 = vmax.f32 %v2569, 0.0
      %v2586 = vpack.c.bf16 %v2571, %v2570
      %v2587 = vpack.c.bf16 %v2573, %v2572
      %v2588 = vpack.c.bf16 %v2575, %v2574
      %v2589 = vpack.c.bf16 %v2577, %v2576
      %v2590 = vpack.c.bf16 %v2579, %v2578
      %v2591 = vpack.c.bf16 %v2581, %v2580
      %v2592 = vpack.c.bf16 %v2583, %v2582
      %v2593 = vpack.c.bf16 %v2585, %v2584
      %v2594 = vmul.u32 %v263, 8
      %v2595 = vmul.u32 %v264, 8
      %vm2596 = vcmp.eq.s32.totalorder %v280, %v2594
      %vm2597 = vcmp.eq.s32.totalorder %v280, %v2595
      %v2598 = vsel %vm2596, 1.0, 0.0
      %v2599 = vsel %vm2597, 1.0, 0.0
      %v2600 = vpack.c.bf16 %v2599, %v2598
      %2601 = vmatprep.subr.bf16.mxu0 0
      %2602 = vmatpush1.bf16.msra.mxu0 %v2586
      %2603 = vmatprep.subr.bf16.mxu0 0
      %2604 = vmatpush1.bf16.msra.mxu0 %v2587
      %2605 = vmatprep.subr.bf16.mxu0 0
      %2606 = vmatpush1.bf16.msra.mxu0 %v2588
      %2607 = vmatprep.subr.bf16.mxu0 0
      %2608 = vmatpush1.bf16.msra.mxu0 %v2589
      %2609 = vmatprep.subr.bf16.mxu0 0
      %2610 = vmatpush1.bf16.msra.mxu0 %v2590
      %2611 = vmatprep.subr.bf16.mxu0 0
      %2612 = vmatpush1.bf16.msra.mxu0 %v2591
      %2613 = vmatprep.subr.bf16.mxu0 0
      %2614 = vmatpush1.bf16.msra.mxu0 %v2592
      %2615 = vmatprep.subr.bf16.mxu0 0
      %2616 = vmatpush1.bf16.msra.mxu0 %v2593
      %2617 = vmatprep.subr.bf16.mxu0 0
      %2618 = vmatpush1.bf16.msra.mxu0 0
      %2619 = vmatprep.subr.bf16.mxu0 0
      %2620 = vmatpush1.bf16.msra.mxu0 0
      %2621 = vmatprep.subr.bf16.mxu0 0
      %2622 = vmatpush1.bf16.msra.mxu0 0
      %2623 = vmatprep.subr.bf16.mxu0 0
      %2624 = vmatpush1.bf16.msra.mxu0 0
      %2625 = vmatprep.subr.bf16.mxu0 0
      %2626 = vmatpush1.bf16.msra.mxu0 0
      %2627 = vmatprep.subr.bf16.mxu0 0
      %2628 = vmatpush1.bf16.msra.mxu0 0
      %2629 = vmatprep.subr.bf16.mxu0 0
      %2630 = vmatpush1.bf16.msra.mxu0 0
      %2631 = vmatprep.subr.bf16.mxu0 0
      %2632 = vmatpush1.bf16.msra.mxu0 0
      %2633 = vmatprep.mubr.bf16.mxu0 0
      %2634 = vmatmul.mubr.bf16.gmra.mrb[0].mxu0 %v2600
      %v2635 = vpop.f32.mrb[0].mxu0
      %v2636 = vadd.f32 0.0, %v2635
      %v2637 = vpop.f32.mrb[0].mxu0
      %v2638 = vpop.f32.mrb[0].mxu0
      %v2639 = vadd.f32 0.0, %v2638
      %v2640 = vpop.f32.mrb[0].mxu0
      %2641 = vdwg.mxu0
      %v2642 = vadd.s32 %v2594, 1
      %v2643 = vadd.s32 %v2595, 1
      %vm2644 = vcmp.eq.s32.totalorder %v280, %v2642
      %vm2645 = vcmp.eq.s32.totalorder %v280, %v2643
      %v2646 = vsel %vm2644, 1.0, 0.0
      %v2647 = vsel %vm2645, 1.0, 0.0
      %v2648 = vpack.c.bf16 %v2647, %v2646
      %2649 = vmatprep.subr.bf16.mxu0 0
      %2650 = vmatpush1.bf16.msra.mxu0 %v2586
      %2651 = vmatprep.subr.bf16.mxu0 0
      %2652 = vmatpush1.bf16.msra.mxu0 %v2587
      %2653 = vmatprep.subr.bf16.mxu0 0
      %2654 = vmatpush1.bf16.msra.mxu0 %v2588
      %2655 = vmatprep.subr.bf16.mxu0 0
      %2656 = vmatpush1.bf16.msra.mxu0 %v2589
      %2657 = vmatprep.subr.bf16.mxu0 0
      %2658 = vmatpush1.bf16.msra.mxu0 %v2590
      %2659 = vmatprep.subr.bf16.mxu0 0
      %2660 = vmatpush1.bf16.msra.mxu0 %v2591
      %2661 = vmatprep.subr.bf16.mxu0 0
      %2662 = vmatpush1.bf16.msra.mxu0 %v2592
      %2663 = vmatprep.subr.bf16.mxu0 0
      %2664 = vmatpush1.bf16.msra.mxu0 %v2593
      %2665 = vmatprep.subr.bf16.mxu0 0
      %2666 = vmatpush1.bf16.msra.mxu0 0
      %2667 = vmatprep.subr.bf16.mxu0 0
      %2668 = vmatpush1.bf16.msra.mxu0 0
      %2669 = vmatprep.subr.bf16.mxu0 0
      %2670 = vmatpush1.bf16.msra.mxu0 0
      %2671 = vmatprep.subr.bf16.mxu0 0
      %2672 = vmatpush1.bf16.msra.mxu0 0
      %2673 = vmatprep.subr.bf16.mxu0 0
      %2674 = vmatpush1.bf16.msra.mxu0 0
      %2675 = vmatprep.subr.bf16.mxu0 0
      %2676 = vmatpush1.bf16.msra.mxu0 0
      %2677 = vmatprep.subr.bf16.mxu0 0
      %2678 = vmatpush1.bf16.msra.mxu0 0
      %2679 = vmatprep.subr.bf16.mxu0 0
      %2680 = vmatpush1.bf16.msra.mxu0 0
      %2681 = vmatprep.mubr.bf16.mxu0 0
      %2682 = vmatmul.mubr.bf16.gmra.mrb[0].mxu0 %v2648
      %v2683 = vpop.f32.mrb[0].mxu0
      %v2684 = vadd.f32 0.0, %v2683
      %v2685 = vpop.f32.mrb[0].mxu0
      %v2686 = vpop.f32.mrb[0].mxu0
      %v2687 = vadd.f32 0.0, %v2686
      %v2688 = vpop.f32.mrb[0].mxu0
      %2689 = vdwg.mxu0
      %v2690 = vadd.s32 %v2594, 2
      %v2691 = vadd.s32 %v2595, 2
      %vm2692 = vcmp.eq.s32.totalorder %v280, %v2690
      %vm2693 = vcmp.eq.s32.totalorder %v280, %v2691
      %v2694 = vsel %vm2692, 1.0, 0.0
      %v2695 = vsel %vm2693, 1.0, 0.0
      %v2696 = vpack.c.bf16 %v2695, %v2694
      %2697 = vmatprep.subr.bf16.mxu0 0
      %2698 = vmatpush1.bf16.msra.mxu0 %v2586
      %2699 = vmatprep.subr.bf16.mxu0 0
      %2700 = vmatpush1.bf16.msra.mxu0 %v2587
      %2701 = vmatprep.subr.bf16.mxu0 0
      %2702 = vmatpush1.bf16.msra.mxu0 %v2588
      %2703 = vmatprep.subr.bf16.mxu0 0
      %2704 = vmatpush1.bf16.msra.mxu0 %v2589
      %2705 = vmatprep.subr.bf16.mxu0 0
      %2706 = vmatpush1.bf16.msra.mxu0 %v2590
      %2707 = vmatprep.subr.bf16.mxu0 0
      %2708 = vmatpush1.bf16.msra.mxu0 %v2591
      %2709 = vmatprep.subr.bf16.mxu0 0
      %2710 = vmatpush1.bf16.msra.mxu0 %v2592
      %2711 = vmatprep.subr.bf16.mxu0 0
      %2712 = vmatpush1.bf16.msra.mxu0 %v2593
      %2713 = vmatprep.subr.bf16.mxu0 0
      %2714 = vmatpush1.bf16.msra.mxu0 0
      %2715 = vmatprep.subr.bf16.mxu0 0
      %2716 = vmatpush1.bf16.msra.mxu0 0
      %2717 = vmatprep.subr.bf16.mxu0 0
      %2718 = vmatpush1.bf16.msra.mxu0 0
      %2719 = vmatprep.subr.bf16.mxu0 0
      %2720 = vmatpush1.bf16.msra.mxu0 0
      %2721 = vmatprep.subr.bf16.mxu0 0
      %2722 = vmatpush1.bf16.msra.mxu0 0
      %2723 = vmatprep.subr.bf16.mxu0 0
      %2724 = vmatpush1.bf16.msra.mxu0 0
      %2725 = vmatprep.subr.bf16.mxu0 0
      %2726 = vmatpush1.bf16.msra.mxu0 0
      %2727 = vmatprep.subr.bf16.mxu0 0
      %2728 = vmatpush1.bf16.msra.mxu0 0
      %2729 = vmatprep.mubr.bf16.mxu0 0
      %2730 = vmatmul.mubr.bf16.gmra.mrb[0].mxu0 %v2696
      %v2731 = vpop.f32.mrb[0].mxu0
      %v2732 = vadd.f32 0.0, %v2731
      %v2733 = vpop.f32.mrb[0].mxu0
      %v2734 = vpop.f32.mrb[0].mxu0
      %v2735 = vadd.f32 0.0, %v2734
      %v2736 = vpop.f32.mrb[0].mxu0
      %2737 = vdwg.mxu0
      %v2738 = vpack.c.bf16 %v2639, %v2636
      %v2739 = vpack.c.bf16 %v2687, %v2684
      %v2740 = vpack.c.bf16 %v2735, %v2732
      %v2741 = vld [vmem:[%s3] sm:$0xf]
      %v2742 = vld [vmem:[%s3 + $0x4] sm:$0xf]
      %v2743 = vld [vmem:[%s3 + $0x8] sm:$0xf]
      %v2744 = vld [vmem:[%s3 + $0xc] sm:$0xf]
      %v2745 = vld [vmem:[%s3 + $0x10] sm:$0xf]
      %v2746 = vld [vmem:[%s3 + $0x14] sm:$0xf]
      %v2747 = vld [vmem:[%s3 + $0x18] sm:$0xf]
      %v2748 = vld [vmem:[%s3 + $0x1c] sm:$0xf]
      %v2749 = vld [vmem:[%s3 + $0x20] sm:$0xf]
      %v2750 = vld [vmem:[%s3 + $0x24] sm:$0xf]
      %v2751 = vld [vmem:[%s3 + $0x28] sm:$0xf]
      %v2752 = vld [vmem:[%s3 + $0x2c] sm:$0xf]
      %v2753 = vld [vmem:[%s3 + $0x30] sm:$0xf]
      %v2754 = vld [vmem:[%s3 + $0x34] sm:$0xf]
      %v2755 = vld [vmem:[%s3 + $0x38] sm:$0xf]
      %v2756 = vld [vmem:[%s3 + $0x3c] sm:$0xf]
      %v2757 = vld [vmem:[%s3 + $0x40] sm:$0xf]
      %v2758 = vld [vmem:[%s3 + $0x44] sm:$0xf]
      %v2759 = vld [vmem:[%s3 + $0x48] sm:$0xf]
      %v2760 = vld [vmem:[%s3 + $0x4c] sm:$0xf]
      %v2761 = vld [vmem:[%s3 + $0x50] sm:$0xf]
      %v2762 = vld [vmem:[%s3 + $0x54] sm:$0xf]
      %v2763 = vld [vmem:[%s3 + $0x58] sm:$0xf]
      %v2764 = vld [vmem:[%s3 + $0x5c] sm:$0xf]
      %v2765 = vld [vmem:[%s3 + $0x60] sm:$0xf]
      %v2766 = vld [vmem:[%s3 + $0x64] sm:$0xf]
      %v2767 = vld [vmem:[%s3 + $0x68] sm:$0xf]
      %v2768 = vld [vmem:[%s3 + $0x6c] sm:$0xf]
      %v2769 = vld [vmem:[%s3 + $0x70] sm:$0xf]
      %v2770 = vld [vmem:[%s3 + $0x74] sm:$0xf]
      %v2771 = vld [vmem:[%s3 + $0x78] sm:$0xf]
      %v2772 = vld [vmem:[%s3 + $0x7c] sm:$0xf]
      %v2773 = vld [vmem:[%s3 + $0x80] sm:$0xf]
      %v2774 = vld [vmem:[%s3 + $0x84] sm:$0xf]
      %v2775 = vld [vmem:[%s3 + $0x88] sm:$0xf]
      %v2776 = vld [vmem:[%s3 + $0x8c] sm:$0xf]
      %v2777 = vld [vmem:[%s3 + $0x90] sm:$0xf]
      %v2778 = vld [vmem:[%s3 + $0x94] sm:$0xf]
      %v2779 = vld [vmem:[%s3 + $0x98] sm:$0xf]
      %v2780 = vld [vmem:[%s3 + $0x9c] sm:$0xf]
      %v2781 = vld [vmem:[%s3 + $0xa0] sm:$0xf]
      %v2782 = vld [vmem:[%s3 + $0xa4] sm:$0xf]
      %v2783 = vld [vmem:[%s3 + $0xa8] sm:$0xf]
      %v2784 = vld [vmem:[%s3 + $0xac] sm:$0xf]
      %v2785 = vld [vmem:[%s3 + $0xb0] sm:$0xf]
      %v2786 = vld [vmem:[%s3 + $0xb4] sm:$0xf]
      %v2787 = vld [vmem:[%s3 + $0xb8] sm:$0xf]
      %v2788 = vld [vmem:[%s3 + $0xbc] sm:$0xf]
      %v2789 = vld [vmem:[%s3 + $0xc0] sm:$0x1]
      %v2790 = vunpack.c.l.bf16 %v2789
      %v2791 = vlaneseq
      %v2792 = vshrl.u32 %v2791, 7
      %v2793 = vsub.s32 0, %v2792
      %v2794 = vrot.slane %v2790, %v2793
      %v2843 = vunpack.c.l.b16 %v2741
      %v2844 = vunpack.c.l.b16 %v2742
      %v2845 = vunpack.c.l.b16 %v2743
      %v2846 = vunpack.c.l.b16 %v2744
      %v2847 = vunpack.c.l.b16 %v2745
      %v2848 = vunpack.c.l.b16 %v2746
      %v2849 = vunpack.c.l.b16 %v2747
      %v2850 = vunpack.c.l.b16 %v2748
      %v2851 = vunpack.c.l.b16 %v2749
      %v2852 = vunpack.c.l.b16 %v2750
      %v2853 = vunpack.c.l.b16 %v2751
      %v2854 = vunpack.c.l.b16 %v2752
      %v2855 = vunpack.c.l.b16 %v2753
      %v2856 = vunpack.c.l.b16 %v2754
      %v2857 = vunpack.c.l.b16 %v2755
      %v2858 = vunpack.c.l.b16 %v2756
      %v2859 = vunpack.c.l.b16 %v2757
      %v2860 = vunpack.c.l.b16 %v2758
      %v2861 = vunpack.c.l.b16 %v2759
      %v2862 = vunpack.c.l.b16 %v2760
      %v2863 = vunpack.c.l.b16 %v2761
      %v2864 = vunpack.c.l.b16 %v2762
      %v2865 = vunpack.c.l.b16 %v2763
      %v2866 = vunpack.c.l.b16 %v2764
      %v2867 = vunpack.c.l.b16 %v2765
      %v2868 = vunpack.c.l.b16 %v2766
      %v2869 = vunpack.c.l.b16 %v2767
      %v2870 = vunpack.c.l.b16 %v2768
      %v2871 = vunpack.c.l.b16 %v2769
      %v2872 = vunpack.c.l.b16 %v2770
      %v2873 = vunpack.c.l.b16 %v2771
      %v2874 = vunpack.c.l.b16 %v2772
      %v2875 = vunpack.c.l.b16 %v2773
      %v2876 = vunpack.c.l.b16 %v2774
      %v2877 = vunpack.c.l.b16 %v2775
      %v2878 = vunpack.c.l.b16 %v2776
      %v2879 = vunpack.c.l.b16 %v2777
      %v2880 = vunpack.c.l.b16 %v2778
      %v2881 = vunpack.c.l.b16 %v2779
      %v2882 = vunpack.c.l.b16 %v2780
      %v2883 = vunpack.c.l.b16 %v2781
      %v2884 = vunpack.c.l.b16 %v2782
      %v2885 = vunpack.c.l.b16 %v2783
      %v2886 = vunpack.c.l.b16 %v2784
      %v2887 = vunpack.c.l.b16 %v2785
      %v2888 = vunpack.c.l.b16 %v2786
      %v2889 = vunpack.c.l.b16 %v2787
      %v2890 = vunpack.c.l.b16 %v2788
      %v2891 = vpack.c.b16 %v2844, %v2843
      %v2892 = vpack.c.b16 %v2846, %v2845
      %v2893 = vpack.c.b16 %v2848, %v2847
      %v2894 = vpack.c.b16 %v2850, %v2849
      %v2895 = vpack.c.b16 %v2852, %v2851
      %v2896 = vpack.c.b16 %v2854, %v2853
      %v2897 = vpack.c.b16 %v2856, %v2855
      %v2898 = vpack.c.b16 %v2858, %v2857
      %v2899 = vpack.c.b16 %v2860, %v2859
      %v2900 = vpack.c.b16 %v2862, %v2861
      %v2901 = vpack.c.b16 %v2864, %v2863
      %v2902 = vpack.c.b16 %v2866, %v2865
      %v2903 = vpack.c.b16 %v2868, %v2867
      %v2904 = vpack.c.b16 %v2870, %v2869
      %v2905 = vpack.c.b16 %v2872, %v2871
      %v2906 = vpack.c.b16 %v2874, %v2873
      %v2907 = vpack.c.b16 %v2876, %v2875
      %v2908 = vpack.c.b16 %v2878, %v2877
      %v2909 = vpack.c.b16 %v2880, %v2879
      %v2910 = vpack.c.b16 %v2882, %v2881
      %v2911 = vpack.c.b16 %v2884, %v2883
      %v2912 = vpack.c.b16 %v2886, %v2885
      %v2913 = vpack.c.b16 %v2888, %v2887
      %v2914 = vpack.c.b16 %v2890, %v2889
      %2939 = vmatprep.subr.bf16.mxu0 0
      %2940 = vmatpush1.bf16.msra.mxu0 %v2891
      %2941 = vmatprep.subr.bf16.mxu0 0
      %2942 = vmatpush1.bf16.msra.mxu0 %v2892
      %2943 = vmatprep.subr.bf16.mxu0 0
      %2944 = vmatpush1.bf16.msra.mxu0 %v2893
      %2945 = vmatprep.subr.bf16.mxu0 0
      %2946 = vmatpush1.bf16.msra.mxu0 %v2894
      %2947 = vmatprep.subr.bf16.mxu0 0
      %2948 = vmatpush1.bf16.msra.mxu0 %v2895
      %2949 = vmatprep.subr.bf16.mxu0 0
      %2950 = vmatpush1.bf16.msra.mxu0 %v2896
      %2951 = vmatprep.subr.bf16.mxu0 0
      %2952 = vmatpush1.bf16.msra.mxu0 %v2897
      %2953 = vmatprep.subr.bf16.mxu0 0
      %2954 = vmatpush1.bf16.msra.mxu0 %v2898
      %2955 = vmatprep.subr.bf16.mxu0 0
      %2956 = vmatpush1.bf16.msra.mxu0 %v2899
      %2957 = vmatprep.subr.bf16.mxu0 0
      %2958 = vmatpush1.bf16.msra.mxu0 %v2900
      %2959 = vmatprep.subr.bf16.mxu0 0
      %2960 = vmatpush1.bf16.msra.mxu0 %v2901
      %2961 = vmatprep.subr.bf16.mxu0 0
      %2962 = vmatpush1.bf16.msra.mxu0 %v2902
      %2963 = vmatprep.subr.bf16.mxu0 0
      %2964 = vmatpush1.bf16.msra.mxu0 %v2903
      %2965 = vmatprep.subr.bf16.mxu0 0
      %2966 = vmatpush1.bf16.msra.mxu0 %v2904
      %2967 = vmatprep.subr.bf16.mxu0 0
      %2968 = vmatpush1.bf16.msra.mxu0 %v2905
      %2969 = vmatprep.subr.bf16.mxu0 0
      %2970 = vmatpush1.bf16.msra.mxu0 %v2906
      %2971 = vmatprep.mubr.bf16.mxu0 %v2739
      %2972 = vmatmul.mubr.bf16.gmra.mrb[0].mxu0 %v2738
      %v2973 = vpop.f32.mrb[0].mxu0
      %v2974 = vadd.f32 %v2794, %v2973
      %v2975 = vpop.f32.mrb[0].mxu0
      %v2976 = vpop.f32.mrb[0].mxu0
      %v2977 = vadd.f32 %v2794, %v2976
      %v2978 = vpop.f32.mrb[0].mxu0
      %2979 = vdwg.mxu0
      %2980 = vmatprep.subr.bf16.mxu0 0
      %2981 = vmatpush1.bf16.msra.mxu0 %v2907
      %2982 = vmatprep.subr.bf16.mxu0 0
      %2983 = vmatpush1.bf16.msra.mxu0 %v2908
      %2984 = vmatprep.subr.bf16.mxu0 0
      %2985 = vmatpush1.bf16.msra.mxu0 %v2909
      %2986 = vmatprep.subr.bf16.mxu0 0
      %2987 = vmatpush1.bf16.msra.mxu0 %v2910
      %2988 = vmatprep.subr.bf16.mxu0 0
      %2989 = vmatpush1.bf16.msra.mxu0 %v2911
      %2990 = vmatprep.subr.bf16.mxu0 0
      %2991 = vmatpush1.bf16.msra.mxu0 %v2912
      %2992 = vmatprep.subr.bf16.mxu0 0
      %2993 = vmatpush1.bf16.msra.mxu0 %v2913
      %2994 = vmatprep.subr.bf16.mxu0 0
      %2995 = vmatpush1.bf16.msra.mxu0 %v2914
      %2996 = vmatprep.subr.bf16.mxu0 0
      %2997 = vmatpush1.bf16.msra.mxu0 0
      %2998 = vmatprep.subr.bf16.mxu0 0
      %2999 = vmatpush1.bf16.msra.mxu0 0
      %3000 = vmatprep.subr.bf16.mxu0 0
      %3001 = vmatpush1.bf16.msra.mxu0 0
      %3002 = vmatprep.subr.bf16.mxu0 0
      %3003 = vmatpush1.bf16.msra.mxu0 0
      %3004 = vmatprep.subr.bf16.mxu0 0
      %3005 = vmatpush1.bf16.msra.mxu0 0
      %3006 = vmatprep.subr.bf16.mxu0 0
      %3007 = vmatpush1.bf16.msra.mxu0 0
      %3008 = vmatprep.subr.bf16.mxu0 0
      %3009 = vmatpush1.bf16.msra.mxu0 0
      %3010 = vmatprep.subr.bf16.mxu0 0
      %3011 = vmatpush1.bf16.msra.mxu0 0
      %3012 = vmatprep.mubr.bf16.mxu0 0
      %3013 = vmatmul.mubr.bf16.gmra.mrb[0].mxu0 %v2740
      %v3014 = vpop.f32.mrb[0].mxu0
      %v3015 = vadd.f32 %v2974, %v3014
      %v3016 = vpop.f32.mrb[0].mxu0
      %v3017 = vpop.f32.mrb[0].mxu0
      %v3018 = vadd.f32 %v2977, %v3017
      %v3019 = vpop.f32.mrb[0].mxu0
      %3020 = vdwg.mxu0
      %vm3021 = vcmask 261120
      %3022 = vst.msk [vmem:[%s199] sm:$0xff] %vm3021, %v3015
      %3023 = vst.msk [vmem:[%s199 + $0x8] sm:$0xff] %vm3021, %v3018
      %s3024 = smul.u32 2, %s15
      %p3025 = scmp.lt.s32.totalorder %s3024, 3
      %s3026 = scalar_select %p3025, %s3024, 3
      %s3027 = smul.addr %s3026, 8
      %s3028 = scalar_lea.vmem %s4, %s3027
      // Predicated region
      $region37: #{nbody_gnn_forward.1} parent=35 // pred_check
        %p3029 = pneg %p122
      $region38: #{nbody_gnn_forward.1} parent=35 // pred_check_branch
        %3031 = sbr.rel (%p3029) target = $region40
      $region39: #{nbody_gnn_forward.1} parent=35 // pred_region
        %s3032 = smul.u32 2, %s15
      $region40: #{nbody_gnn_forward.1} parent=35 // pred_fallthru
        _
    $region36: #{nbody_gnn_forward.1} parent=5 // pred_fallthru
      _
    %p3033 = scmp.le.s32.totalorder 2, %s10
    // Predicated region
    $region41: #{nbody_gnn_forward.1} parent=5 // pred_check
      %p3034 = pneg %p3033
    $region42: #{nbody_gnn_forward.1} parent=5 // pred_check_branch
      %3036 = sbr.rel (%p3034) target = $region44
    $region43: #{nbody_gnn_forward.1} parent=5 // pred_region
      %s3037 = ssub.s32 %s10, 2
      // Predicated region
      $region45: #{nbody_gnn_forward.1} parent=43 // pred_check
        %p3038 = pneg %p128
      $region46: #{nbody_gnn_forward.1} parent=43 // pred_check_branch
        %3040 = sbr.rel (%p3038) target = $region48
      $region47: #{nbody_gnn_forward.1} parent=43 // pred_region
        %s3041 = smul.u32 2, %s16
        %p3042 = scmp.lt.s32.totalorder %s3041, 3
        %s3043 = scalar_select %p3042, %s3041, 3
        %s3044 = smul.addr %s3043, 8
        %s3045 = scalar_lea.vmem %s4, %s3044
      $region48: #{nbody_gnn_forward.1} parent=43 // pred_fallthru
        _
    $region44: #{nbody_gnn_forward.1} parent=5 // pred_fallthru
      _
  $region6: #{nbody_gnn_forward.1} parent=0 // loop_footer
    %s14 = sadd.s32 1, %s10
  $region7: #{nbody_gnn_forward.1} parent=0 // loop_footer_branch
    %9 = sbr.rel target = $region3
  $region8: #{nbody_gnn_forward.1} parent=0 // loop_exit
    _

</llo_original>
